<compile_context>
chip_gen: v7x
topology: tpu7x:2x2x1
jax: 0.10.0
libtpu: 0.0.40
codegen_flags: <defaults>
</compile_context>

<pallas_src>
import functools

import jax
import jax.numpy as jnp
from jax import lax
from jax.experimental import pallas as pl
from jax.experimental.pallas import tpu as pltpu


# ---------------------------------------------------------------------------
# Fully fused Pallas kernel: one grid step == one masked-channel variant.
# ---------------------------------------------------------------------------
def fmce_fused_kernel(
    noise_ref, x_ref,
    w1_ref, b1_ref, w2_ref, b2_ref, w3_ref, b3_ref, w4_ref, b4_ref,
    rw1_ref, rb1_ref, rw2_ref, rb2_ref,
    g1_ref, be1_ref, g2_ref, be2_ref, g3_ref, be3_ref, g4_ref, be4_ref,
    o_ref,
    padbuf,
    *, eps, pmax, mxu_dtype):
    c = pl.program_id(0)                      # which channel is masked
    B, C, L = x_ref.shape

    # Zero the padded-signal scratch once per step.  Data stores below only
    # ever touch columns [pmax, pmax+L), so the zero halo survives all convs.
    padbuf[...] = jnp.zeros_like(padbuf)

    chan_iota = lax.broadcasted_iota(jnp.int32, (C, L), 0)

    # ---- helpers (all values are per-batch 2-D (channels, L) f32) ----------
    def conv1d(xs, w_ref_, b_ref_, dilation, relu):
        """'same' dilated Conv1d on a list of per-batch (Cin, L) values."""
        Kc, Cout, Cin = w_ref_.shape
        pad = dilation * (Kc - 1) // 2
        bias = b_ref_[...].astype(jnp.float32)                 # (Cout, 1)
        outs = []
        for xb in xs:
            if pad == 0:                                       # 1x1 residual conv
                acc = jnp.dot(w_ref_[0].astype(mxu_dtype),
                              xb.astype(mxu_dtype),
                              preferred_element_type=jnp.float32)
            else:
                padbuf[pl.ds(0, Cin), pl.ds(pmax, L)] = xb
                acc = jnp.zeros((Cout, L), jnp.float32)
                for k in range(Kc):                            # unrolled taps
                    start = pmax - pad + k * dilation
                    tap = padbuf[pl.ds(0, Cin), pl.ds(start, L)]
                    acc = acc + jnp.dot(w_ref_[k].astype(mxu_dtype),
                                        tap.astype(mxu_dtype),
                                        preferred_element_type=jnp.float32)
            acc = acc + bias
            if relu:
                acc = jnp.maximum(acc, 0.0)
            outs.append(acc)
        return outs

    def batchnorm(hs, g_ref_, be_ref_):
        """Training-mode BatchNorm1d: per-channel stats over (batch, L)."""
        n = float(len(hs) * L)
        tot = hs[0]
        for h in hs[1:]:
            tot = tot + h
        mean = jnp.sum(tot, axis=1, keepdims=True) / n          # (Ch, 1)
        sq = None
        for h in hs:
            d = h - mean
            p = jnp.sum(d * d, axis=1, keepdims=True)
            sq = p if sq is None else sq + p
        var = sq / n                                            # biased var
        inv = lax.rsqrt(var + eps)
        g = g_ref_[...].astype(jnp.float32)
        b = be_ref_[...].astype(jnp.float32)
        return [(h - mean) * inv * g + b for h in hs]

    # ---- masked input: replace channel c with this variant's noise ---------
    xm = []
    for bi in range(B):
        xb = x_ref[bi].astype(jnp.float32)                      # (C, L)
        nb = noise_ref[pl.ds(bi, 1), :].astype(jnp.float32)     # (1, L)
        xm.append(jnp.where(chan_iota == c, nb, xb))

    # ---- fusing_part1 + residual1 ------------------------------------------
    h = conv1d(xm, w1_ref, b1_ref, dilation=2, relu=True)
    h = batchnorm(h, g1_ref, be1_ref)
    h = conv1d(h, w2_ref, b2_ref, dilation=4, relu=True)
    h = batchnorm(h, g2_ref, be2_ref)
    r1 = conv1d(xm, rw1_ref, rb1_ref, dilation=1, relu=False)
    out1 = [a + b for a, b in zip(h, r1)]

    # ---- fusing_part2 + residual2 ------------------------------------------
    h2 = conv1d(out1, w3_ref, b3_ref, dilation=8, relu=True)
    h2 = batchnorm(h2, g3_ref, be3_ref)
    h2 = conv1d(h2, w4_ref, b4_ref, dilation=16, relu=True)
    h2 = batchnorm(h2, g4_ref, be4_ref)
    r2 = conv1d(out1, rw2_ref, rb2_ref, dilation=1, relu=False)

    # ---- keep only the masked channel's row of the final output ------------
    for bi in range(B):
        out2_b = h2[bi] + r2[bi]                                # (C, L)
        row = jnp.sum(jnp.where(chan_iota == c, out2_b, 0.0),
                      axis=0, keepdims=True)                    # (1, L)
        o_ref[pl.ds(bi, 1), :] = row.astype(o_ref.dtype)


# ---------------------------------------------------------------------------
# Wrapper
# ---------------------------------------------------------------------------
def fmce_forward(params, x, noise, *, eps=1e-5, mxu_dtype=jnp.bfloat16):
    """x: (B, C, L); noise: (C, B, L) uniform[0,1) per variant -> (B, C, L)."""
    B, C, L = x.shape
    w1, b1 = params["conv1"]; w2, b2 = params["conv2"]
    w3, b3 = params["conv3"]; w4, b4 = params["conv4"]
    rw1, rb1 = params["res1"]; rw2, rb2 = params["res2"]
    g1, be1 = params["bn1"]; g2, be2 = params["bn2"]
    g3, be3 = params["bn3"]; g4, be4 = params["bn4"]

    K = w1.shape[0]
    M = w1.shape[1]
    pmax = 16 * (K - 1) // 2          # largest 'same' padding (conv4, dil=16)
    cmax = max(C, M)
    lpp = L + 2 * pmax

    flat = (w1, b1, w2, b2, w3, b3, w4, b4, rw1, rb1, rw2, rb2,
            g1, be1, g2, be2, g3, be3, g4, be4)

    def const_spec(a):                # full array, resident across the grid
        if a.ndim == 2:
            return pl.BlockSpec(a.shape, lambda c: (0, 0))
        return pl.BlockSpec(a.shape, lambda c: (0, 0, 0))

    in_specs = [
        pl.BlockSpec((None, B, L), lambda c: (c, 0, 0)),   # per-variant noise
        pl.BlockSpec((B, C, L), lambda c: (0, 0, 0)),      # full input
    ] + [const_spec(a) for a in flat]

    kernel = functools.partial(fmce_fused_kernel, eps=eps, pmax=pmax,
                               mxu_dtype=mxu_dtype)

    out_cbl = pl.pallas_call(
        kernel,
        out_shape=jax.ShapeDtypeStruct((C, B, L), x.dtype),
        grid=(C,),
        in_specs=in_specs,
        out_specs=pl.BlockSpec((None, B, L), lambda c: (c, 0, 0)),
        scratch_shapes=[pltpu.VMEM((cmax, lpp), jnp.float32)],
        compiler_params=pltpu.CompilerParams(
            dimension_semantics=("parallel",)),   # v7x: variants split over 2 TCs
    )(noise, x, *flat)

    # (variant, batch, L) -> (batch, masked-channel, L)
    return jnp.transpose(out_cbl, (1, 0, 2))


# ---------------------------------------------------------------------------
# Parameter init (deterministic, PyTorch-default-like scales)
# ---------------------------------------------------------------------------
def conv_init(key, cout, cin, k):
    bound = 1.0 / jnp.sqrt(float(cin * k))
    k1, k2 = jax.random.split(key)
    # Stored as (K, Cout, Cin)  (PyTorch stores (Cout, Cin, K)).
    w = jax.random.uniform(k1, (k, cout, cin), jnp.float32, -bound, bound)
    b = jax.random.uniform(k2, (cout, 1), jnp.float32, -bound, bound)
    return w, b


def init_params(key, C, M, K):
    keys = jax.random.split(key, 6)
    return {
        "conv1": conv_init(keys[0], M, C, K),
        "conv2": conv_init(keys[1], M, M, K),
        "conv3": conv_init(keys[2], M, M, K),
        "conv4": conv_init(keys[3], C, M, K),
        "res1": conv_init(keys[4], M, C, 1),
        "res2": conv_init(keys[5], C, M, 1),
        "bn1": (jnp.ones((M, 1), jnp.float32), jnp.zeros((M, 1), jnp.float32)),
        "bn2": (jnp.ones((M, 1), jnp.float32), jnp.zeros((M, 1), jnp.float32)),
        "bn3": (jnp.ones((M, 1), jnp.float32), jnp.zeros((M, 1), jnp.float32)),
        "bn4": (jnp.ones((C, 1), jnp.float32), jnp.zeros((C, 1), jnp.float32)),
    }


# ---------------------------------------------------------------------------
if __name__ == "__main__":
    total_channels, c_sync, c_fuse, kernel_size = 2, 2, 3, 3
    B, L = 2, 16
    C = total_channels * c_sync          # in/out channels = 4
    M = total_channels * c_fuse          # middle fuse channels = 6

    root = jax.random.PRNGKey(0)
    k_params, k_x, k_noise = jax.random.split(root, 3)

    params = init_params(k_params, C, M, kernel_size)
    x = jax.random.normal(k_x, (B, C, L), jnp.float32)
    # torch.rand_like -> one uniform [0,1) noise slab per masked-channel variant.
    noise = jax.random.uniform(k_noise, (C, B, L), dtype=jnp.float32)

    fwd = jax.jit(functools.partial(fmce_forward, eps=1e-5))
    out = fwd(params, x, noise)
    out = jax.block_until_ready(out)

    assert out.shape == (B, C, L), out.shape
    assert bool(jnp.all(jnp.isfinite(out)))
    print("KERNEL_OK")
</pallas_src>

<mosaic_0001>
module attributes {stable_mosaic.version = 11 : i64} {
  func.func @fmce_fused_kernel(%arg0: i32, %arg1: memref<1x2x16xf32, #tpu.memory_space<vmem>>, %arg2: memref<2x4x16xf32, #tpu.memory_space<vmem>>, %arg3: memref<3x6x4xf32, #tpu.memory_space<vmem>>, %arg4: memref<6x1xf32, #tpu.memory_space<vmem>>, %arg5: memref<3x6x6xf32, #tpu.memory_space<vmem>>, %arg6: memref<6x1xf32, #tpu.memory_space<vmem>>, %arg7: memref<3x6x6xf32, #tpu.memory_space<vmem>>, %arg8: memref<6x1xf32, #tpu.memory_space<vmem>>, %arg9: memref<3x4x6xf32, #tpu.memory_space<vmem>>, %arg10: memref<4x1xf32, #tpu.memory_space<vmem>>, %arg11: memref<1x6x4xf32, #tpu.memory_space<vmem>>, %arg12: memref<6x1xf32, #tpu.memory_space<vmem>>, %arg13: memref<1x4x6xf32, #tpu.memory_space<vmem>>, %arg14: memref<4x1xf32, #tpu.memory_space<vmem>>, %arg15: memref<6x1xf32, #tpu.memory_space<vmem>>, %arg16: memref<6x1xf32, #tpu.memory_space<vmem>>, %arg17: memref<6x1xf32, #tpu.memory_space<vmem>>, %arg18: memref<6x1xf32, #tpu.memory_space<vmem>>, %arg19: memref<6x1xf32, #tpu.memory_space<vmem>>, %arg20: memref<6x1xf32, #tpu.memory_space<vmem>>, %arg21: memref<4x1xf32, #tpu.memory_space<vmem>>, %arg22: memref<4x1xf32, #tpu.memory_space<vmem>>, %arg23: memref<1x2x16xf32, #tpu.memory_space<vmem>>, %arg24: memref<6x48xf32, #tpu.memory_space<vmem>>) attributes {dimension_semantics = [#tpu.dimension_semantics<parallel>], iteration_bounds = array<i64: 4>, scalar_prefetch = 0 : i64, scratch_operands = 1 : i64, tpu.core_type = #tpu.core_type<tc>, window_params = [{transform_indices = @transform_0, window_bounds = array<i64: 1, 2, 16>}, {pipeline_mode = #tpu.pipeline_mode<synchronous>, transform_indices = @transform_1, window_bounds = array<i64: 2, 4, 16>}, {pipeline_mode = #tpu.pipeline_mode<synchronous>, transform_indices = @transform_2, window_bounds = array<i64: 3, 6, 4>}, {pipeline_mode = #tpu.pipeline_mode<synchronous>, transform_indices = @transform_3, window_bounds = array<i64: 6, 1>}, {pipeline_mode = #tpu.pipeline_mode<synchronous>, transform_indices = @transform_4, window_bounds = array<i64: 3, 6, 6>}, {pipeline_mode = #tpu.pipeline_mode<synchronous>, transform_indices = @transform_5, window_bounds = array<i64: 6, 1>}, {pipeline_mode = #tpu.pipeline_mode<synchronous>, transform_indices = @transform_6, window_bounds = array<i64: 3, 6, 6>}, {pipeline_mode = #tpu.pipeline_mode<synchronous>, transform_indices = @transform_7, window_bounds = array<i64: 6, 1>}, {pipeline_mode = #tpu.pipeline_mode<synchronous>, transform_indices = @transform_8, window_bounds = array<i64: 3, 4, 6>}, {pipeline_mode = #tpu.pipeline_mode<synchronous>, transform_indices = @transform_9, window_bounds = array<i64: 4, 1>}, {pipeline_mode = #tpu.pipeline_mode<synchronous>, transform_indices = @transform_10, window_bounds = array<i64: 1, 6, 4>}, {pipeline_mode = #tpu.pipeline_mode<synchronous>, transform_indices = @transform_11, window_bounds = array<i64: 6, 1>}, {pipeline_mode = #tpu.pipeline_mode<synchronous>, transform_indices = @transform_12, window_bounds = array<i64: 1, 4, 6>}, {pipeline_mode = #tpu.pipeline_mode<synchronous>, transform_indices = @transform_13, window_bounds = array<i64: 4, 1>}, {pipeline_mode = #tpu.pipeline_mode<synchronous>, transform_indices = @transform_14, window_bounds = array<i64: 6, 1>}, {pipeline_mode = #tpu.pipeline_mode<synchronous>, transform_indices = @transform_15, window_bounds = array<i64: 6, 1>}, {pipeline_mode = #tpu.pipeline_mode<synchronous>, transform_indices = @transform_16, window_bounds = array<i64: 6, 1>}, {pipeline_mode = #tpu.pipeline_mode<synchronous>, transform_indices = @transform_17, window_bounds = array<i64: 6, 1>}, {pipeline_mode = #tpu.pipeline_mode<synchronous>, transform_indices = @transform_18, window_bounds = array<i64: 6, 1>}, {pipeline_mode = #tpu.pipeline_mode<synchronous>, transform_indices = @transform_19, window_bounds = array<i64: 6, 1>}, {pipeline_mode = #tpu.pipeline_mode<synchronous>, transform_indices = @transform_20, window_bounds = array<i64: 4, 1>}, {pipeline_mode = #tpu.pipeline_mode<synchronous>, transform_indices = @transform_21, window_bounds = array<i64: 4, 1>}, {transform_indices = @transform_22, window_bounds = array<i64: 1, 2, 16>}]} {
    %cst = arith.constant 0.000000e+00 : f32
    %0 = vector.broadcast %cst : f32 to vector<6x48xf32>
    %c0 = arith.constant 0 : index
    %c0_0 = arith.constant 0 : index
    %1 = vector.load %arg24[%c0, %c0_0] : memref<6x48xf32, #tpu.memory_space<vmem>>, vector<6x48xf32>
    tpu.vector_store %arg24[%c0, %c0_0], %0 {strides = array<i32>} : memref<6x48xf32, #tpu.memory_space<vmem>>, vector<6x48xf32>,
    %2 = tpu.iota {dimensions = array<i32: 0>} : vector<4x16xi32>
    %c0_1 = arith.constant 0 : index
    %c0_2 = arith.constant 0 : index
    %c0_3 = arith.constant 0 : index
    %3 = vector.load %arg2[%c0_1, %c0_2, %c0_3] : memref<2x4x16xf32, #tpu.memory_space<vmem>>, vector<1x4x16xf32>
    %4 = vector.shape_cast %3 : vector<1x4x16xf32> to vector<4x16xf32>
    %c0_4 = arith.constant 0 : index
    %c0_5 = arith.constant 0 : index
    %c0_6 = arith.constant 0 : index
    %5 = vector.load %arg1[%c0_4, %c0_5, %c0_6] : memref<1x2x16xf32, #tpu.memory_space<vmem>>, vector<1x1x16xf32>
    %6 = vector.shape_cast %5 : vector<1x1x16xf32> to vector<1x16xf32>
    %7 = vector.broadcast %arg0 : i32 to vector<4x16xi32>
    %8 = arith.cmpi eq, %2, %7 : vector<4x16xi32>
    %9 = vector.shape_cast %6 : vector<1x16xf32> to vector<1x16xf32>
    %10 = vector.broadcast %9 : vector<1x16xf32> to vector<4x16xf32>
    %11 = arith.select %8, %10, %4 : vector<4x16xi1>, vector<4x16xf32>
    %c1 = arith.constant 1 : index
    %c0_7 = arith.constant 0 : index
    %c0_8 = arith.constant 0 : index
    %12 = vector.load %arg2[%c1, %c0_7, %c0_8] : memref<2x4x16xf32, #tpu.memory_space<vmem>>, vector<1x4x16xf32>
    %13 = vector.shape_cast %12 : vector<1x4x16xf32> to vector<4x16xf32>
    %c0_9 = arith.constant 0 : index
    %c1_10 = arith.constant 1 : index
    %c0_11 = arith.constant 0 : index
    %14 = vector.load %arg1[%c0_9, %c1_10, %c0_11] : memref<1x2x16xf32, #tpu.memory_space<vmem>>, vector<1x1x16xf32>
    %15 = vector.shape_cast %14 : vector<1x1x16xf32> to vector<1x16xf32>
    %16 = vector.broadcast %arg0 : i32 to vector<4x16xi32>
    %17 = arith.cmpi eq, %2, %16 : vector<4x16xi32>
    %18 = vector.shape_cast %15 : vector<1x16xf32> to vector<1x16xf32>
    %19 = vector.broadcast %18 : vector<1x16xf32> to vector<4x16xf32>
    %20 = arith.select %17, %19, %13 : vector<4x16xi1>, vector<4x16xf32>
    %c0_12 = arith.constant 0 : index
    %c0_13 = arith.constant 0 : index
    %21 = vector.load %arg4[%c0_12, %c0_13] : memref<6x1xf32, #tpu.memory_space<vmem>>, vector<6x1xf32>
    %c0_14 = arith.constant 0 : index
    %c16 = arith.constant 16 : index
    %22 = vector.load %arg24[%c0_14, %c16] : memref<6x48xf32, #tpu.memory_space<vmem>>, vector<4x16xf32>
    tpu.vector_store %arg24[%c0_14, %c16], %11 {strides = array<i32>} : memref<6x48xf32, #tpu.memory_space<vmem>>, vector<4x16xf32>,
    %cst_15 = arith.constant 0.000000e+00 : f32
    %23 = vector.broadcast %cst_15 : f32 to vector<6x16xf32>
    %c0_16 = arith.constant 0 : index
    %c14 = arith.constant 14 : index
    %24 = vector.load %arg24[%c0_16, %c14] : memref<6x48xf32, #tpu.memory_space<vmem>>, vector<4x16xf32>
    %c0_17 = arith.constant 0 : index
    %c0_18 = arith.constant 0 : index
    %c0_19 = arith.constant 0 : index
    %25 = vector.load %arg3[%c0_17, %c0_18, %c0_19] : memref<3x6x4xf32, #tpu.memory_space<vmem>>, vector<1x6x4xf32>
    %26 = vector.shape_cast %25 : vector<1x6x4xf32> to vector<6x4xf32>
    %27 = arith.truncf %26 : vector<6x4xf32> to vector<6x4xbf16>
    %28 = arith.truncf %24 : vector<4x16xf32> to vector<4x16xbf16>
    %cst_20 = arith.constant dense<0.000000e+00> : vector<6x16xf32>
    %29 = tpu.matmul %27, %28, %cst_20 {dimension_numbers = #tpu.dot_dimension_numbers<[1], [0], [0], [1], [0, 0, 1, 1], [], []>} : vector<6x4xbf16>, vector<4x16xbf16>, vector<6x16xf32> -> vector<6x16xf32>
    %30 = arith.addf %23, %29 : vector<6x16xf32>
    %c0_21 = arith.constant 0 : index
    %c16_22 = arith.constant 16 : index
    %31 = vector.load %arg24[%c0_21, %c16_22] : memref<6x48xf32, #tpu.memory_space<vmem>>, vector<4x16xf32>
    %c1_23 = arith.constant 1 : index
    %c0_24 = arith.constant 0 : index
    %c0_25 = arith.constant 0 : index
    %32 = vector.load %arg3[%c1_23, %c0_24, %c0_25] : memref<3x6x4xf32, #tpu.memory_space<vmem>>, vector<1x6x4xf32>
    %33 = vector.shape_cast %32 : vector<1x6x4xf32> to vector<6x4xf32>
    %34 = arith.truncf %33 : vector<6x4xf32> to vector<6x4xbf16>
    %35 = arith.truncf %31 : vector<4x16xf32> to vector<4x16xbf16>
    %cst_26 = arith.constant dense<0.000000e+00> : vector<6x16xf32>
    %36 = tpu.matmul %34, %35, %cst_26 {dimension_numbers = #tpu.dot_dimension_numbers<[1], [0], [0], [1], [0, 0, 1, 1], [], []>} : vector<6x4xbf16>, vector<4x16xbf16>, vector<6x16xf32> -> vector<6x16xf32>
    %37 = arith.addf %30, %36 : vector<6x16xf32>
    %c0_27 = arith.constant 0 : index
    %c18 = arith.constant 18 : index
    %38 = vector.load %arg24[%c0_27, %c18] : memref<6x48xf32, #tpu.memory_space<vmem>>, vector<4x16xf32>
    %c2 = arith.constant 2 : index
    %c0_28 = arith.constant 0 : index
    %c0_29 = arith.constant 0 : index
    %39 = vector.load %arg3[%c2, %c0_28, %c0_29] : memref<3x6x4xf32, #tpu.memory_space<vmem>>, vector<1x6x4xf32>
    %40 = vector.shape_cast %39 : vector<1x6x4xf32> to vector<6x4xf32>
    %41 = arith.truncf %40 : vector<6x4xf32> to vector<6x4xbf16>
    %42 = arith.truncf %38 : vector<4x16xf32> to vector<4x16xbf16>
    %cst_30 = arith.constant dense<0.000000e+00> : vector<6x16xf32>
    %43 = tpu.matmul %41, %42, %cst_30 {dimension_numbers = #tpu.dot_dimension_numbers<[1], [0], [0], [1], [0, 0, 1, 1], [], []>} : vector<6x4xbf16>, vector<4x16xbf16>, vector<6x16xf32> -> vector<6x16xf32>
    %44 = arith.addf %37, %43 : vector<6x16xf32>
    %45 = vector.broadcast %21 : vector<6x1xf32> to vector<6x16xf32>
    %46 = arith.addf %44, %45 : vector<6x16xf32>
    %cst_31 = arith.constant 0.000000e+00 : f32
    %47 = vector.broadcast %cst_31 : f32 to vector<6x16xf32>
    %48 = arith.maximumf %46, %47 : vector<6x16xf32>
    %c0_32 = arith.constant 0 : index
    %c16_33 = arith.constant 16 : index
    %49 = vector.load %arg24[%c0_32, %c16_33] : memref<6x48xf32, #tpu.memory_space<vmem>>, vector<4x16xf32>
    tpu.vector_store %arg24[%c0_32, %c16_33], %20 {strides = array<i32>} : memref<6x48xf32, #tpu.memory_space<vmem>>, vector<4x16xf32>,
    %cst_34 = arith.constant 0.000000e+00 : f32
    %50 = vector.broadcast %cst_34 : f32 to vector<6x16xf32>
    %c0_35 = arith.constant 0 : index
    %c14_36 = arith.constant 14 : index
    %51 = vector.load %arg24[%c0_35, %c14_36] : memref<6x48xf32, #tpu.memory_space<vmem>>, vector<4x16xf32>
    %c0_37 = arith.constant 0 : index
    %c0_38 = arith.constant 0 : index
    %c0_39 = arith.constant 0 : index
    %52 = vector.load %arg3[%c0_37, %c0_38, %c0_39] : memref<3x6x4xf32, #tpu.memory_space<vmem>>, vector<1x6x4xf32>
    %53 = vector.shape_cast %52 : vector<1x6x4xf32> to vector<6x4xf32>
    %54 = arith.truncf %53 : vector<6x4xf32> to vector<6x4xbf16>
    %55 = arith.truncf %51 : vector<4x16xf32> to vector<4x16xbf16>
    %cst_40 = arith.constant dense<0.000000e+00> : vector<6x16xf32>
    %56 = tpu.matmul %54, %55, %cst_40 {dimension_numbers = #tpu.dot_dimension_numbers<[1], [0], [0], [1], [0, 0, 1, 1], [], []>} : vector<6x4xbf16>, vector<4x16xbf16>, vector<6x16xf32> -> vector<6x16xf32>
    %57 = arith.addf %50, %56 : vector<6x16xf32>
    %c0_41 = arith.constant 0 : index
    %c16_42 = arith.constant 16 : index
    %58 = vector.load %arg24[%c0_41, %c16_42] : memref<6x48xf32, #tpu.memory_space<vmem>>, vector<4x16xf32>
    %c1_43 = arith.constant 1 : index
    %c0_44 = arith.constant 0 : index
    %c0_45 = arith.constant 0 : index
    %59 = vector.load %arg3[%c1_43, %c0_44, %c0_45] : memref<3x6x4xf32, #tpu.memory_space<vmem>>, vector<1x6x4xf32>
    %60 = vector.shape_cast %59 : vector<1x6x4xf32> to vector<6x4xf32>
    %61 = arith.truncf %60 : vector<6x4xf32> to vector<6x4xbf16>
    %62 = arith.truncf %58 : vector<4x16xf32> to vector<4x16xbf16>
    %cst_46 = arith.constant dense<0.000000e+00> : vector<6x16xf32>
    %63 = tpu.matmul %61, %62, %cst_46 {dimension_numbers = #tpu.dot_dimension_numbers<[1], [0], [0], [1], [0, 0, 1, 1], [], []>} : vector<6x4xbf16>, vector<4x16xbf16>, vector<6x16xf32> -> vector<6x16xf32>
    %64 = arith.addf %57, %63 : vector<6x16xf32>
    %c0_47 = arith.constant 0 : index
    %c18_48 = arith.constant 18 : index
    %65 = vector.load %arg24[%c0_47, %c18_48] : memref<6x48xf32, #tpu.memory_space<vmem>>, vector<4x16xf32>
    %c2_49 = arith.constant 2 : index
    %c0_50 = arith.constant 0 : index
    %c0_51 = arith.constant 0 : index
    %66 = vector.load %arg3[%c2_49, %c0_50, %c0_51] : memref<3x6x4xf32, #tpu.memory_space<vmem>>, vector<1x6x4xf32>
    %67 = vector.shape_cast %66 : vector<1x6x4xf32> to vector<6x4xf32>
    %68 = arith.truncf %67 : vector<6x4xf32> to vector<6x4xbf16>
    %69 = arith.truncf %65 : vector<4x16xf32> to vector<4x16xbf16>
    %cst_52 = arith.constant dense<0.000000e+00> : vector<6x16xf32>
    %70 = tpu.matmul %68, %69, %cst_52 {dimension_numbers = #tpu.dot_dimension_numbers<[1], [0], [0], [1], [0, 0, 1, 1], [], []>} : vector<6x4xbf16>, vector<4x16xbf16>, vector<6x16xf32> -> vector<6x16xf32>
    %71 = arith.addf %64, %70 : vector<6x16xf32>
    %72 = vector.broadcast %21 : vector<6x1xf32> to vector<6x16xf32>
    %73 = arith.addf %71, %72 : vector<6x16xf32>
    %cst_53 = arith.constant 0.000000e+00 : f32
    %74 = vector.broadcast %cst_53 : f32 to vector<6x16xf32>
    %75 = arith.maximumf %73, %74 : vector<6x16xf32>
    %76 = arith.addf %48, %75 : vector<6x16xf32>
    %cst_54 = arith.constant dense<0.000000e+00> : vector<6xf32>
    %77 = vector.multi_reduction <add>, %76, %cst_54 [1] : vector<6x16xf32> to vector<6xf32>
    %78 = vector.shape_cast %77 : vector<6xf32> to vector<6x1xf32>
    %cst_55 = arith.constant 3.200000e+01 : f32
    %79 = vector.broadcast %cst_55 : f32 to vector<6x1xf32>
    %80 = arith.divf %78, %79 : vector<6x1xf32>
    %81 = vector.broadcast %80 : vector<6x1xf32> to vector<6x16xf32>
    %82 = arith.subf %48, %81 : vector<6x16xf32>
    %83 = arith.mulf %82, %82 : vector<6x16xf32>
    %cst_56 = arith.constant dense<0.000000e+00> : vector<6xf32>
    %84 = vector.multi_reduction <add>, %83, %cst_56 [1] : vector<6x16xf32> to vector<6xf32>
    %85 = vector.shape_cast %84 : vector<6xf32> to vector<6x1xf32>
    %86 = vector.broadcast %80 : vector<6x1xf32> to vector<6x16xf32>
    %87 = arith.subf %75, %86 : vector<6x16xf32>
    %88 = arith.mulf %87, %87 : vector<6x16xf32>
    %cst_57 = arith.constant dense<0.000000e+00> : vector<6xf32>
    %89 = vector.multi_reduction <add>, %88, %cst_57 [1] : vector<6x16xf32> to vector<6xf32>
    %90 = vector.shape_cast %89 : vector<6xf32> to vector<6x1xf32>
    %91 = arith.addf %85, %90 : vector<6x1xf32>
    %cst_58 = arith.constant 3.200000e+01 : f32
    %92 = vector.broadcast %cst_58 : f32 to vector<6x1xf32>
    %93 = arith.divf %91, %92 : vector<6x1xf32>
    %cst_59 = arith.constant 9.99999974E-6 : f32
    %94 = vector.broadcast %cst_59 : f32 to vector<6x1xf32>
    %95 = arith.addf %93, %94 : vector<6x1xf32>
    %96 = math.rsqrt %95 : vector<6x1xf32>
    %c0_60 = arith.constant 0 : index
    %c0_61 = arith.constant 0 : index
    %97 = vector.load %arg15[%c0_60, %c0_61] : memref<6x1xf32, #tpu.memory_space<vmem>>, vector<6x1xf32>
    %c0_62 = arith.constant 0 : index
    %c0_63 = arith.constant 0 : index
    %98 = vector.load %arg16[%c0_62, %c0_63] : memref<6x1xf32, #tpu.memory_space<vmem>>, vector<6x1xf32>
    %99 = vector.broadcast %80 : vector<6x1xf32> to vector<6x16xf32>
    %100 = arith.subf %48, %99 : vector<6x16xf32>
    %101 = vector.broadcast %96 : vector<6x1xf32> to vector<6x16xf32>
    %102 = arith.mulf %100, %101 : vector<6x16xf32>
    %103 = vector.broadcast %97 : vector<6x1xf32> to vector<6x16xf32>
    %104 = arith.mulf %102, %103 : vector<6x16xf32>
    %105 = vector.broadcast %98 : vector<6x1xf32> to vector<6x16xf32>
    %106 = arith.addf %104, %105 : vector<6x16xf32>
    %107 = vector.broadcast %80 : vector<6x1xf32> to vector<6x16xf32>
    %108 = arith.subf %75, %107 : vector<6x16xf32>
    %109 = vector.broadcast %96 : vector<6x1xf32> to vector<6x16xf32>
    %110 = arith.mulf %108, %109 : vector<6x16xf32>
    %111 = vector.broadcast %97 : vector<6x1xf32> to vector<6x16xf32>
    %112 = arith.mulf %110, %111 : vector<6x16xf32>
    %113 = vector.broadcast %98 : vector<6x1xf32> to vector<6x16xf32>
    %114 = arith.addf %112, %113 : vector<6x16xf32>
    %c0_64 = arith.constant 0 : index
    %c0_65 = arith.constant 0 : index
    %115 = vector.load %arg6[%c0_64, %c0_65] : memref<6x1xf32, #tpu.memory_space<vmem>>, vector<6x1xf32>
    %c0_66 = arith.constant 0 : index
    %c16_67 = arith.constant 16 : index
    %116 = vector.load %arg24[%c0_66, %c16_67] : memref<6x48xf32, #tpu.memory_space<vmem>>, vector<6x16xf32>
    tpu.vector_store %arg24[%c0_66, %c16_67], %106 {strides = array<i32>} : memref<6x48xf32, #tpu.memory_space<vmem>>, vector<6x16xf32>,
    %cst_68 = arith.constant 0.000000e+00 : f32
    %117 = vector.broadcast %cst_68 : f32 to vector<6x16xf32>
    %c0_69 = arith.constant 0 : index
    %c12 = arith.constant 12 : index
    %118 = vector.load %arg24[%c0_69, %c12] : memref<6x48xf32, #tpu.memory_space<vmem>>, vector<6x16xf32>
    %c0_70 = arith.constant 0 : index
    %c0_71 = arith.constant 0 : index
    %c0_72 = arith.constant 0 : index
    %119 = vector.load %arg5[%c0_70, %c0_71, %c0_72] : memref<3x6x6xf32, #tpu.memory_space<vmem>>, vector<1x6x6xf32>
    %120 = vector.shape_cast %119 : vector<1x6x6xf32> to vector<6x6xf32>
    %121 = arith.truncf %120 : vector<6x6xf32> to vector<6x6xbf16>
    %122 = arith.truncf %118 : vector<6x16xf32> to vector<6x16xbf16>
    %cst_73 = arith.constant dense<0.000000e+00> : vector<6x16xf32>
    %123 = tpu.matmul %121, %122, %cst_73 {dimension_numbers = #tpu.dot_dimension_numbers<[1], [0], [0], [1], [0, 0, 1, 1], [], []>} : vector<6x6xbf16>, vector<6x16xbf16>, vector<6x16xf32> -> vector<6x16xf32>
    %124 = arith.addf %117, %123 : vector<6x16xf32>
    %c0_74 = arith.constant 0 : index
    %c16_75 = arith.constant 16 : index
    %125 = vector.load %arg24[%c0_74, %c16_75] : memref<6x48xf32, #tpu.memory_space<vmem>>, vector<6x16xf32>
    %c1_76 = arith.constant 1 : index
    %c0_77 = arith.constant 0 : index
    %c0_78 = arith.constant 0 : index
    %126 = vector.load %arg5[%c1_76, %c0_77, %c0_78] : memref<3x6x6xf32, #tpu.memory_space<vmem>>, vector<1x6x6xf32>
    %127 = vector.shape_cast %126 : vector<1x6x6xf32> to vector<6x6xf32>
    %128 = arith.truncf %127 : vector<6x6xf32> to vector<6x6xbf16>
    %129 = arith.truncf %125 : vector<6x16xf32> to vector<6x16xbf16>
    %cst_79 = arith.constant dense<0.000000e+00> : vector<6x16xf32>
    %130 = tpu.matmul %128, %129, %cst_79 {dimension_numbers = #tpu.dot_dimension_numbers<[1], [0], [0], [1], [0, 0, 1, 1], [], []>} : vector<6x6xbf16>, vector<6x16xbf16>, vector<6x16xf32> -> vector<6x16xf32>
    %131 = arith.addf %124, %130 : vector<6x16xf32>
    %c0_80 = arith.constant 0 : index
    %c20 = arith.constant 20 : index
    %132 = vector.load %arg24[%c0_80, %c20] : memref<6x48xf32, #tpu.memory_space<vmem>>, vector<6x16xf32>
    %c2_81 = arith.constant 2 : index
    %c0_82 = arith.constant 0 : index
    %c0_83 = arith.constant 0 : index
    %133 = vector.load %arg5[%c2_81, %c0_82, %c0_83] : memref<3x6x6xf32, #tpu.memory_space<vmem>>, vector<1x6x6xf32>
    %134 = vector.shape_cast %133 : vector<1x6x6xf32> to vector<6x6xf32>
    %135 = arith.truncf %134 : vector<6x6xf32> to vector<6x6xbf16>
    %136 = arith.truncf %132 : vector<6x16xf32> to vector<6x16xbf16>
    %cst_84 = arith.constant dense<0.000000e+00> : vector<6x16xf32>
    %137 = tpu.matmul %135, %136, %cst_84 {dimension_numbers = #tpu.dot_dimension_numbers<[1], [0], [0], [1], [0, 0, 1, 1], [], []>} : vector<6x6xbf16>, vector<6x16xbf16>, vector<6x16xf32> -> vector<6x16xf32>
    %138 = arith.addf %131, %137 : vector<6x16xf32>
    %139 = vector.broadcast %115 : vector<6x1xf32> to vector<6x16xf32>
    %140 = arith.addf %138, %139 : vector<6x16xf32>
    %cst_85 = arith.constant 0.000000e+00 : f32
    %141 = vector.broadcast %cst_85 : f32 to vector<6x16xf32>
    %142 = arith.maximumf %140, %141 : vector<6x16xf32>
    %c0_86 = arith.constant 0 : index
    %c16_87 = arith.constant 16 : index
    %143 = vector.load %arg24[%c0_86, %c16_87] : memref<6x48xf32, #tpu.memory_space<vmem>>, vector<6x16xf32>
    tpu.vector_store %arg24[%c0_86, %c16_87], %114 {strides = array<i32>} : memref<6x48xf32, #tpu.memory_space<vmem>>, vector<6x16xf32>,
    %cst_88 = arith.constant 0.000000e+00 : f32
    %144 = vector.broadcast %cst_88 : f32 to vector<6x16xf32>
    %c0_89 = arith.constant 0 : index
    %c12_90 = arith.constant 12 : index
    %145 = vector.load %arg24[%c0_89, %c12_90] : memref<6x48xf32, #tpu.memory_space<vmem>>, vector<6x16xf32>
    %c0_91 = arith.constant 0 : index
    %c0_92 = arith.constant 0 : index
    %c0_93 = arith.constant 0 : index
    %146 = vector.load %arg5[%c0_91, %c0_92, %c0_93] : memref<3x6x6xf32, #tpu.memory_space<vmem>>, vector<1x6x6xf32>
    %147 = vector.shape_cast %146 : vector<1x6x6xf32> to vector<6x6xf32>
    %148 = arith.truncf %147 : vector<6x6xf32> to vector<6x6xbf16>
    %149 = arith.truncf %145 : vector<6x16xf32> to vector<6x16xbf16>
    %cst_94 = arith.constant dense<0.000000e+00> : vector<6x16xf32>
    %150 = tpu.matmul %148, %149, %cst_94 {dimension_numbers = #tpu.dot_dimension_numbers<[1], [0], [0], [1], [0, 0, 1, 1], [], []>} : vector<6x6xbf16>, vector<6x16xbf16>, vector<6x16xf32> -> vector<6x16xf32>
    %151 = arith.addf %144, %150 : vector<6x16xf32>
    %c0_95 = arith.constant 0 : index
    %c16_96 = arith.constant 16 : index
    %152 = vector.load %arg24[%c0_95, %c16_96] : memref<6x48xf32, #tpu.memory_space<vmem>>, vector<6x16xf32>
    %c1_97 = arith.constant 1 : index
    %c0_98 = arith.constant 0 : index
    %c0_99 = arith.constant 0 : index
    %153 = vector.load %arg5[%c1_97, %c0_98, %c0_99] : memref<3x6x6xf32, #tpu.memory_space<vmem>>, vector<1x6x6xf32>
    %154 = vector.shape_cast %153 : vector<1x6x6xf32> to vector<6x6xf32>
    %155 = arith.truncf %154 : vector<6x6xf32> to vector<6x6xbf16>
    %156 = arith.truncf %152 : vector<6x16xf32> to vector<6x16xbf16>
    %cst_100 = arith.constant dense<0.000000e+00> : vector<6x16xf32>
    %157 = tpu.matmul %155, %156, %cst_100 {dimension_numbers = #tpu.dot_dimension_numbers<[1], [0], [0], [1], [0, 0, 1, 1], [], []>} : vector<6x6xbf16>, vector<6x16xbf16>, vector<6x16xf32> -> vector<6x16xf32>
    %158 = arith.addf %151, %157 : vector<6x16xf32>
    %c0_101 = arith.constant 0 : index
    %c20_102 = arith.constant 20 : index
    %159 = vector.load %arg24[%c0_101, %c20_102] : memref<6x48xf32, #tpu.memory_space<vmem>>, vector<6x16xf32>
    %c2_103 = arith.constant 2 : index
    %c0_104 = arith.constant 0 : index
    %c0_105 = arith.constant 0 : index
    %160 = vector.load %arg5[%c2_103, %c0_104, %c0_105] : memref<3x6x6xf32, #tpu.memory_space<vmem>>, vector<1x6x6xf32>
    %161 = vector.shape_cast %160 : vector<1x6x6xf32> to vector<6x6xf32>
    %162 = arith.truncf %161 : vector<6x6xf32> to vector<6x6xbf16>
    %163 = arith.truncf %159 : vector<6x16xf32> to vector<6x16xbf16>
    %cst_106 = arith.constant dense<0.000000e+00> : vector<6x16xf32>
    %164 = tpu.matmul %162, %163, %cst_106 {dimension_numbers = #tpu.dot_dimension_numbers<[1], [0], [0], [1], [0, 0, 1, 1], [], []>} : vector<6x6xbf16>, vector<6x16xbf16>, vector<6x16xf32> -> vector<6x16xf32>
    %165 = arith.addf %158, %164 : vector<6x16xf32>
    %166 = vector.broadcast %115 : vector<6x1xf32> to vector<6x16xf32>
    %167 = arith.addf %165, %166 : vector<6x16xf32>
    %cst_107 = arith.constant 0.000000e+00 : f32
    %168 = vector.broadcast %cst_107 : f32 to vector<6x16xf32>
    %169 = arith.maximumf %167, %168 : vector<6x16xf32>
    %170 = arith.addf %142, %169 : vector<6x16xf32>
    %cst_108 = arith.constant dense<0.000000e+00> : vector<6xf32>
    %171 = vector.multi_reduction <add>, %170, %cst_108 [1] : vector<6x16xf32> to vector<6xf32>
    %172 = vector.shape_cast %171 : vector<6xf32> to vector<6x1xf32>
    %cst_109 = arith.constant 3.200000e+01 : f32
    %173 = vector.broadcast %cst_109 : f32 to vector<6x1xf32>
    %174 = arith.divf %172, %173 : vector<6x1xf32>
    %175 = vector.broadcast %174 : vector<6x1xf32> to vector<6x16xf32>
    %176 = arith.subf %142, %175 : vector<6x16xf32>
    %177 = arith.mulf %176, %176 : vector<6x16xf32>
    %cst_110 = arith.constant dense<0.000000e+00> : vector<6xf32>
    %178 = vector.multi_reduction <add>, %177, %cst_110 [1] : vector<6x16xf32> to vector<6xf32>
    %179 = vector.shape_cast %178 : vector<6xf32> to vector<6x1xf32>
    %180 = vector.broadcast %174 : vector<6x1xf32> to vector<6x16xf32>
    %181 = arith.subf %169, %180 : vector<6x16xf32>
    %182 = arith.mulf %181, %181 : vector<6x16xf32>
    %cst_111 = arith.constant dense<0.000000e+00> : vector<6xf32>
    %183 = vector.multi_reduction <add>, %182, %cst_111 [1] : vector<6x16xf32> to vector<6xf32>
    %184 = vector.shape_cast %183 : vector<6xf32> to vector<6x1xf32>
    %185 = arith.addf %179, %184 : vector<6x1xf32>
    %cst_112 = arith.constant 3.200000e+01 : f32
    %186 = vector.broadcast %cst_112 : f32 to vector<6x1xf32>
    %187 = arith.divf %185, %186 : vector<6x1xf32>
    %cst_113 = arith.constant 9.99999974E-6 : f32
    %188 = vector.broadcast %cst_113 : f32 to vector<6x1xf32>
    %189 = arith.addf %187, %188 : vector<6x1xf32>
    %190 = math.rsqrt %189 : vector<6x1xf32>
    %c0_114 = arith.constant 0 : index
    %c0_115 = arith.constant 0 : index
    %191 = vector.load %arg17[%c0_114, %c0_115] : memref<6x1xf32, #tpu.memory_space<vmem>>, vector<6x1xf32>
    %c0_116 = arith.constant 0 : index
    %c0_117 = arith.constant 0 : index
    %192 = vector.load %arg18[%c0_116, %c0_117] : memref<6x1xf32, #tpu.memory_space<vmem>>, vector<6x1xf32>
    %193 = vector.broadcast %174 : vector<6x1xf32> to vector<6x16xf32>
    %194 = arith.subf %142, %193 : vector<6x16xf32>
    %195 = vector.broadcast %190 : vector<6x1xf32> to vector<6x16xf32>
    %196 = arith.mulf %194, %195 : vector<6x16xf32>
    %197 = vector.broadcast %191 : vector<6x1xf32> to vector<6x16xf32>
    %198 = arith.mulf %196, %197 : vector<6x16xf32>
    %199 = vector.broadcast %192 : vector<6x1xf32> to vector<6x16xf32>
    %200 = arith.addf %198, %199 : vector<6x16xf32>
    %201 = vector.broadcast %174 : vector<6x1xf32> to vector<6x16xf32>
    %202 = arith.subf %169, %201 : vector<6x16xf32>
    %203 = vector.broadcast %190 : vector<6x1xf32> to vector<6x16xf32>
    %204 = arith.mulf %202, %203 : vector<6x16xf32>
    %205 = vector.broadcast %191 : vector<6x1xf32> to vector<6x16xf32>
    %206 = arith.mulf %204, %205 : vector<6x16xf32>
    %207 = vector.broadcast %192 : vector<6x1xf32> to vector<6x16xf32>
    %208 = arith.addf %206, %207 : vector<6x16xf32>
    %c0_118 = arith.constant 0 : index
    %c0_119 = arith.constant 0 : index
    %209 = vector.load %arg12[%c0_118, %c0_119] : memref<6x1xf32, #tpu.memory_space<vmem>>, vector<6x1xf32>
    %c0_120 = arith.constant 0 : index
    %c0_121 = arith.constant 0 : index
    %c0_122 = arith.constant 0 : index
    %210 = vector.load %arg11[%c0_120, %c0_121, %c0_122] : memref<1x6x4xf32, #tpu.memory_space<vmem>>, vector<1x6x4xf32>
    %211 = vector.shape_cast %210 : vector<1x6x4xf32> to vector<6x4xf32>
    %212 = arith.truncf %211 : vector<6x4xf32> to vector<6x4xbf16>
    %213 = arith.truncf %11 : vector<4x16xf32> to vector<4x16xbf16>
    %cst_123 = arith.constant dense<0.000000e+00> : vector<6x16xf32>
    %214 = tpu.matmul %212, %213, %cst_123 {dimension_numbers = #tpu.dot_dimension_numbers<[1], [0], [0], [1], [0, 0, 1, 1], [], []>} : vector<6x4xbf16>, vector<4x16xbf16>, vector<6x16xf32> -> vector<6x16xf32>
    %215 = vector.broadcast %209 : vector<6x1xf32> to vector<6x16xf32>
    %216 = arith.addf %214, %215 : vector<6x16xf32>
    %c0_124 = arith.constant 0 : index
    %c0_125 = arith.constant 0 : index
    %c0_126 = arith.constant 0 : index
    %217 = vector.load %arg11[%c0_124, %c0_125, %c0_126] : memref<1x6x4xf32, #tpu.memory_space<vmem>>, vector<1x6x4xf32>
    %218 = vector.shape_cast %217 : vector<1x6x4xf32> to vector<6x4xf32>
    %219 = arith.truncf %218 : vector<6x4xf32> to vector<6x4xbf16>
    %220 = arith.truncf %20 : vector<4x16xf32> to vector<4x16xbf16>
    %cst_127 = arith.constant dense<0.000000e+00> : vector<6x16xf32>
    %221 = tpu.matmul %219, %220, %cst_127 {dimension_numbers = #tpu.dot_dimension_numbers<[1], [0], [0], [1], [0, 0, 1, 1], [], []>} : vector<6x4xbf16>, vector<4x16xbf16>, vector<6x16xf32> -> vector<6x16xf32>
    %222 = vector.broadcast %209 : vector<6x1xf32> to vector<6x16xf32>
    %223 = arith.addf %221, %222 : vector<6x16xf32>
    %224 = arith.addf %200, %216 : vector<6x16xf32>
    %225 = arith.addf %208, %223 : vector<6x16xf32>
    %c0_128 = arith.constant 0 : index
    %c0_129 = arith.constant 0 : index
    %226 = vector.load %arg8[%c0_128, %c0_129] : memref<6x1xf32, #tpu.memory_space<vmem>>, vector<6x1xf32>
    %c0_130 = arith.constant 0 : index
    %c16_131 = arith.constant 16 : index
    %227 = vector.load %arg24[%c0_130, %c16_131] : memref<6x48xf32, #tpu.memory_space<vmem>>, vector<6x16xf32>
    tpu.vector_store %arg24[%c0_130, %c16_131], %224 {strides = array<i32>} : memref<6x48xf32, #tpu.memory_space<vmem>>, vector<6x16xf32>,
    %cst_132 = arith.constant 0.000000e+00 : f32
    %228 = vector.broadcast %cst_132 : f32 to vector<6x16xf32>
    %c0_133 = arith.constant 0 : index
    %c8 = arith.constant 8 : index
    %229 = vector.load %arg24[%c0_133, %c8] : memref<6x48xf32, #tpu.memory_space<vmem>>, vector<6x16xf32>
    %c0_134 = arith.constant 0 : index
    %c0_135 = arith.constant 0 : index
    %c0_136 = arith.constant 0 : index
    %230 = vector.load %arg7[%c0_134, %c0_135, %c0_136] : memref<3x6x6xf32, #tpu.memory_space<vmem>>, vector<1x6x6xf32>
    %231 = vector.shape_cast %230 : vector<1x6x6xf32> to vector<6x6xf32>
    %232 = arith.truncf %231 : vector<6x6xf32> to vector<6x6xbf16>
    %233 = arith.truncf %229 : vector<6x16xf32> to vector<6x16xbf16>
    %cst_137 = arith.constant dense<0.000000e+00> : vector<6x16xf32>
    %234 = tpu.matmul %232, %233, %cst_137 {dimension_numbers = #tpu.dot_dimension_numbers<[1], [0], [0], [1], [0, 0, 1, 1], [], []>} : vector<6x6xbf16>, vector<6x16xbf16>, vector<6x16xf32> -> vector<6x16xf32>
    %235 = arith.addf %228, %234 : vector<6x16xf32>
    %c0_138 = arith.constant 0 : index
    %c16_139 = arith.constant 16 : index
    %236 = vector.load %arg24[%c0_138, %c16_139] : memref<6x48xf32, #tpu.memory_space<vmem>>, vector<6x16xf32>
    %c1_140 = arith.constant 1 : index
    %c0_141 = arith.constant 0 : index
    %c0_142 = arith.constant 0 : index
    %237 = vector.load %arg7[%c1_140, %c0_141, %c0_142] : memref<3x6x6xf32, #tpu.memory_space<vmem>>, vector<1x6x6xf32>
    %238 = vector.shape_cast %237 : vector<1x6x6xf32> to vector<6x6xf32>
    %239 = arith.truncf %238 : vector<6x6xf32> to vector<6x6xbf16>
    %240 = arith.truncf %236 : vector<6x16xf32> to vector<6x16xbf16>
    %cst_143 = arith.constant dense<0.000000e+00> : vector<6x16xf32>
    %241 = tpu.matmul %239, %240, %cst_143 {dimension_numbers = #tpu.dot_dimension_numbers<[1], [0], [0], [1], [0, 0, 1, 1], [], []>} : vector<6x6xbf16>, vector<6x16xbf16>, vector<6x16xf32> -> vector<6x16xf32>
    %242 = arith.addf %235, %241 : vector<6x16xf32>
    %c0_144 = arith.constant 0 : index
    %c24 = arith.constant 24 : index
    %243 = vector.load %arg24[%c0_144, %c24] : memref<6x48xf32, #tpu.memory_space<vmem>>, vector<6x16xf32>
    %c2_145 = arith.constant 2 : index
    %c0_146 = arith.constant 0 : index
    %c0_147 = arith.constant 0 : index
    %244 = vector.load %arg7[%c2_145, %c0_146, %c0_147] : memref<3x6x6xf32, #tpu.memory_space<vmem>>, vector<1x6x6xf32>
    %245 = vector.shape_cast %244 : vector<1x6x6xf32> to vector<6x6xf32>
    %246 = arith.truncf %245 : vector<6x6xf32> to vector<6x6xbf16>
    %247 = arith.truncf %243 : vector<6x16xf32> to vector<6x16xbf16>
    %cst_148 = arith.constant dense<0.000000e+00> : vector<6x16xf32>
    %248 = tpu.matmul %246, %247, %cst_148 {dimension_numbers = #tpu.dot_dimension_numbers<[1], [0], [0], [1], [0, 0, 1, 1], [], []>} : vector<6x6xbf16>, vector<6x16xbf16>, vector<6x16xf32> -> vector<6x16xf32>
    %249 = arith.addf %242, %248 : vector<6x16xf32>
    %250 = vector.broadcast %226 : vector<6x1xf32> to vector<6x16xf32>
    %251 = arith.addf %249, %250 : vector<6x16xf32>
    %cst_149 = arith.constant 0.000000e+00 : f32
    %252 = vector.broadcast %cst_149 : f32 to vector<6x16xf32>
    %253 = arith.maximumf %251, %252 : vector<6x16xf32>
    %c0_150 = arith.constant 0 : index
    %c16_151 = arith.constant 16 : index
    %254 = vector.load %arg24[%c0_150, %c16_151] : memref<6x48xf32, #tpu.memory_space<vmem>>, vector<6x16xf32>
    tpu.vector_store %arg24[%c0_150, %c16_151], %225 {strides = array<i32>} : memref<6x48xf32, #tpu.memory_space<vmem>>, vector<6x16xf32>,
    %cst_152 = arith.constant 0.000000e+00 : f32
    %255 = vector.broadcast %cst_152 : f32 to vector<6x16xf32>
    %c0_153 = arith.constant 0 : index
    %c8_154 = arith.constant 8 : index
    %256 = vector.load %arg24[%c0_153, %c8_154] : memref<6x48xf32, #tpu.memory_space<vmem>>, vector<6x16xf32>
    %c0_155 = arith.constant 0 : index
    %c0_156 = arith.constant 0 : index
    %c0_157 = arith.constant 0 : index
    %257 = vector.load %arg7[%c0_155, %c0_156, %c0_157] : memref<3x6x6xf32, #tpu.memory_space<vmem>>, vector<1x6x6xf32>
    %258 = vector.shape_cast %257 : vector<1x6x6xf32> to vector<6x6xf32>
    %259 = arith.truncf %258 : vector<6x6xf32> to vector<6x6xbf16>
    %260 = arith.truncf %256 : vector<6x16xf32> to vector<6x16xbf16>
    %cst_158 = arith.constant dense<0.000000e+00> : vector<6x16xf32>
    %261 = tpu.matmul %259, %260, %cst_158 {dimension_numbers = #tpu.dot_dimension_numbers<[1], [0], [0], [1], [0, 0, 1, 1], [], []>} : vector<6x6xbf16>, vector<6x16xbf16>, vector<6x16xf32> -> vector<6x16xf32>
    %262 = arith.addf %255, %261 : vector<6x16xf32>
    %c0_159 = arith.constant 0 : index
    %c16_160 = arith.constant 16 : index
    %263 = vector.load %arg24[%c0_159, %c16_160] : memref<6x48xf32, #tpu.memory_space<vmem>>, vector<6x16xf32>
    %c1_161 = arith.constant 1 : index
    %c0_162 = arith.constant 0 : index
    %c0_163 = arith.constant 0 : index
    %264 = vector.load %arg7[%c1_161, %c0_162, %c0_163] : memref<3x6x6xf32, #tpu.memory_space<vmem>>, vector<1x6x6xf32>
    %265 = vector.shape_cast %264 : vector<1x6x6xf32> to vector<6x6xf32>
    %266 = arith.truncf %265 : vector<6x6xf32> to vector<6x6xbf16>
    %267 = arith.truncf %263 : vector<6x16xf32> to vector<6x16xbf16>
    %cst_164 = arith.constant dense<0.000000e+00> : vector<6x16xf32>
    %268 = tpu.matmul %266, %267, %cst_164 {dimension_numbers = #tpu.dot_dimension_numbers<[1], [0], [0], [1], [0, 0, 1, 1], [], []>} : vector<6x6xbf16>, vector<6x16xbf16>, vector<6x16xf32> -> vector<6x16xf32>
    %269 = arith.addf %262, %268 : vector<6x16xf32>
    %c0_165 = arith.constant 0 : index
    %c24_166 = arith.constant 24 : index
    %270 = vector.load %arg24[%c0_165, %c24_166] : memref<6x48xf32, #tpu.memory_space<vmem>>, vector<6x16xf32>
    %c2_167 = arith.constant 2 : index
    %c0_168 = arith.constant 0 : index
    %c0_169 = arith.constant 0 : index
    %271 = vector.load %arg7[%c2_167, %c0_168, %c0_169] : memref<3x6x6xf32, #tpu.memory_space<vmem>>, vector<1x6x6xf32>
    %272 = vector.shape_cast %271 : vector<1x6x6xf32> to vector<6x6xf32>
    %273 = arith.truncf %272 : vector<6x6xf32> to vector<6x6xbf16>
    %274 = arith.truncf %270 : vector<6x16xf32> to vector<6x16xbf16>
    %cst_170 = arith.constant dense<0.000000e+00> : vector<6x16xf32>
    %275 = tpu.matmul %273, %274, %cst_170 {dimension_numbers = #tpu.dot_dimension_numbers<[1], [0], [0], [1], [0, 0, 1, 1], [], []>} : vector<6x6xbf16>, vector<6x16xbf16>, vector<6x16xf32> -> vector<6x16xf32>
    %276 = arith.addf %269, %275 : vector<6x16xf32>
    %277 = vector.broadcast %226 : vector<6x1xf32> to vector<6x16xf32>
    %278 = arith.addf %276, %277 : vector<6x16xf32>
    %cst_171 = arith.constant 0.000000e+00 : f32
    %279 = vector.broadcast %cst_171 : f32 to vector<6x16xf32>
    %280 = arith.maximumf %278, %279 : vector<6x16xf32>
    %281 = arith.addf %253, %280 : vector<6x16xf32>
    %cst_172 = arith.constant dense<0.000000e+00> : vector<6xf32>
    %282 = vector.multi_reduction <add>, %281, %cst_172 [1] : vector<6x16xf32> to vector<6xf32>
    %283 = vector.shape_cast %282 : vector<6xf32> to vector<6x1xf32>
    %cst_173 = arith.constant 3.200000e+01 : f32
    %284 = vector.broadcast %cst_173 : f32 to vector<6x1xf32>
    %285 = arith.divf %283, %284 : vector<6x1xf32>
    %286 = vector.broadcast %285 : vector<6x1xf32> to vector<6x16xf32>
    %287 = arith.subf %253, %286 : vector<6x16xf32>
    %288 = arith.mulf %287, %287 : vector<6x16xf32>
    %cst_174 = arith.constant dense<0.000000e+00> : vector<6xf32>
    %289 = vector.multi_reduction <add>, %288, %cst_174 [1] : vector<6x16xf32> to vector<6xf32>
    %290 = vector.shape_cast %289 : vector<6xf32> to vector<6x1xf32>
    %291 = vector.broadcast %285 : vector<6x1xf32> to vector<6x16xf32>
    %292 = arith.subf %280, %291 : vector<6x16xf32>
    %293 = arith.mulf %292, %292 : vector<6x16xf32>
    %cst_175 = arith.constant dense<0.000000e+00> : vector<6xf32>
    %294 = vector.multi_reduction <add>, %293, %cst_175 [1] : vector<6x16xf32> to vector<6xf32>
    %295 = vector.shape_cast %294 : vector<6xf32> to vector<6x1xf32>
    %296 = arith.addf %290, %295 : vector<6x1xf32>
    %cst_176 = arith.constant 3.200000e+01 : f32
    %297 = vector.broadcast %cst_176 : f32 to vector<6x1xf32>
    %298 = arith.divf %296, %297 : vector<6x1xf32>
    %cst_177 = arith.constant 9.99999974E-6 : f32
    %299 = vector.broadcast %cst_177 : f32 to vector<6x1xf32>
    %300 = arith.addf %298, %299 : vector<6x1xf32>
    %301 = math.rsqrt %300 : vector<6x1xf32>
    %c0_178 = arith.constant 0 : index
    %c0_179 = arith.constant 0 : index
    %302 = vector.load %arg19[%c0_178, %c0_179] : memref<6x1xf32, #tpu.memory_space<vmem>>, vector<6x1xf32>
    %c0_180 = arith.constant 0 : index
    %c0_181 = arith.constant 0 : index
    %303 = vector.load %arg20[%c0_180, %c0_181] : memref<6x1xf32, #tpu.memory_space<vmem>>, vector<6x1xf32>
    %304 = vector.broadcast %285 : vector<6x1xf32> to vector<6x16xf32>
    %305 = arith.subf %253, %304 : vector<6x16xf32>
    %306 = vector.broadcast %301 : vector<6x1xf32> to vector<6x16xf32>
    %307 = arith.mulf %305, %306 : vector<6x16xf32>
    %308 = vector.broadcast %302 : vector<6x1xf32> to vector<6x16xf32>
    %309 = arith.mulf %307, %308 : vector<6x16xf32>
    %310 = vector.broadcast %303 : vector<6x1xf32> to vector<6x16xf32>
    %311 = arith.addf %309, %310 : vector<6x16xf32>
    %312 = vector.broadcast %285 : vector<6x1xf32> to vector<6x16xf32>
    %313 = arith.subf %280, %312 : vector<6x16xf32>
    %314 = vector.broadcast %301 : vector<6x1xf32> to vector<6x16xf32>
    %315 = arith.mulf %313, %314 : vector<6x16xf32>
    %316 = vector.broadcast %302 : vector<6x1xf32> to vector<6x16xf32>
    %317 = arith.mulf %315, %316 : vector<6x16xf32>
    %318 = vector.broadcast %303 : vector<6x1xf32> to vector<6x16xf32>
    %319 = arith.addf %317, %318 : vector<6x16xf32>
    %c0_182 = arith.constant 0 : index
    %c0_183 = arith.constant 0 : index
    %320 = vector.load %arg10[%c0_182, %c0_183] : memref<4x1xf32, #tpu.memory_space<vmem>>, vector<4x1xf32>
    %c0_184 = arith.constant 0 : index
    %c16_185 = arith.constant 16 : index
    %321 = vector.load %arg24[%c0_184, %c16_185] : memref<6x48xf32, #tpu.memory_space<vmem>>, vector<6x16xf32>
    tpu.vector_store %arg24[%c0_184, %c16_185], %311 {strides = array<i32>} : memref<6x48xf32, #tpu.memory_space<vmem>>, vector<6x16xf32>,
    %cst_186 = arith.constant 0.000000e+00 : f32
    %322 = vector.broadcast %cst_186 : f32 to vector<4x16xf32>
    %c0_187 = arith.constant 0 : index
    %c0_188 = arith.constant 0 : index
    %323 = vector.load %arg24[%c0_187, %c0_188] : memref<6x48xf32, #tpu.memory_space<vmem>>, vector<6x16xf32>
    %c0_189 = arith.constant 0 : index
    %c0_190 = arith.constant 0 : index
    %c0_191 = arith.constant 0 : index
    %324 = vector.load %arg9[%c0_189, %c0_190, %c0_191] : memref<3x4x6xf32, #tpu.memory_space<vmem>>, vector<1x4x6xf32>
    %325 = vector.shape_cast %324 : vector<1x4x6xf32> to vector<4x6xf32>
    %326 = arith.truncf %325 : vector<4x6xf32> to vector<4x6xbf16>
    %327 = arith.truncf %323 : vector<6x16xf32> to vector<6x16xbf16>
    %cst_192 = arith.constant dense<0.000000e+00> : vector<4x16xf32>
    %328 = tpu.matmul %326, %327, %cst_192 {dimension_numbers = #tpu.dot_dimension_numbers<[1], [0], [0], [1], [0, 0, 1, 1], [], []>} : vector<4x6xbf16>, vector<6x16xbf16>, vector<4x16xf32> -> vector<4x16xf32>
    %329 = arith.addf %322, %328 : vector<4x16xf32>
    %c0_193 = arith.constant 0 : index
    %c16_194 = arith.constant 16 : index
    %330 = vector.load %arg24[%c0_193, %c16_194] : memref<6x48xf32, #tpu.memory_space<vmem>>, vector<6x16xf32>
    %c1_195 = arith.constant 1 : index
    %c0_196 = arith.constant 0 : index
    %c0_197 = arith.constant 0 : index
    %331 = vector.load %arg9[%c1_195, %c0_196, %c0_197] : memref<3x4x6xf32, #tpu.memory_space<vmem>>, vector<1x4x6xf32>
    %332 = vector.shape_cast %331 : vector<1x4x6xf32> to vector<4x6xf32>
    %333 = arith.truncf %332 : vector<4x6xf32> to vector<4x6xbf16>
    %334 = arith.truncf %330 : vector<6x16xf32> to vector<6x16xbf16>
    %cst_198 = arith.constant dense<0.000000e+00> : vector<4x16xf32>
    %335 = tpu.matmul %333, %334, %cst_198 {dimension_numbers = #tpu.dot_dimension_numbers<[1], [0], [0], [1], [0, 0, 1, 1], [], []>} : vector<4x6xbf16>, vector<6x16xbf16>, vector<4x16xf32> -> vector<4x16xf32>
    %336 = arith.addf %329, %335 : vector<4x16xf32>
    %c0_199 = arith.constant 0 : index
    %c32 = arith.constant 32 : index
    %337 = vector.load %arg24[%c0_199, %c32] : memref<6x48xf32, #tpu.memory_space<vmem>>, vector<6x16xf32>
    %c2_200 = arith.constant 2 : index
    %c0_201 = arith.constant 0 : index
    %c0_202 = arith.constant 0 : index
    %338 = vector.load %arg9[%c2_200, %c0_201, %c0_202] : memref<3x4x6xf32, #tpu.memory_space<vmem>>, vector<1x4x6xf32>
    %339 = vector.shape_cast %338 : vector<1x4x6xf32> to vector<4x6xf32>
    %340 = arith.truncf %339 : vector<4x6xf32> to vector<4x6xbf16>
    %341 = arith.truncf %337 : vector<6x16xf32> to vector<6x16xbf16>
    %cst_203 = arith.constant dense<0.000000e+00> : vector<4x16xf32>
    %342 = tpu.matmul %340, %341, %cst_203 {dimension_numbers = #tpu.dot_dimension_numbers<[1], [0], [0], [1], [0, 0, 1, 1], [], []>} : vector<4x6xbf16>, vector<6x16xbf16>, vector<4x16xf32> -> vector<4x16xf32>
    %343 = arith.addf %336, %342 : vector<4x16xf32>
    %344 = vector.broadcast %320 : vector<4x1xf32> to vector<4x16xf32>
    %345 = arith.addf %343, %344 : vector<4x16xf32>
    %cst_204 = arith.constant 0.000000e+00 : f32
    %346 = vector.broadcast %cst_204 : f32 to vector<4x16xf32>
    %347 = arith.maximumf %345, %346 : vector<4x16xf32>
    %c0_205 = arith.constant 0 : index
    %c16_206 = arith.constant 16 : index
    %348 = vector.load %arg24[%c0_205, %c16_206] : memref<6x48xf32, #tpu.memory_space<vmem>>, vector<6x16xf32>
    tpu.vector_store %arg24[%c0_205, %c16_206], %319 {strides = array<i32>} : memref<6x48xf32, #tpu.memory_space<vmem>>, vector<6x16xf32>,
    %cst_207 = arith.constant 0.000000e+00 : f32
    %349 = vector.broadcast %cst_207 : f32 to vector<4x16xf32>
    %c0_208 = arith.constant 0 : index
    %c0_209 = arith.constant 0 : index
    %350 = vector.load %arg24[%c0_208, %c0_209] : memref<6x48xf32, #tpu.memory_space<vmem>>, vector<6x16xf32>
    %c0_210 = arith.constant 0 : index
    %c0_211 = arith.constant 0 : index
    %c0_212 = arith.constant 0 : index
    %351 = vector.load %arg9[%c0_210, %c0_211, %c0_212] : memref<3x4x6xf32, #tpu.memory_space<vmem>>, vector<1x4x6xf32>
    %352 = vector.shape_cast %351 : vector<1x4x6xf32> to vector<4x6xf32>
    %353 = arith.truncf %352 : vector<4x6xf32> to vector<4x6xbf16>
    %354 = arith.truncf %350 : vector<6x16xf32> to vector<6x16xbf16>
    %cst_213 = arith.constant dense<0.000000e+00> : vector<4x16xf32>
    %355 = tpu.matmul %353, %354, %cst_213 {dimension_numbers = #tpu.dot_dimension_numbers<[1], [0], [0], [1], [0, 0, 1, 1], [], []>} : vector<4x6xbf16>, vector<6x16xbf16>, vector<4x16xf32> -> vector<4x16xf32>
    %356 = arith.addf %349, %355 : vector<4x16xf32>
    %c0_214 = arith.constant 0 : index
    %c16_215 = arith.constant 16 : index
    %357 = vector.load %arg24[%c0_214, %c16_215] : memref<6x48xf32, #tpu.memory_space<vmem>>, vector<6x16xf32>
    %c1_216 = arith.constant 1 : index
    %c0_217 = arith.constant 0 : index
    %c0_218 = arith.constant 0 : index
    %358 = vector.load %arg9[%c1_216, %c0_217, %c0_218] : memref<3x4x6xf32, #tpu.memory_space<vmem>>, vector<1x4x6xf32>
    %359 = vector.shape_cast %358 : vector<1x4x6xf32> to vector<4x6xf32>
    %360 = arith.truncf %359 : vector<4x6xf32> to vector<4x6xbf16>
    %361 = arith.truncf %357 : vector<6x16xf32> to vector<6x16xbf16>
    %cst_219 = arith.constant dense<0.000000e+00> : vector<4x16xf32>
    %362 = tpu.matmul %360, %361, %cst_219 {dimension_numbers = #tpu.dot_dimension_numbers<[1], [0], [0], [1], [0, 0, 1, 1], [], []>} : vector<4x6xbf16>, vector<6x16xbf16>, vector<4x16xf32> -> vector<4x16xf32>
    %363 = arith.addf %356, %362 : vector<4x16xf32>
    %c0_220 = arith.constant 0 : index
    %c32_221 = arith.constant 32 : index
    %364 = vector.load %arg24[%c0_220, %c32_221] : memref<6x48xf32, #tpu.memory_space<vmem>>, vector<6x16xf32>
    %c2_222 = arith.constant 2 : index
    %c0_223 = arith.constant 0 : index
    %c0_224 = arith.constant 0 : index
    %365 = vector.load %arg9[%c2_222, %c0_223, %c0_224] : memref<3x4x6xf32, #tpu.memory_space<vmem>>, vector<1x4x6xf32>
    %366 = vector.shape_cast %365 : vector<1x4x6xf32> to vector<4x6xf32>
    %367 = arith.truncf %366 : vector<4x6xf32> to vector<4x6xbf16>
    %368 = arith.truncf %364 : vector<6x16xf32> to vector<6x16xbf16>
    %cst_225 = arith.constant dense<0.000000e+00> : vector<4x16xf32>
    %369 = tpu.matmul %367, %368, %cst_225 {dimension_numbers = #tpu.dot_dimension_numbers<[1], [0], [0], [1], [0, 0, 1, 1], [], []>} : vector<4x6xbf16>, vector<6x16xbf16>, vector<4x16xf32> -> vector<4x16xf32>
    %370 = arith.addf %363, %369 : vector<4x16xf32>
    %371 = vector.broadcast %320 : vector<4x1xf32> to vector<4x16xf32>
    %372 = arith.addf %370, %371 : vector<4x16xf32>
    %cst_226 = arith.constant 0.000000e+00 : f32
    %373 = vector.broadcast %cst_226 : f32 to vector<4x16xf32>
    %374 = arith.maximumf %372, %373 : vector<4x16xf32>
    %375 = arith.addf %347, %374 : vector<4x16xf32>
    %cst_227 = arith.constant dense<0.000000e+00> : vector<4xf32>
    %376 = vector.multi_reduction <add>, %375, %cst_227 [1] : vector<4x16xf32> to vector<4xf32>
    %377 = vector.shape_cast %376 : vector<4xf32> to vector<4x1xf32>
    %cst_228 = arith.constant 3.200000e+01 : f32
    %378 = vector.broadcast %cst_228 : f32 to vector<4x1xf32>
    %379 = arith.divf %377, %378 : vector<4x1xf32>
    %380 = vector.broadcast %379 : vector<4x1xf32> to vector<4x16xf32>
    %381 = arith.subf %347, %380 : vector<4x16xf32>
    %382 = arith.mulf %381, %381 : vector<4x16xf32>
    %cst_229 = arith.constant dense<0.000000e+00> : vector<4xf32>
    %383 = vector.multi_reduction <add>, %382, %cst_229 [1] : vector<4x16xf32> to vector<4xf32>
    %384 = vector.shape_cast %383 : vector<4xf32> to vector<4x1xf32>
    %385 = vector.broadcast %379 : vector<4x1xf32> to vector<4x16xf32>
    %386 = arith.subf %374, %385 : vector<4x16xf32>
    %387 = arith.mulf %386, %386 : vector<4x16xf32>
    %cst_230 = arith.constant dense<0.000000e+00> : vector<4xf32>
    %388 = vector.multi_reduction <add>, %387, %cst_230 [1] : vector<4x16xf32> to vector<4xf32>
    %389 = vector.shape_cast %388 : vector<4xf32> to vector<4x1xf32>
    %390 = arith.addf %384, %389 : vector<4x1xf32>
    %cst_231 = arith.constant 3.200000e+01 : f32
    %391 = vector.broadcast %cst_231 : f32 to vector<4x1xf32>
    %392 = arith.divf %390, %391 : vector<4x1xf32>
    %cst_232 = arith.constant 9.99999974E-6 : f32
    %393 = vector.broadcast %cst_232 : f32 to vector<4x1xf32>
    %394 = arith.addf %392, %393 : vector<4x1xf32>
    %395 = math.rsqrt %394 : vector<4x1xf32>
    %c0_233 = arith.constant 0 : index
    %c0_234 = arith.constant 0 : index
    %396 = vector.load %arg21[%c0_233, %c0_234] : memref<4x1xf32, #tpu.memory_space<vmem>>, vector<4x1xf32>
    %c0_235 = arith.constant 0 : index
    %c0_236 = arith.constant 0 : index
    %397 = vector.load %arg22[%c0_235, %c0_236] : memref<4x1xf32, #tpu.memory_space<vmem>>, vector<4x1xf32>
    %398 = vector.broadcast %379 : vector<4x1xf32> to vector<4x16xf32>
    %399 = arith.subf %347, %398 : vector<4x16xf32>
    %400 = vector.broadcast %395 : vector<4x1xf32> to vector<4x16xf32>
    %401 = arith.mulf %399, %400 : vector<4x16xf32>
    %402 = vector.broadcast %396 : vector<4x1xf32> to vector<4x16xf32>
    %403 = arith.mulf %401, %402 : vector<4x16xf32>
    %404 = vector.broadcast %397 : vector<4x1xf32> to vector<4x16xf32>
    %405 = arith.addf %403, %404 : vector<4x16xf32>
    %406 = vector.broadcast %379 : vector<4x1xf32> to vector<4x16xf32>
    %407 = arith.subf %374, %406 : vector<4x16xf32>
    %408 = vector.broadcast %395 : vector<4x1xf32> to vector<4x16xf32>
    %409 = arith.mulf %407, %408 : vector<4x16xf32>
    %410 = vector.broadcast %396 : vector<4x1xf32> to vector<4x16xf32>
    %411 = arith.mulf %409, %410 : vector<4x16xf32>
    %412 = vector.broadcast %397 : vector<4x1xf32> to vector<4x16xf32>
    %413 = arith.addf %411, %412 : vector<4x16xf32>
    %c0_237 = arith.constant 0 : index
    %c0_238 = arith.constant 0 : index
    %414 = vector.load %arg14[%c0_237, %c0_238] : memref<4x1xf32, #tpu.memory_space<vmem>>, vector<4x1xf32>
    %c0_239 = arith.constant 0 : index
    %c0_240 = arith.constant 0 : index
    %c0_241 = arith.constant 0 : index
    %415 = vector.load %arg13[%c0_239, %c0_240, %c0_241] : memref<1x4x6xf32, #tpu.memory_space<vmem>>, vector<1x4x6xf32>
    %416 = vector.shape_cast %415 : vector<1x4x6xf32> to vector<4x6xf32>
    %417 = arith.truncf %416 : vector<4x6xf32> to vector<4x6xbf16>
    %418 = arith.truncf %224 : vector<6x16xf32> to vector<6x16xbf16>
    %cst_242 = arith.constant dense<0.000000e+00> : vector<4x16xf32>
    %419 = tpu.matmul %417, %418, %cst_242 {dimension_numbers = #tpu.dot_dimension_numbers<[1], [0], [0], [1], [0, 0, 1, 1], [], []>} : vector<4x6xbf16>, vector<6x16xbf16>, vector<4x16xf32> -> vector<4x16xf32>
    %420 = vector.broadcast %414 : vector<4x1xf32> to vector<4x16xf32>
    %421 = arith.addf %419, %420 : vector<4x16xf32>
    %c0_243 = arith.constant 0 : index
    %c0_244 = arith.constant 0 : index
    %c0_245 = arith.constant 0 : index
    %422 = vector.load %arg13[%c0_243, %c0_244, %c0_245] : memref<1x4x6xf32, #tpu.memory_space<vmem>>, vector<1x4x6xf32>
    %423 = vector.shape_cast %422 : vector<1x4x6xf32> to vector<4x6xf32>
    %424 = arith.truncf %423 : vector<4x6xf32> to vector<4x6xbf16>
    %425 = arith.truncf %225 : vector<6x16xf32> to vector<6x16xbf16>
    %cst_246 = arith.constant dense<0.000000e+00> : vector<4x16xf32>
    %426 = tpu.matmul %424, %425, %cst_246 {dimension_numbers = #tpu.dot_dimension_numbers<[1], [0], [0], [1], [0, 0, 1, 1], [], []>} : vector<4x6xbf16>, vector<6x16xbf16>, vector<4x16xf32> -> vector<4x16xf32>
    %427 = vector.broadcast %414 : vector<4x1xf32> to vector<4x16xf32>
    %428 = arith.addf %426, %427 : vector<4x16xf32>
    %429 = arith.addf %405, %421 : vector<4x16xf32>
    %430 = vector.broadcast %arg0 : i32 to vector<4x16xi32>
    %431 = arith.cmpi eq, %2, %430 : vector<4x16xi32>
    %cst_247 = arith.constant 0.000000e+00 : f32
    %432 = vector.broadcast %cst_247 : f32 to vector<4x16xf32>
    %433 = arith.select %431, %429, %432 : vector<4x16xi1>, vector<4x16xf32>
    %cst_248 = arith.constant dense<0.000000e+00> : vector<16xf32>
    %434 = vector.multi_reduction <add>, %433, %cst_248 [0] : vector<4x16xf32> to vector<16xf32>
    %435 = vector.shape_cast %434 : vector<16xf32> to vector<1x16xf32>
    %c0_249 = arith.constant 0 : index
    %c0_250 = arith.constant 0 : index
    %c0_251 = arith.constant 0 : index
    %436 = vector.load %arg23[%c0_249, %c0_250, %c0_251] : memref<1x2x16xf32, #tpu.memory_space<vmem>>, vector<1x1x16xf32>
    %437 = vector.shape_cast %436 : vector<1x1x16xf32> to vector<1x16xf32>
    %438 = vector.shape_cast %435 : vector<1x16xf32> to vector<1x1x16xf32>
    tpu.vector_store %arg23[%c0_249, %c0_250, %c0_251], %438 {strides = array<i32>} : memref<1x2x16xf32, #tpu.memory_space<vmem>>, vector<1x1x16xf32>,
    %439 = arith.addf %413, %428 : vector<4x16xf32>
    %440 = vector.broadcast %arg0 : i32 to vector<4x16xi32>
    %441 = arith.cmpi eq, %2, %440 : vector<4x16xi32>
    %cst_252 = arith.constant 0.000000e+00 : f32
    %442 = vector.broadcast %cst_252 : f32 to vector<4x16xf32>
    %443 = arith.select %441, %439, %442 : vector<4x16xi1>, vector<4x16xf32>
    %cst_253 = arith.constant dense<0.000000e+00> : vector<16xf32>
    %444 = vector.multi_reduction <add>, %443, %cst_253 [0] : vector<4x16xf32> to vector<16xf32>
    %445 = vector.shape_cast %444 : vector<16xf32> to vector<1x16xf32>
    %c0_254 = arith.constant 0 : index
    %c1_255 = arith.constant 1 : index
    %c0_256 = arith.constant 0 : index
    %446 = vector.load %arg23[%c0_254, %c1_255, %c0_256] : memref<1x2x16xf32, #tpu.memory_space<vmem>>, vector<1x1x16xf32>
    %447 = vector.shape_cast %446 : vector<1x1x16xf32> to vector<1x16xf32>
    %448 = vector.shape_cast %445 : vector<1x16xf32> to vector<1x1x16xf32>
    tpu.vector_store %arg23[%c0_254, %c1_255, %c0_256], %448 {strides = array<i32>} : memref<1x2x16xf32, #tpu.memory_space<vmem>>, vector<1x1x16xf32>,
    return
  }
  func.func @transform_0(%arg0: i32) -> (i32, i32, i32) {
    %c0_i32 = arith.constant 0 : i32
    %c0_i32_0 = arith.constant 0 : i32
    %c0_i32_1 = arith.constant 0 : i32
    return %arg0, %c0_i32, %c0_i32_0 : i32, i32, i32
  }
  func.func @transform_1(%arg0: i32) -> (i32, i32, i32) {
    %c0_i32 = arith.constant 0 : i32
    %c0_i32_0 = arith.constant 0 : i32
    %c0_i32_1 = arith.constant 0 : i32
    %c0_i32_2 = arith.constant 0 : i32
    return %c0_i32, %c0_i32_0, %c0_i32_1 : i32, i32, i32
  }
  func.func @transform_2(%arg0: i32) -> (i32, i32, i32) {
    %c0_i32 = arith.constant 0 : i32
    %c0_i32_0 = arith.constant 0 : i32
    %c0_i32_1 = arith.constant 0 : i32
    %c0_i32_2 = arith.constant 0 : i32
    return %c0_i32, %c0_i32_0, %c0_i32_1 : i32, i32, i32
  }
  func.func @transform_3(%arg0: i32) -> (i32, i32) {
    %c0_i32 = arith.constant 0 : i32
    %c0_i32_0 = arith.constant 0 : i32
    %c0_i32_1 = arith.constant 0 : i32
    return %c0_i32, %c0_i32_0 : i32, i32
  }
  func.func @transform_4(%arg0: i32) -> (i32, i32, i32) {
    %c0_i32 = arith.constant 0 : i32
    %c0_i32_0 = arith.constant 0 : i32
    %c0_i32_1 = arith.constant 0 : i32
    %c0_i32_2 = arith.constant 0 : i32
    return %c0_i32, %c0_i32_0, %c0_i32_1 : i32, i32, i32
  }
  func.func @transform_5(%arg0: i32) -> (i32, i32) {
    %c0_i32 = arith.constant 0 : i32
    %c0_i32_0 = arith.constant 0 : i32
    %c0_i32_1 = arith.constant 0 : i32
    return %c0_i32, %c0_i32_0 : i32, i32
  }
  func.func @transform_6(%arg0: i32) -> (i32, i32, i32) {
    %c0_i32 = arith.constant 0 : i32
    %c0_i32_0 = arith.constant 0 : i32
    %c0_i32_1 = arith.constant 0 : i32
    %c0_i32_2 = arith.constant 0 : i32
    return %c0_i32, %c0_i32_0, %c0_i32_1 : i32, i32, i32
  }
  func.func @transform_7(%arg0: i32) -> (i32, i32) {
    %c0_i32 = arith.constant 0 : i32
    %c0_i32_0 = arith.constant 0 : i32
    %c0_i32_1 = arith.constant 0 : i32
    return %c0_i32, %c0_i32_0 : i32, i32
  }
  func.func @transform_8(%arg0: i32) -> (i32, i32, i32) {
    %c0_i32 = arith.constant 0 : i32
    %c0_i32_0 = arith.constant 0 : i32
    %c0_i32_1 = arith.constant 0 : i32
    %c0_i32_2 = arith.constant 0 : i32
    return %c0_i32, %c0_i32_0, %c0_i32_1 : i32, i32, i32
  }
  func.func @transform_9(%arg0: i32) -> (i32, i32) {
    %c0_i32 = arith.constant 0 : i32
    %c0_i32_0 = arith.constant 0 : i32
    %c0_i32_1 = arith.constant 0 : i32
    return %c0_i32, %c0_i32_0 : i32, i32
  }
  func.func @transform_10(%arg0: i32) -> (i32, i32, i32) {
    %c0_i32 = arith.constant 0 : i32
    %c0_i32_0 = arith.constant 0 : i32
    %c0_i32_1 = arith.constant 0 : i32
    %c0_i32_2 = arith.constant 0 : i32
    return %c0_i32, %c0_i32_0, %c0_i32_1 : i32, i32, i32
  }
  func.func @transform_11(%arg0: i32) -> (i32, i32) {
    %c0_i32 = arith.constant 0 : i32
    %c0_i32_0 = arith.constant 0 : i32
    %c0_i32_1 = arith.constant 0 : i32
    return %c0_i32, %c0_i32_0 : i32, i32
  }
  func.func @transform_12(%arg0: i32) -> (i32, i32, i32) {
    %c0_i32 = arith.constant 0 : i32
    %c0_i32_0 = arith.constant 0 : i32
    %c0_i32_1 = arith.constant 0 : i32
    %c0_i32_2 = arith.constant 0 : i32
    return %c0_i32, %c0_i32_0, %c0_i32_1 : i32, i32, i32
  }
  func.func @transform_13(%arg0: i32) -> (i32, i32) {
    %c0_i32 = arith.constant 0 : i32
    %c0_i32_0 = arith.constant 0 : i32
    %c0_i32_1 = arith.constant 0 : i32
    return %c0_i32, %c0_i32_0 : i32, i32
  }
  func.func @transform_14(%arg0: i32) -> (i32, i32) {
    %c0_i32 = arith.constant 0 : i32
    %c0_i32_0 = arith.constant 0 : i32
    %c0_i32_1 = arith.constant 0 : i32
    return %c0_i32, %c0_i32_0 : i32, i32
  }
  func.func @transform_15(%arg0: i32) -> (i32, i32) {
    %c0_i32 = arith.constant 0 : i32
    %c0_i32_0 = arith.constant 0 : i32
    %c0_i32_1 = arith.constant 0 : i32
    return %c0_i32, %c0_i32_0 : i32, i32
  }
  func.func @transform_16(%arg0: i32) -> (i32, i32) {
    %c0_i32 = arith.constant 0 : i32
    %c0_i32_0 = arith.constant 0 : i32
    %c0_i32_1 = arith.constant 0 : i32
    return %c0_i32, %c0_i32_0 : i32, i32
  }
  func.func @transform_17(%arg0: i32) -> (i32, i32) {
    %c0_i32 = arith.constant 0 : i32
    %c0_i32_0 = arith.constant 0 : i32
    %c0_i32_1 = arith.constant 0 : i32
    return %c0_i32, %c0_i32_0 : i32, i32
  }
  func.func @transform_18(%arg0: i32) -> (i32, i32) {
    %c0_i32 = arith.constant 0 : i32
    %c0_i32_0 = arith.constant 0 : i32
    %c0_i32_1 = arith.constant 0 : i32
    return %c0_i32, %c0_i32_0 : i32, i32
  }
  func.func @transform_19(%arg0: i32) -> (i32, i32) {
    %c0_i32 = arith.constant 0 : i32
    %c0_i32_0 = arith.constant 0 : i32
    %c0_i32_1 = arith.constant 0 : i32
    return %c0_i32, %c0_i32_0 : i32, i32
  }
  func.func @transform_20(%arg0: i32) -> (i32, i32) {
    %c0_i32 = arith.constant 0 : i32
    %c0_i32_0 = arith.constant 0 : i32
    %c0_i32_1 = arith.constant 0 : i32
    return %c0_i32, %c0_i32_0 : i32, i32
  }
  func.func @transform_21(%arg0: i32) -> (i32, i32) {
    %c0_i32 = arith.constant 0 : i32
    %c0_i32_0 = arith.constant 0 : i32
    %c0_i32_1 = arith.constant 0 : i32
    return %c0_i32, %c0_i32_0 : i32, i32
  }
  func.func @transform_22(%arg0: i32) -> (i32, i32, i32) {
    %c0_i32 = arith.constant 0 : i32
    %c0_i32_0 = arith.constant 0 : i32
    %c0_i32_1 = arith.constant 0 : i32
    return %arg0, %c0_i32, %c0_i32_0 : i32, i32, i32
  }
}

</mosaic_0001>

<llo_original>
// kernel: fmce_forward.1
$region0: #{fmce_forward.1}
  #allocation0 [shape = 'u32[]', space=smem, size = 0x4, offset = 0x4, fixed_abs, tag = 'smem constant byte address 0x4 - core index']
  #allocation1 [shape = 'u32[144,128]{1,0:T(1,128)}', space=vmem, size = 0x12000, scoped, tag = 'internal scratch']
  #allocation2 [shape = 'f32[6,48]{1,0:T(8,128)}', space=vmem, size = 0x1000, scoped, tag = 'scratch operand']
  %s0 = inlined_call_operand.vmem [shape: f32[4,2,16], index: 0, kind: input, shape index: {}]
  %s1 = inlined_call_operand.vmem [shape: f32[2,4,16], index: 1, kind: input, shape index: {}]
  %s2 = inlined_call_operand.vmem [shape: f32[3,6,4], index: 2, kind: input, shape index: {}]
  %s3 = inlined_call_operand.vmem [shape: f32[6,1], index: 3, kind: input, shape index: {}]
  %s4 = inlined_call_operand.vmem [shape: f32[3,6,6], index: 4, kind: input, shape index: {}]
  %s5 = inlined_call_operand.vmem [shape: f32[6,1], index: 5, kind: input, shape index: {}]
  %s6 = inlined_call_operand.vmem [shape: f32[3,6,6], index: 6, kind: input, shape index: {}]
  %s7 = inlined_call_operand.vmem [shape: f32[6,1], index: 7, kind: input, shape index: {}]
  %s8 = inlined_call_operand.vmem [shape: f32[3,4,6], index: 8, kind: input, shape index: {}]
  %s9 = inlined_call_operand.vmem [shape: f32[4,1], index: 9, kind: input, shape index: {}]
  %s10 = inlined_call_operand.vmem [shape: f32[1,6,4], index: 10, kind: input, shape index: {}]
  %s11 = inlined_call_operand.vmem [shape: f32[6,1], index: 11, kind: input, shape index: {}]
  %s12 = inlined_call_operand.vmem [shape: f32[1,4,6], index: 12, kind: input, shape index: {}]
  %s13 = inlined_call_operand.vmem [shape: f32[4,1], index: 13, kind: input, shape index: {}]
  %s14 = inlined_call_operand.vmem [shape: f32[6,1], index: 14, kind: input, shape index: {}]
  %s15 = inlined_call_operand.vmem [shape: f32[6,1], index: 15, kind: input, shape index: {}]
  %s16 = inlined_call_operand.vmem [shape: f32[6,1], index: 16, kind: input, shape index: {}]
  %s17 = inlined_call_operand.vmem [shape: f32[6,1], index: 17, kind: input, shape index: {}]
  %s18 = inlined_call_operand.vmem [shape: f32[6,1], index: 18, kind: input, shape index: {}]
  %s19 = inlined_call_operand.vmem [shape: f32[6,1], index: 19, kind: input, shape index: {}]
  %s20 = inlined_call_operand.vmem [shape: f32[4,1], index: 20, kind: input, shape index: {}]
  %s21 = inlined_call_operand.vmem [shape: f32[4,1], index: 21, kind: input, shape index: {}]
  %s22 = inlined_call_operand.vmem [shape: f32[4,2,16], index: 22, kind: output, shape index: {}]
  %s23 = sld [smem:[#allocation0]]
  $region121: #{fmce_forward.1} parent=0
    _
  %s25 = ssub.s32 1, %s23
  %s26 = scalar_select 0, %s25, %s23
  loop: start=0, step=1, limit=6
  $region2: #{fmce_forward.1} parent=0 // loop_pre_header
    _
  $region3: #{fmce_forward.1} parent=0 // loop_header
    %s28 = sphi 0, %s32
    %p29 = scmp.ge.s32.totalorder %s28, 6
    %s38 = sphi 0, %s40
    %s41 = sphi 0, %s38
    %s42 = sphi 0, %s41
    %s58 = sphi 0, %s42
    %s62 = sphi 0, %s62
    %s64 = sphi 0, %s62
    %s65 = sphi 0, %s64
    %s79 = sphi 0, %s65
    %s83 = sphi 0, %s83
    %s85 = sphi 0, %s83
    %s86 = sphi 0, %s85
    %s100 = sphi 0, %s86
    %s104 = sphi 0, %s104
    %s106 = sphi 0, %s104
    %s107 = sphi 0, %s106
    %s121 = sphi 0, %s107
    %s125 = sphi 0, %s125
    %s127 = sphi 0, %s125
    %s128 = sphi 0, %s127
    %s142 = sphi 0, %s128
    %s146 = sphi 0, %s146
    %s148 = sphi 0, %s146
    %s149 = sphi 0, %s148
    %s163 = sphi 0, %s149
    %s167 = sphi 0, %s167
    %s169 = sphi 0, %s167
    %s170 = sphi 0, %s169
    %s184 = sphi 0, %s170
    %s188 = sphi 0, %s188
    %s190 = sphi 0, %s188
    %s191 = sphi 0, %s190
    %s205 = sphi 0, %s191
    %s209 = sphi 0, %s209
    %s211 = sphi 0, %s209
    %s212 = sphi 0, %s211
    %s226 = sphi 0, %s212
    %s230 = sphi 0, %s230
    %s232 = sphi 0, %s230
    %s233 = sphi 0, %s232
    %s247 = sphi 0, %s233
    %s251 = sphi 0, %s251
    %s253 = sphi 0, %s251
    %s254 = sphi 0, %s253
    %s268 = sphi 0, %s254
    %s272 = sphi 0, %s272
    %s274 = sphi 0, %s272
    %s275 = sphi 0, %s274
    %s289 = sphi 0, %s275
    %s293 = sphi 0, %s293
    %s295 = sphi 0, %s293
    %s296 = sphi 0, %s295
    %s310 = sphi 0, %s296
    %s314 = sphi 0, %s314
    %s316 = sphi 0, %s314
    %s317 = sphi 0, %s316
    %s331 = sphi 0, %s317
    %s335 = sphi 0, %s335
    %s337 = sphi 0, %s335
    %s338 = sphi 0, %s337
    %s352 = sphi 0, %s338
    %s356 = sphi 0, %s356
    %s358 = sphi 0, %s356
    %s359 = sphi 0, %s358
    %s373 = sphi 0, %s359
    %s377 = sphi 0, %s377
    %s379 = sphi 0, %s377
    %s380 = sphi 0, %s379
    %s394 = sphi 0, %s380
    %s398 = sphi 0, %s398
    %s400 = sphi 0, %s398
    %s401 = sphi 0, %s400
    %s415 = sphi 0, %s401
    %s419 = sphi 0, %s419
    %s421 = sphi 0, %s419
    %s422 = sphi 0, %s421
    %s436 = sphi 0, %s422
    %s440 = sphi 0, %s440
    %s442 = sphi 0, %s440
    %s443 = sphi 0, %s442
    %s457 = sphi 0, %s443
    %s461 = sphi 0, %s461
    %s463 = sphi 0, %s461
    %s464 = sphi 0, %s463
    %s478 = sphi 0, %s464
    %s482 = sphi 0, %s482
    %s484 = sphi 0, %s482
    %s485 = sphi 0, %s484
    %s499 = sphi 0, %s485
    %s505 = sphi 0, %s507
    %s508 = sphi 0, %s505
    %s509 = sphi 0, %s508
    %s525 = sphi 0, %s509
  $region4: #{fmce_forward.1} parent=0 // loop_header_branch
    %31 = sbr.rel (%p29) target = $region8
  $region5: #{fmce_forward.1} parent=0 // loop_body
    %s33 = ssub.s32 %s28, 1
    %s34 = ssub.s32 %s28, 2
    %s35 = sadd.s32 %s28, 1
    %s36 = ssub.s32 %s28, %s35
    %p37 = scmp.eq.s32.totalorder %s36, 0
    %s39 = sadd.s32 %s38, 1
    %s40 = scalar_select %p37, %s38, %s39
    %p43 = pneg %p37
    %p44 = scmp.eq.s32.totalorder %s28, 3
    %p45 = por %p43, %p44
    %p46 = scmp.ne.s32.totalorder %s38, %s41
    %p47 = scmp.eq.s32.totalorder %s28, 0
    %p48 = por %p46, %p47
    %p49 = scmp.ne.s32.totalorder %s38, %s41
    %p50 = scmp.eq.s32.totalorder %s33, 3
    %p51 = por %p49, %p50
    %p52 = scmp.ne.s32.totalorder %s41, %s42
    %p53 = scmp.eq.s32.totalorder %s33, 0
    %p54 = por %p52, %p53
    %p55 = scmp.ne.s32.totalorder %s41, %s42
    %p56 = scmp.eq.s32.totalorder %s34, 3
    %p57 = por %p55, %p56
    %p59 = scmp.ne.s32.totalorder %s42, %s58
    %p60 = scmp.eq.s32.totalorder %s34, 0
    %p61 = por %p59, %p60
    %s63 = sadd.s32 %s62, 1
    %p66 = scmp.eq.s32.totalorder %s28, 3
    %p67 = scmp.ne.s32.totalorder %s62, %s64
    %p68 = scmp.eq.s32.totalorder %s28, 0
    %p69 = por %p67, %p68
    %p70 = scmp.ne.s32.totalorder %s62, %s64
    %p71 = scmp.eq.s32.totalorder %s33, 3
    %p72 = por %p70, %p71
    %p73 = scmp.ne.s32.totalorder %s64, %s65
    %p74 = scmp.eq.s32.totalorder %s33, 0
    %p75 = por %p73, %p74
    %p76 = scmp.ne.s32.totalorder %s64, %s65
    %p77 = scmp.eq.s32.totalorder %s34, 3
    %p78 = por %p76, %p77
    %p80 = scmp.ne.s32.totalorder %s65, %s79
    %p81 = scmp.eq.s32.totalorder %s34, 0
    %p82 = por %p80, %p81
    %s84 = sadd.s32 %s83, 1
    %p87 = scmp.eq.s32.totalorder %s28, 3
    %p88 = scmp.ne.s32.totalorder %s83, %s85
    %p89 = scmp.eq.s32.totalorder %s28, 0
    %p90 = por %p88, %p89
    %p91 = scmp.ne.s32.totalorder %s83, %s85
    %p92 = scmp.eq.s32.totalorder %s33, 3
    %p93 = por %p91, %p92
    %p94 = scmp.ne.s32.totalorder %s85, %s86
    %p95 = scmp.eq.s32.totalorder %s33, 0
    %p96 = por %p94, %p95
    %p97 = scmp.ne.s32.totalorder %s85, %s86
    %p98 = scmp.eq.s32.totalorder %s34, 3
    %p99 = por %p97, %p98
    %p101 = scmp.ne.s32.totalorder %s86, %s100
    %p102 = scmp.eq.s32.totalorder %s34, 0
    %p103 = por %p101, %p102
    %s105 = sadd.s32 %s104, 1
    %p108 = scmp.eq.s32.totalorder %s28, 3
    %p109 = scmp.ne.s32.totalorder %s104, %s106
    %p110 = scmp.eq.s32.totalorder %s28, 0
    %p111 = por %p109, %p110
    %p112 = scmp.ne.s32.totalorder %s104, %s106
    %p113 = scmp.eq.s32.totalorder %s33, 3
    %p114 = por %p112, %p113
    %p115 = scmp.ne.s32.totalorder %s106, %s107
    %p116 = scmp.eq.s32.totalorder %s33, 0
    %p117 = por %p115, %p116
    %p118 = scmp.ne.s32.totalorder %s106, %s107
    %p119 = scmp.eq.s32.totalorder %s34, 3
    %p120 = por %p118, %p119
    %p122 = scmp.ne.s32.totalorder %s107, %s121
    %p123 = scmp.eq.s32.totalorder %s34, 0
    %p124 = por %p122, %p123
    %s126 = sadd.s32 %s125, 1
    %p129 = scmp.eq.s32.totalorder %s28, 3
    %p130 = scmp.ne.s32.totalorder %s125, %s127
    %p131 = scmp.eq.s32.totalorder %s28, 0
    %p132 = por %p130, %p131
    %p133 = scmp.ne.s32.totalorder %s125, %s127
    %p134 = scmp.eq.s32.totalorder %s33, 3
    %p135 = por %p133, %p134
    %p136 = scmp.ne.s32.totalorder %s127, %s128
    %p137 = scmp.eq.s32.totalorder %s33, 0
    %p138 = por %p136, %p137
    %p139 = scmp.ne.s32.totalorder %s127, %s128
    %p140 = scmp.eq.s32.totalorder %s34, 3
    %p141 = por %p139, %p140
    %p143 = scmp.ne.s32.totalorder %s128, %s142
    %p144 = scmp.eq.s32.totalorder %s34, 0
    %p145 = por %p143, %p144
    %s147 = sadd.s32 %s146, 1
    %p150 = scmp.eq.s32.totalorder %s28, 3
    %p151 = scmp.ne.s32.totalorder %s146, %s148
    %p152 = scmp.eq.s32.totalorder %s28, 0
    %p153 = por %p151, %p152
    %p154 = scmp.ne.s32.totalorder %s146, %s148
    %p155 = scmp.eq.s32.totalorder %s33, 3
    %p156 = por %p154, %p155
    %p157 = scmp.ne.s32.totalorder %s148, %s149
    %p158 = scmp.eq.s32.totalorder %s33, 0
    %p159 = por %p157, %p158
    %p160 = scmp.ne.s32.totalorder %s148, %s149
    %p161 = scmp.eq.s32.totalorder %s34, 3
    %p162 = por %p160, %p161
    %p164 = scmp.ne.s32.totalorder %s149, %s163
    %p165 = scmp.eq.s32.totalorder %s34, 0
    %p166 = por %p164, %p165
    %s168 = sadd.s32 %s167, 1
    %p171 = scmp.eq.s32.totalorder %s28, 3
    %p172 = scmp.ne.s32.totalorder %s167, %s169
    %p173 = scmp.eq.s32.totalorder %s28, 0
    %p174 = por %p172, %p173
    %p175 = scmp.ne.s32.totalorder %s167, %s169
    %p176 = scmp.eq.s32.totalorder %s33, 3
    %p177 = por %p175, %p176
    %p178 = scmp.ne.s32.totalorder %s169, %s170
    %p179 = scmp.eq.s32.totalorder %s33, 0
    %p180 = por %p178, %p179
    %p181 = scmp.ne.s32.totalorder %s169, %s170
    %p182 = scmp.eq.s32.totalorder %s34, 3
    %p183 = por %p181, %p182
    %p185 = scmp.ne.s32.totalorder %s170, %s184
    %p186 = scmp.eq.s32.totalorder %s34, 0
    %p187 = por %p185, %p186
    %s189 = sadd.s32 %s188, 1
    %p192 = scmp.eq.s32.totalorder %s28, 3
    %p193 = scmp.ne.s32.totalorder %s188, %s190
    %p194 = scmp.eq.s32.totalorder %s28, 0
    %p195 = por %p193, %p194
    %p196 = scmp.ne.s32.totalorder %s188, %s190
    %p197 = scmp.eq.s32.totalorder %s33, 3
    %p198 = por %p196, %p197
    %p199 = scmp.ne.s32.totalorder %s190, %s191
    %p200 = scmp.eq.s32.totalorder %s33, 0
    %p201 = por %p199, %p200
    %p202 = scmp.ne.s32.totalorder %s190, %s191
    %p203 = scmp.eq.s32.totalorder %s34, 3
    %p204 = por %p202, %p203
    %p206 = scmp.ne.s32.totalorder %s191, %s205
    %p207 = scmp.eq.s32.totalorder %s34, 0
    %p208 = por %p206, %p207
    %s210 = sadd.s32 %s209, 1
    %p213 = scmp.eq.s32.totalorder %s28, 3
    %p214 = scmp.ne.s32.totalorder %s209, %s211
    %p215 = scmp.eq.s32.totalorder %s28, 0
    %p216 = por %p214, %p215
    %p217 = scmp.ne.s32.totalorder %s209, %s211
    %p218 = scmp.eq.s32.totalorder %s33, 3
    %p219 = por %p217, %p218
    %p220 = scmp.ne.s32.totalorder %s211, %s212
    %p221 = scmp.eq.s32.totalorder %s33, 0
    %p222 = por %p220, %p221
    %p223 = scmp.ne.s32.totalorder %s211, %s212
    %p224 = scmp.eq.s32.totalorder %s34, 3
    %p225 = por %p223, %p224
    %p227 = scmp.ne.s32.totalorder %s212, %s226
    %p228 = scmp.eq.s32.totalorder %s34, 0
    %p229 = por %p227, %p228
    %s231 = sadd.s32 %s230, 1
    %p234 = scmp.eq.s32.totalorder %s28, 3
    %p235 = scmp.ne.s32.totalorder %s230, %s232
    %p236 = scmp.eq.s32.totalorder %s28, 0
    %p237 = por %p235, %p236
    %p238 = scmp.ne.s32.totalorder %s230, %s232
    %p239 = scmp.eq.s32.totalorder %s33, 3
    %p240 = por %p238, %p239
    %p241 = scmp.ne.s32.totalorder %s232, %s233
    %p242 = scmp.eq.s32.totalorder %s33, 0
    %p243 = por %p241, %p242
    %p244 = scmp.ne.s32.totalorder %s232, %s233
    %p245 = scmp.eq.s32.totalorder %s34, 3
    %p246 = por %p244, %p245
    %p248 = scmp.ne.s32.totalorder %s233, %s247
    %p249 = scmp.eq.s32.totalorder %s34, 0
    %p250 = por %p248, %p249
    %s252 = sadd.s32 %s251, 1
    %p255 = scmp.eq.s32.totalorder %s28, 3
    %p256 = scmp.ne.s32.totalorder %s251, %s253
    %p257 = scmp.eq.s32.totalorder %s28, 0
    %p258 = por %p256, %p257
    %p259 = scmp.ne.s32.totalorder %s251, %s253
    %p260 = scmp.eq.s32.totalorder %s33, 3
    %p261 = por %p259, %p260
    %p262 = scmp.ne.s32.totalorder %s253, %s254
    %p263 = scmp.eq.s32.totalorder %s33, 0
    %p264 = por %p262, %p263
    %p265 = scmp.ne.s32.totalorder %s253, %s254
    %p266 = scmp.eq.s32.totalorder %s34, 3
    %p267 = por %p265, %p266
    %p269 = scmp.ne.s32.totalorder %s254, %s268
    %p270 = scmp.eq.s32.totalorder %s34, 0
    %p271 = por %p269, %p270
    %s273 = sadd.s32 %s272, 1
    %p276 = scmp.eq.s32.totalorder %s28, 3
    %p277 = scmp.ne.s32.totalorder %s272, %s274
    %p278 = scmp.eq.s32.totalorder %s28, 0
    %p279 = por %p277, %p278
    %p280 = scmp.ne.s32.totalorder %s272, %s274
    %p281 = scmp.eq.s32.totalorder %s33, 3
    %p282 = por %p280, %p281
    %p283 = scmp.ne.s32.totalorder %s274, %s275
    %p284 = scmp.eq.s32.totalorder %s33, 0
    %p285 = por %p283, %p284
    %p286 = scmp.ne.s32.totalorder %s274, %s275
    %p287 = scmp.eq.s32.totalorder %s34, 3
    %p288 = por %p286, %p287
    %p290 = scmp.ne.s32.totalorder %s275, %s289
    %p291 = scmp.eq.s32.totalorder %s34, 0
    %p292 = por %p290, %p291
    %s294 = sadd.s32 %s293, 1
    %p297 = scmp.eq.s32.totalorder %s28, 3
    %p298 = scmp.ne.s32.totalorder %s293, %s295
    %p299 = scmp.eq.s32.totalorder %s28, 0
    %p300 = por %p298, %p299
    %p301 = scmp.ne.s32.totalorder %s293, %s295
    %p302 = scmp.eq.s32.totalorder %s33, 3
    %p303 = por %p301, %p302
    %p304 = scmp.ne.s32.totalorder %s295, %s296
    %p305 = scmp.eq.s32.totalorder %s33, 0
    %p306 = por %p304, %p305
    %p307 = scmp.ne.s32.totalorder %s295, %s296
    %p308 = scmp.eq.s32.totalorder %s34, 3
    %p309 = por %p307, %p308
    %p311 = scmp.ne.s32.totalorder %s296, %s310
    %p312 = scmp.eq.s32.totalorder %s34, 0
    %p313 = por %p311, %p312
    %s315 = sadd.s32 %s314, 1
    %p318 = scmp.eq.s32.totalorder %s28, 3
    %p319 = scmp.ne.s32.totalorder %s314, %s316
    %p320 = scmp.eq.s32.totalorder %s28, 0
    %p321 = por %p319, %p320
    %p322 = scmp.ne.s32.totalorder %s314, %s316
    %p323 = scmp.eq.s32.totalorder %s33, 3
    %p324 = por %p322, %p323
    %p325 = scmp.ne.s32.totalorder %s316, %s317
    %p326 = scmp.eq.s32.totalorder %s33, 0
    %p327 = por %p325, %p326
    %p328 = scmp.ne.s32.totalorder %s316, %s317
    %p329 = scmp.eq.s32.totalorder %s34, 3
    %p330 = por %p328, %p329
    %p332 = scmp.ne.s32.totalorder %s317, %s331
    %p333 = scmp.eq.s32.totalorder %s34, 0
    %p334 = por %p332, %p333
    %s336 = sadd.s32 %s335, 1
    %p339 = scmp.eq.s32.totalorder %s28, 3
    %p340 = scmp.ne.s32.totalorder %s335, %s337
    %p341 = scmp.eq.s32.totalorder %s28, 0
    %p342 = por %p340, %p341
    %p343 = scmp.ne.s32.totalorder %s335, %s337
    %p344 = scmp.eq.s32.totalorder %s33, 3
    %p345 = por %p343, %p344
    %p346 = scmp.ne.s32.totalorder %s337, %s338
    %p347 = scmp.eq.s32.totalorder %s33, 0
    %p348 = por %p346, %p347
    %p349 = scmp.ne.s32.totalorder %s337, %s338
    %p350 = scmp.eq.s32.totalorder %s34, 3
    %p351 = por %p349, %p350
    %p353 = scmp.ne.s32.totalorder %s338, %s352
    %p354 = scmp.eq.s32.totalorder %s34, 0
    %p355 = por %p353, %p354
    %s357 = sadd.s32 %s356, 1
    %p360 = scmp.eq.s32.totalorder %s28, 3
    %p361 = scmp.ne.s32.totalorder %s356, %s358
    %p362 = scmp.eq.s32.totalorder %s28, 0
    %p363 = por %p361, %p362
    %p364 = scmp.ne.s32.totalorder %s356, %s358
    %p365 = scmp.eq.s32.totalorder %s33, 3
    %p366 = por %p364, %p365
    %p367 = scmp.ne.s32.totalorder %s358, %s359
    %p368 = scmp.eq.s32.totalorder %s33, 0
    %p369 = por %p367, %p368
    %p370 = scmp.ne.s32.totalorder %s358, %s359
    %p371 = scmp.eq.s32.totalorder %s34, 3
    %p372 = por %p370, %p371
    %p374 = scmp.ne.s32.totalorder %s359, %s373
    %p375 = scmp.eq.s32.totalorder %s34, 0
    %p376 = por %p374, %p375
    %s378 = sadd.s32 %s377, 1
    %p381 = scmp.eq.s32.totalorder %s28, 3
    %p382 = scmp.ne.s32.totalorder %s377, %s379
    %p383 = scmp.eq.s32.totalorder %s28, 0
    %p384 = por %p382, %p383
    %p385 = scmp.ne.s32.totalorder %s377, %s379
    %p386 = scmp.eq.s32.totalorder %s33, 3
    %p387 = por %p385, %p386
    %p388 = scmp.ne.s32.totalorder %s379, %s380
    %p389 = scmp.eq.s32.totalorder %s33, 0
    %p390 = por %p388, %p389
    %p391 = scmp.ne.s32.totalorder %s379, %s380
    %p392 = scmp.eq.s32.totalorder %s34, 3
    %p393 = por %p391, %p392
    %p395 = scmp.ne.s32.totalorder %s380, %s394
    %p396 = scmp.eq.s32.totalorder %s34, 0
    %p397 = por %p395, %p396
    %s399 = sadd.s32 %s398, 1
    %p402 = scmp.eq.s32.totalorder %s28, 3
    %p403 = scmp.ne.s32.totalorder %s398, %s400
    %p404 = scmp.eq.s32.totalorder %s28, 0
    %p405 = por %p403, %p404
    %p406 = scmp.ne.s32.totalorder %s398, %s400
    %p407 = scmp.eq.s32.totalorder %s33, 3
    %p408 = por %p406, %p407
    %p409 = scmp.ne.s32.totalorder %s400, %s401
    %p410 = scmp.eq.s32.totalorder %s33, 0
    %p411 = por %p409, %p410
    %p412 = scmp.ne.s32.totalorder %s400, %s401
    %p413 = scmp.eq.s32.totalorder %s34, 3
    %p414 = por %p412, %p413
    %p416 = scmp.ne.s32.totalorder %s401, %s415
    %p417 = scmp.eq.s32.totalorder %s34, 0
    %p418 = por %p416, %p417
    %s420 = sadd.s32 %s419, 1
    %p423 = scmp.eq.s32.totalorder %s28, 3
    %p424 = scmp.ne.s32.totalorder %s419, %s421
    %p425 = scmp.eq.s32.totalorder %s28, 0
    %p426 = por %p424, %p425
    %p427 = scmp.ne.s32.totalorder %s419, %s421
    %p428 = scmp.eq.s32.totalorder %s33, 3
    %p429 = por %p427, %p428
    %p430 = scmp.ne.s32.totalorder %s421, %s422
    %p431 = scmp.eq.s32.totalorder %s33, 0
    %p432 = por %p430, %p431
    %p433 = scmp.ne.s32.totalorder %s421, %s422
    %p434 = scmp.eq.s32.totalorder %s34, 3
    %p435 = por %p433, %p434
    %p437 = scmp.ne.s32.totalorder %s422, %s436
    %p438 = scmp.eq.s32.totalorder %s34, 0
    %p439 = por %p437, %p438
    %s441 = sadd.s32 %s440, 1
    %p444 = scmp.eq.s32.totalorder %s28, 3
    %p445 = scmp.ne.s32.totalorder %s440, %s442
    %p446 = scmp.eq.s32.totalorder %s28, 0
    %p447 = por %p445, %p446
    %p448 = scmp.ne.s32.totalorder %s440, %s442
    %p449 = scmp.eq.s32.totalorder %s33, 3
    %p450 = por %p448, %p449
    %p451 = scmp.ne.s32.totalorder %s442, %s443
    %p452 = scmp.eq.s32.totalorder %s33, 0
    %p453 = por %p451, %p452
    %p454 = scmp.ne.s32.totalorder %s442, %s443
    %p455 = scmp.eq.s32.totalorder %s34, 3
    %p456 = por %p454, %p455
    %p458 = scmp.ne.s32.totalorder %s443, %s457
    %p459 = scmp.eq.s32.totalorder %s34, 0
    %p460 = por %p458, %p459
    %s462 = sadd.s32 %s461, 1
    %p465 = scmp.eq.s32.totalorder %s28, 3
    %p466 = scmp.ne.s32.totalorder %s461, %s463
    %p467 = scmp.eq.s32.totalorder %s28, 0
    %p468 = por %p466, %p467
    %p469 = scmp.ne.s32.totalorder %s461, %s463
    %p470 = scmp.eq.s32.totalorder %s33, 3
    %p471 = por %p469, %p470
    %p472 = scmp.ne.s32.totalorder %s463, %s464
    %p473 = scmp.eq.s32.totalorder %s33, 0
    %p474 = por %p472, %p473
    %p475 = scmp.ne.s32.totalorder %s463, %s464
    %p476 = scmp.eq.s32.totalorder %s34, 3
    %p477 = por %p475, %p476
    %p479 = scmp.ne.s32.totalorder %s464, %s478
    %p480 = scmp.eq.s32.totalorder %s34, 0
    %p481 = por %p479, %p480
    %s483 = sadd.s32 %s482, 1
    %p486 = scmp.eq.s32.totalorder %s28, 3
    %p487 = scmp.ne.s32.totalorder %s482, %s484
    %p488 = scmp.eq.s32.totalorder %s28, 0
    %p489 = por %p487, %p488
    %p490 = scmp.ne.s32.totalorder %s482, %s484
    %p491 = scmp.eq.s32.totalorder %s33, 3
    %p492 = por %p490, %p491
    %p493 = scmp.ne.s32.totalorder %s484, %s485
    %p494 = scmp.eq.s32.totalorder %s33, 0
    %p495 = por %p493, %p494
    %p496 = scmp.ne.s32.totalorder %s484, %s485
    %p497 = scmp.eq.s32.totalorder %s34, 3
    %p498 = por %p496, %p497
    %p500 = scmp.ne.s32.totalorder %s485, %s499
    %p501 = scmp.eq.s32.totalorder %s34, 0
    %p502 = por %p500, %p501
    %s503 = ssub.s32 %s28, %s35
    %p504 = scmp.eq.s32.totalorder %s503, 0
    %s506 = sadd.s32 %s505, 1
    %s507 = scalar_select %p504, %s505, %s506
    %p510 = pneg %p504
    %p511 = scmp.eq.s32.totalorder %s28, 3
    %p512 = por %p510, %p511
    %p513 = scmp.ne.s32.totalorder %s505, %s508
    %p514 = scmp.eq.s32.totalorder %s28, 0
    %p515 = por %p513, %p514
    %p516 = scmp.ne.s32.totalorder %s505, %s508
    %p517 = scmp.eq.s32.totalorder %s33, 3
    %p518 = por %p516, %p517
    %p519 = scmp.ne.s32.totalorder %s508, %s509
    %p520 = scmp.eq.s32.totalorder %s33, 0
    %p521 = por %p519, %p520
    %p522 = scmp.ne.s32.totalorder %s508, %s509
    %p523 = scmp.eq.s32.totalorder %s34, 3
    %p524 = por %p522, %p523
    %p526 = scmp.ne.s32.totalorder %s509, %s525
    %p527 = scmp.eq.s32.totalorder %s34, 0
    %p528 = por %p526, %p527
    %p529 = scmp.le.s32.totalorder 1, %s28
    %p530 = scmp.lt.s32.totalorder %s28, 5
    %p531 = pnand %p529, %p530
    %p532 = pneg %p531
    // Predicated region
    $region9: #{fmce_forward.1} parent=5 // pred_check
      _
    $region10: #{fmce_forward.1} parent=5 // pred_check_branch
      %534 = sbr.rel (%p531) target = $region12
    $region11: #{fmce_forward.1} parent=5 // pred_region
      %s535 = ssub.s32 %s28, 1
      // Predicated region
      $region13: #{fmce_forward.1} parent=11 // pred_check
        %p536 = pneg %p75
      $region14: #{fmce_forward.1} parent=11 // pred_check_branch
        %538 = sbr.rel (%p536) target = $region16
      $region15: #{fmce_forward.1} parent=11 // pred_region
        _
      $region16: #{fmce_forward.1} parent=11 // pred_fallthru
        _
      // Predicated region
      $region17: #{fmce_forward.1} parent=11 // pred_check
        %p539 = pneg %p96
      $region18: #{fmce_forward.1} parent=11 // pred_check_branch
        %541 = sbr.rel (%p539) target = $region20
      $region19: #{fmce_forward.1} parent=11 // pred_region
        _
      $region20: #{fmce_forward.1} parent=11 // pred_fallthru
        _
      // Predicated region
      $region21: #{fmce_forward.1} parent=11 // pred_check
        %p542 = pneg %p117
      $region22: #{fmce_forward.1} parent=11 // pred_check_branch
        %544 = sbr.rel (%p542) target = $region24
      $region23: #{fmce_forward.1} parent=11 // pred_region
        _
      $region24: #{fmce_forward.1} parent=11 // pred_fallthru
        _
      // Predicated region
      $region25: #{fmce_forward.1} parent=11 // pred_check
        %p545 = pneg %p138
      $region26: #{fmce_forward.1} parent=11 // pred_check_branch
        %547 = sbr.rel (%p545) target = $region28
      $region27: #{fmce_forward.1} parent=11 // pred_region
        _
      $region28: #{fmce_forward.1} parent=11 // pred_fallthru
        _
      // Predicated region
      $region29: #{fmce_forward.1} parent=11 // pred_check
        %p548 = pneg %p159
      $region30: #{fmce_forward.1} parent=11 // pred_check_branch
        %550 = sbr.rel (%p548) target = $region32
      $region31: #{fmce_forward.1} parent=11 // pred_region
        _
      $region32: #{fmce_forward.1} parent=11 // pred_fallthru
        _
      // Predicated region
      $region33: #{fmce_forward.1} parent=11 // pred_check
        %p551 = pneg %p180
      $region34: #{fmce_forward.1} parent=11 // pred_check_branch
        %553 = sbr.rel (%p551) target = $region36
      $region35: #{fmce_forward.1} parent=11 // pred_region
        _
      $region36: #{fmce_forward.1} parent=11 // pred_fallthru
        _
      // Predicated region
      $region37: #{fmce_forward.1} parent=11 // pred_check
        %p554 = pneg %p201
      $region38: #{fmce_forward.1} parent=11 // pred_check_branch
        %556 = sbr.rel (%p554) target = $region40
      $region39: #{fmce_forward.1} parent=11 // pred_region
        _
      $region40: #{fmce_forward.1} parent=11 // pred_fallthru
        _
      // Predicated region
      $region41: #{fmce_forward.1} parent=11 // pred_check
        %p557 = pneg %p222
      $region42: #{fmce_forward.1} parent=11 // pred_check_branch
        %559 = sbr.rel (%p557) target = $region44
      $region43: #{fmce_forward.1} parent=11 // pred_region
        _
      $region44: #{fmce_forward.1} parent=11 // pred_fallthru
        _
      // Predicated region
      $region45: #{fmce_forward.1} parent=11 // pred_check
        %p560 = pneg %p243
      $region46: #{fmce_forward.1} parent=11 // pred_check_branch
        %562 = sbr.rel (%p560) target = $region48
      $region47: #{fmce_forward.1} parent=11 // pred_region
        _
      $region48: #{fmce_forward.1} parent=11 // pred_fallthru
        _
      // Predicated region
      $region49: #{fmce_forward.1} parent=11 // pred_check
        %p563 = pneg %p264
      $region50: #{fmce_forward.1} parent=11 // pred_check_branch
        %565 = sbr.rel (%p563) target = $region52
      $region51: #{fmce_forward.1} parent=11 // pred_region
        _
      $region52: #{fmce_forward.1} parent=11 // pred_fallthru
        _
      // Predicated region
      $region53: #{fmce_forward.1} parent=11 // pred_check
        %p566 = pneg %p285
      $region54: #{fmce_forward.1} parent=11 // pred_check_branch
        %568 = sbr.rel (%p566) target = $region56
      $region55: #{fmce_forward.1} parent=11 // pred_region
        _
      $region56: #{fmce_forward.1} parent=11 // pred_fallthru
        _
      // Predicated region
      $region57: #{fmce_forward.1} parent=11 // pred_check
        %p569 = pneg %p306
      $region58: #{fmce_forward.1} parent=11 // pred_check_branch
        %571 = sbr.rel (%p569) target = $region60
      $region59: #{fmce_forward.1} parent=11 // pred_region
        _
      $region60: #{fmce_forward.1} parent=11 // pred_fallthru
        _
      // Predicated region
      $region61: #{fmce_forward.1} parent=11 // pred_check
        %p572 = pneg %p327
      $region62: #{fmce_forward.1} parent=11 // pred_check_branch
        %574 = sbr.rel (%p572) target = $region64
      $region63: #{fmce_forward.1} parent=11 // pred_region
        _
      $region64: #{fmce_forward.1} parent=11 // pred_fallthru
        _
      // Predicated region
      $region65: #{fmce_forward.1} parent=11 // pred_check
        %p575 = pneg %p348
      $region66: #{fmce_forward.1} parent=11 // pred_check_branch
        %577 = sbr.rel (%p575) target = $region68
      $region67: #{fmce_forward.1} parent=11 // pred_region
        _
      $region68: #{fmce_forward.1} parent=11 // pred_fallthru
        _
      // Predicated region
      $region69: #{fmce_forward.1} parent=11 // pred_check
        %p578 = pneg %p369
      $region70: #{fmce_forward.1} parent=11 // pred_check_branch
        %580 = sbr.rel (%p578) target = $region72
      $region71: #{fmce_forward.1} parent=11 // pred_region
        _
      $region72: #{fmce_forward.1} parent=11 // pred_fallthru
        _
      // Predicated region
      $region73: #{fmce_forward.1} parent=11 // pred_check
        %p581 = pneg %p390
      $region74: #{fmce_forward.1} parent=11 // pred_check_branch
        %583 = sbr.rel (%p581) target = $region76
      $region75: #{fmce_forward.1} parent=11 // pred_region
        _
      $region76: #{fmce_forward.1} parent=11 // pred_fallthru
        _
      // Predicated region
      $region77: #{fmce_forward.1} parent=11 // pred_check
        %p584 = pneg %p411
      $region78: #{fmce_forward.1} parent=11 // pred_check_branch
        %586 = sbr.rel (%p584) target = $region80
      $region79: #{fmce_forward.1} parent=11 // pred_region
        _
      $region80: #{fmce_forward.1} parent=11 // pred_fallthru
        _
      // Predicated region
      $region81: #{fmce_forward.1} parent=11 // pred_check
        %p587 = pneg %p432
      $region82: #{fmce_forward.1} parent=11 // pred_check_branch
        %589 = sbr.rel (%p587) target = $region84
      $region83: #{fmce_forward.1} parent=11 // pred_region
        _
      $region84: #{fmce_forward.1} parent=11 // pred_fallthru
        _
      // Predicated region
      $region85: #{fmce_forward.1} parent=11 // pred_check
        %p590 = pneg %p453
      $region86: #{fmce_forward.1} parent=11 // pred_check_branch
        %592 = sbr.rel (%p590) target = $region88
      $region87: #{fmce_forward.1} parent=11 // pred_region
        _
      $region88: #{fmce_forward.1} parent=11 // pred_fallthru
        _
      // Predicated region
      $region89: #{fmce_forward.1} parent=11 // pred_check
        %p593 = pneg %p474
      $region90: #{fmce_forward.1} parent=11 // pred_check_branch
        %595 = sbr.rel (%p593) target = $region92
      $region91: #{fmce_forward.1} parent=11 // pred_region
        _
      $region92: #{fmce_forward.1} parent=11 // pred_fallthru
        _
      // Predicated region
      $region93: #{fmce_forward.1} parent=11 // pred_check
        %p596 = pneg %p495
      $region94: #{fmce_forward.1} parent=11 // pred_check_branch
        %598 = sbr.rel (%p596) target = $region96
      $region95: #{fmce_forward.1} parent=11 // pred_region
        _
      $region96: #{fmce_forward.1} parent=11 // pred_fallthru
        _
    $region12: #{fmce_forward.1} parent=5 // pred_fallthru
      _
    %p599 = scmp.lt.s32.totalorder %s28, 4
    // Predicated region
    $region97: #{fmce_forward.1} parent=5 // pred_check
      %p600 = pneg %p599
    $region98: #{fmce_forward.1} parent=5 // pred_check_branch
      %602 = sbr.rel (%p600) target = $region100
    $region99: #{fmce_forward.1} parent=5 // pred_region
      // Predicated region
      $region101: #{fmce_forward.1} parent=99 // pred_check
        %p603 = pneg %p48
      $region102: #{fmce_forward.1} parent=99 // pred_check_branch
        %605 = sbr.rel (%p603) target = $region104
      $region103: #{fmce_forward.1} parent=99 // pred_region
        %p606 = scmp.lt.s32.totalorder %s28, 3
        %s607 = scalar_select %p606, %s28, 3
        %s608 = smul.addr %s607, 2
        %s609 = scalar_lea.vmem %s0, %s608
      $region104: #{fmce_forward.1} parent=99 // pred_fallthru
        _
    $region100: #{fmce_forward.1} parent=5 // pred_fallthru
      _
    %p610 = scmp.le.s32.totalorder 1, %s28
    %p611 = scmp.lt.s32.totalorder %s28, 5
    %p612 = pnand %p610, %p611
    %p613 = pneg %p612
    // Predicated region
    $region105: #{fmce_forward.1} parent=5 // pred_check
      _
    $region106: #{fmce_forward.1} parent=5 // pred_check_branch
      %615 = sbr.rel (%p612) target = $region108
    $region107: #{fmce_forward.1} parent=5 // pred_region
      %s616 = ssub.s32 %s28, 1
      %p617 = scmp.lt.s32.totalorder %s33, 3
      %s618 = scalar_select %p617, %s33, 3
      %s619 = smul.addr %s618, 2
      %s620 = scalar_lea.vmem %s0, %s619
      %p621 = pneg %p54
      %p622 = pneg %p51
      %p623 = pneg %p75
      %p624 = pneg %p72
      %p625 = pneg %p96
      %p626 = pneg %p93
      %p627 = pneg %p117
      %p628 = pneg %p114
      %p629 = pneg %p138
      %p630 = pneg %p135
      %p631 = pneg %p159
      %p632 = pneg %p156
      %p633 = pneg %p180
      %p634 = pneg %p177
      %p635 = pneg %p201
      %p636 = pneg %p198
      %p637 = pneg %p222
      %p638 = pneg %p219
      %p639 = pneg %p243
      %p640 = pneg %p240
      %p641 = pneg %p264
      %p642 = pneg %p261
      %p643 = pneg %p285
      %p644 = pneg %p282
      %p645 = pneg %p306
      %p646 = pneg %p303
      %p647 = pneg %p327
      %p648 = pneg %p324
      %p649 = pneg %p348
      %p650 = pneg %p345
      %p651 = pneg %p369
      %p652 = pneg %p366
      %p653 = pneg %p390
      %p654 = pneg %p387
      %p655 = pneg %p411
      %p656 = pneg %p408
      %p657 = pneg %p432
      %p658 = pneg %p429
      %p659 = pneg %p453
      %p660 = pneg %p450
      %p661 = pneg %p474
      %p662 = pneg %p471
      %p663 = pneg %p495
      %p664 = pneg %p492
      %p665 = pneg %p521
      %p666 = pneg %p518
      %p667 = scmp.lt.s32.totalorder %s33, 3
      %s668 = scalar_select %p667, %s33, 3
      %s669 = smul.addr %s668, 2
      %s670 = scalar_lea.vmem %s22, %s669
      %p671 = scmp.lt.s32.totalorder %s33, 3
      %s672 = scalar_select %p671, %s33, 3
      %s673 = smul.addr %s672, 2
      %s674 = scalar_lea.vmem %s0, %s673
      %p675 = scmp.lt.s32.totalorder %s33, 3
      %s676 = scalar_select %p675, %s33, 3
      %s677 = smul.addr %s676, 2
      %s678 = scalar_lea.vmem %s22, %s677
      %vm680 = vcmask 390144
      %681 = vst.msk [vmem:[#allocation2] sm:$0x3f] %vm680, 0.0
      %v682 = vlaneseq
      %v683 = vshrl.u32 %v682, 7
      %v684 = vld [vmem:[%s1] sm:$0xf]
      %v685 = vld [vmem:[%s674] sm:$0x1]
      %v686 = vstv %s33
      %vm687 = vcmp.eq.s32.totalorder %v683, %v686
      %v688 = vlaneseq
      %v689 = vshrl.u32 %v688, 7
      %v690 = vsub.s32 0, %v689
      %v691 = vrot.slane %v685, %v690
      %v692 = vsel %vm687, %v691, %v684
      %s693 = scalar_lea.vmem %s1, 4
      %v694 = vld [vmem:[%s693] sm:$0xf]
      %v695 = vld [vmem:[%s674 + $0x1] sm:$0x1]
      %v696 = vlaneseq
      %v697 = vshrl.u32 %v696, 7
      %v698 = vsub.s32 0, %v697
      %v699 = vrot.slane %v695, %v698
      %v700 = vsel %vm687, %v699, %v694
      %v701 = vld [vmem:[%s3] sm:$0x3f]
      %703 = vrot.lane.b32.xlu0 %v692, 16
      %v704 = vpop.permute.xlu0 %703
      %vm706 = vcmask 257152
      %707 = vst.msk [vmem:[#allocation2] sm:$0xf] %vm706, %v704
      %v708 = vld [vmem:[#allocation2] sm:$0xf]
      %v709 = vld [vmem:[%s2] sm:$0x3f]
      %v710 = vpack.c.bf16 %v709, %v709
      %v711 = vpack.c.bf16 %v708, %v708
      %s712 = scalar_lea.vmem %s2, 8
      %v713 = vld [vmem:[%s712] sm:$0x3f]
      %v714 = vpack.c.bf16 %v713, %v713
      %716 = vrot.lane.b32.xlu0 %v711, 112
      %v717 = vpop.permute.xlu0 %716
      %vm718 = vcmask 31744
      %v720 = vsel %vm718, %v714, 0
      %vm722 = vcmask 1041408
      %v724 = vsel %vm722, %v717, 0
      %726 = vmatprep.subr.bf16.mxu0 0
      %727 = vmatpush1.bf16.msra.mxu0 %v724
      %728 = vmatprep.subr.bf16.mxu0 0
      %729 = vmatpush1.bf16.msra.mxu0 0
      %730 = vmatprep.subr.bf16.mxu0 0
      %731 = vmatpush1.bf16.msra.mxu0 0
      %732 = vmatprep.subr.bf16.mxu0 0
      %733 = vmatpush1.bf16.msra.mxu0 0
      %734 = vmatprep.subr.bf16.mxu0 0
      %735 = vmatpush1.bf16.msra.mxu0 0
      %736 = vmatprep.subr.bf16.mxu0 0
      %737 = vmatpush1.bf16.msra.mxu0 0
      %738 = vmatprep.subr.bf16.mxu0 0
      %739 = vmatpush1.bf16.msra.mxu0 0
      %740 = vmatprep.subr.bf16.mxu0 0
      %741 = vmatpush1.bf16.msra.mxu0 0
      %742 = vmatprep.subr.bf16.mxu0 0
      %743 = vmatpush1.bf16.msra.mxu0 0
      %744 = vmatprep.subr.bf16.mxu0 0
      %745 = vmatpush1.bf16.msra.mxu0 0
      %746 = vmatprep.subr.bf16.mxu0 0
      %747 = vmatpush1.bf16.msra.mxu0 0
      %748 = vmatprep.subr.bf16.mxu0 0
      %749 = vmatpush1.bf16.msra.mxu0 0
      %750 = vmatprep.subr.bf16.mxu0 0
      %751 = vmatpush1.bf16.msra.mxu0 0
      %752 = vmatprep.subr.bf16.mxu0 0
      %753 = vmatpush1.bf16.msra.mxu0 0
      %754 = vmatprep.subr.bf16.mxu0 0
      %755 = vmatpush1.bf16.msra.mxu0 0
      %756 = vmatprep.subr.bf16.mxu0 0
      %757 = vmatpush1.bf16.msra.mxu0 0
      %758 = vmatprep.mubr.bf16.mxu0 0
      %759 = vmatmul.mubr.bf16.gmra.mrb[0].mxu0 %v720
      %v760 = vpop.f32.mrb[0].mxu0
      %v761 = vadd.f32 0.0, %v760
      %v762 = vpop.f32.mrb[0].mxu0
      %v763 = vpop.f32.mrb[0].mxu0
      %v764 = vpop.f32.mrb[0].mxu0
      %765 = vdwg.mxu0
      %766 = vrot.lane.b32.xlu0 %v711, 114
      %v767 = vpop.permute.xlu0 %766
      %v769 = vsel %vm718, %v710, 0
      %v772 = vsel %vm722, %v767, 0
      %774 = vmatprep.subr.bf16.mxu0 0
      %775 = vmatpush1.bf16.msra.mxu0 %v772
      %776 = vmatprep.subr.bf16.mxu0 0
      %777 = vmatpush1.bf16.msra.mxu0 0
      %778 = vmatprep.subr.bf16.mxu0 0
      %779 = vmatpush1.bf16.msra.mxu0 0
      %780 = vmatprep.subr.bf16.mxu0 0
      %781 = vmatpush1.bf16.msra.mxu0 0
      %782 = vmatprep.subr.bf16.mxu0 0
      %783 = vmatpush1.bf16.msra.mxu0 0
      %784 = vmatprep.subr.bf16.mxu0 0
      %785 = vmatpush1.bf16.msra.mxu0 0
      %786 = vmatprep.subr.bf16.mxu0 0
      %787 = vmatpush1.bf16.msra.mxu0 0
      %788 = vmatprep.subr.bf16.mxu0 0
      %789 = vmatpush1.bf16.msra.mxu0 0
      %790 = vmatprep.subr.bf16.mxu0 0
      %791 = vmatpush1.bf16.msra.mxu0 0
      %792 = vmatprep.subr.bf16.mxu0 0
      %793 = vmatpush1.bf16.msra.mxu0 0
      %794 = vmatprep.subr.bf16.mxu0 0
      %795 = vmatpush1.bf16.msra.mxu0 0
      %796 = vmatprep.subr.bf16.mxu0 0
      %797 = vmatpush1.bf16.msra.mxu0 0
      %798 = vmatprep.subr.bf16.mxu0 0
      %799 = vmatpush1.bf16.msra.mxu0 0
      %800 = vmatprep.subr.bf16.mxu0 0
      %801 = vmatpush1.bf16.msra.mxu0 0
      %802 = vmatprep.subr.bf16.mxu0 0
      %803 = vmatpush1.bf16.msra.mxu0 0
      %804 = vmatprep.subr.bf16.mxu0 0
      %805 = vmatpush1.bf16.msra.mxu0 0
      %806 = vmatprep.mubr.bf16.mxu0 0
      %807 = vmatmul.mubr.bf16.gmra.mrb[0].mxu0 %v769
      %v808 = vpop.f32.mrb[0].mxu0
      %v809 = vadd.f32 %v761, %v808
      %v810 = vpop.f32.mrb[0].mxu0
      %v811 = vpop.f32.mrb[0].mxu0
      %v812 = vpop.f32.mrb[0].mxu0
      %813 = vdwg.mxu0
      %s814 = scalar_lea.vmem %s2, 16
      %v815 = vld [vmem:[%s814] sm:$0x3f]
      %v816 = vpack.c.bf16 %v815, %v815
      %817 = vrot.lane.b32.xlu0 %v711, 110
      %v818 = vpop.permute.xlu0 %817
      %v820 = vsel %vm718, %v816, 0
      %v823 = vsel %vm722, %v818, 0
      %825 = vmatprep.subr.bf16.mxu0 0
      %826 = vmatpush1.bf16.msra.mxu0 %v823
      %827 = vmatprep.subr.bf16.mxu0 0
      %828 = vmatpush1.bf16.msra.mxu0 0
      %829 = vmatprep.subr.bf16.mxu0 0
      %830 = vmatpush1.bf16.msra.mxu0 0
      %831 = vmatprep.subr.bf16.mxu0 0
      %832 = vmatpush1.bf16.msra.mxu0 0
      %833 = vmatprep.subr.bf16.mxu0 0
      %834 = vmatpush1.bf16.msra.mxu0 0
      %835 = vmatprep.subr.bf16.mxu0 0
      %836 = vmatpush1.bf16.msra.mxu0 0
      %837 = vmatprep.subr.bf16.mxu0 0
      %838 = vmatpush1.bf16.msra.mxu0 0
      %839 = vmatprep.subr.bf16.mxu0 0
      %840 = vmatpush1.bf16.msra.mxu0 0
      %841 = vmatprep.subr.bf16.mxu0 0
      %842 = vmatpush1.bf16.msra.mxu0 0
      %843 = vmatprep.subr.bf16.mxu0 0
      %844 = vmatpush1.bf16.msra.mxu0 0
      %845 = vmatprep.subr.bf16.mxu0 0
      %846 = vmatpush1.bf16.msra.mxu0 0
      %847 = vmatprep.subr.bf16.mxu0 0
      %848 = vmatpush1.bf16.msra.mxu0 0
      %849 = vmatprep.subr.bf16.mxu0 0
      %850 = vmatpush1.bf16.msra.mxu0 0
      %851 = vmatprep.subr.bf16.mxu0 0
      %852 = vmatpush1.bf16.msra.mxu0 0
      %853 = vmatprep.subr.bf16.mxu0 0
      %854 = vmatpush1.bf16.msra.mxu0 0
      %855 = vmatprep.subr.bf16.mxu0 0
      %856 = vmatpush1.bf16.msra.mxu0 0
      %857 = vmatprep.mubr.bf16.mxu0 0
      %858 = vmatmul.mubr.bf16.gmra.mrb[0].mxu0 %v820
      %v859 = vpop.f32.mrb[0].mxu0
      %v860 = vadd.f32 0.0, %v859
      %v861 = vpop.f32.mrb[0].mxu0
      %v862 = vpop.f32.mrb[0].mxu0
      %v863 = vpop.f32.mrb[0].mxu0
      %864 = vdwg.mxu0
      %v865 = vadd.f32 %v809, %v860
      %867 = vset.pattern.permute.xlu0 0
      %868 = vperm.xlu0 %867, %v701
      %v869 = vpop.permute.xlu0 %868
      %v871 = vadd.f32 %v865, %v869
      %v872 = vmax.f32 %v871, 0.0
      %874 = vrot.lane.b32.xlu0 %v700, 16
      %v875 = vpop.permute.xlu0 %874
      %877 = vst.msk [vmem:[#allocation2] sm:$0xf] %vm706, %v875
      %v878 = vld [vmem:[#allocation2] sm:$0xf]
      %v879 = vld [vmem:[%s2] sm:$0x3f]
      %v880 = vpack.c.bf16 %v879, %v879
      %v881 = vpack.c.bf16 %v878, %v878
      %v882 = vld [vmem:[%s712] sm:$0x3f]
      %v883 = vpack.c.bf16 %v882, %v882
      %885 = vrot.lane.b32.xlu0 %v881, 112
      %v886 = vpop.permute.xlu0 %885
      %v888 = vsel %vm718, %v883, 0
      %v891 = vsel %vm722, %v886, 0
      %893 = vmatprep.subr.bf16.mxu0 0
      %894 = vmatpush1.bf16.msra.mxu0 %v891
      %895 = vmatprep.subr.bf16.mxu0 0
      %896 = vmatpush1.bf16.msra.mxu0 0
      %897 = vmatprep.subr.bf16.mxu0 0
      %898 = vmatpush1.bf16.msra.mxu0 0
      %899 = vmatprep.subr.bf16.mxu0 0
      %900 = vmatpush1.bf16.msra.mxu0 0
      %901 = vmatprep.subr.bf16.mxu0 0
      %902 = vmatpush1.bf16.msra.mxu0 0
      %903 = vmatprep.subr.bf16.mxu0 0
      %904 = vmatpush1.bf16.msra.mxu0 0
      %905 = vmatprep.subr.bf16.mxu0 0
      %906 = vmatpush1.bf16.msra.mxu0 0
      %907 = vmatprep.subr.bf16.mxu0 0
      %908 = vmatpush1.bf16.msra.mxu0 0
      %909 = vmatprep.subr.bf16.mxu0 0
      %910 = vmatpush1.bf16.msra.mxu0 0
      %911 = vmatprep.subr.bf16.mxu0 0
      %912 = vmatpush1.bf16.msra.mxu0 0
      %913 = vmatprep.subr.bf16.mxu0 0
      %914 = vmatpush1.bf16.msra.mxu0 0
      %915 = vmatprep.subr.bf16.mxu0 0
      %916 = vmatpush1.bf16.msra.mxu0 0
      %917 = vmatprep.subr.bf16.mxu0 0
      %918 = vmatpush1.bf16.msra.mxu0 0
      %919 = vmatprep.subr.bf16.mxu0 0
      %920 = vmatpush1.bf16.msra.mxu0 0
      %921 = vmatprep.subr.bf16.mxu0 0
      %922 = vmatpush1.bf16.msra.mxu0 0
      %923 = vmatprep.subr.bf16.mxu0 0
      %924 = vmatpush1.bf16.msra.mxu0 0
      %925 = vmatprep.mubr.bf16.mxu0 0
      %926 = vmatmul.mubr.bf16.gmra.mrb[0].mxu0 %v888
      %v927 = vpop.f32.mrb[0].mxu0
      %v928 = vadd.f32 0.0, %v927
      %v929 = vpop.f32.mrb[0].mxu0
      %v930 = vpop.f32.mrb[0].mxu0
      %v931 = vpop.f32.mrb[0].mxu0
      %932 = vdwg.mxu0
      %933 = vrot.lane.b32.xlu0 %v881, 114
      %v934 = vpop.permute.xlu0 %933
      %v936 = vsel %vm718, %v880, 0
      %v939 = vsel %vm722, %v934, 0
      %941 = vmatprep.subr.bf16.mxu0 0
      %942 = vmatpush1.bf16.msra.mxu0 %v939
      %943 = vmatprep.subr.bf16.mxu0 0
      %944 = vmatpush1.bf16.msra.mxu0 0
      %945 = vmatprep.subr.bf16.mxu0 0
      %946 = vmatpush1.bf16.msra.mxu0 0
      %947 = vmatprep.subr.bf16.mxu0 0
      %948 = vmatpush1.bf16.msra.mxu0 0
      %949 = vmatprep.subr.bf16.mxu0 0
      %950 = vmatpush1.bf16.msra.mxu0 0
      %951 = vmatprep.subr.bf16.mxu0 0
      %952 = vmatpush1.bf16.msra.mxu0 0
      %953 = vmatprep.subr.bf16.mxu0 0
      %954 = vmatpush1.bf16.msra.mxu0 0
      %955 = vmatprep.subr.bf16.mxu0 0
      %956 = vmatpush1.bf16.msra.mxu0 0
      %957 = vmatprep.subr.bf16.mxu0 0
      %958 = vmatpush1.bf16.msra.mxu0 0
      %959 = vmatprep.subr.bf16.mxu0 0
      %960 = vmatpush1.bf16.msra.mxu0 0
      %961 = vmatprep.subr.bf16.mxu0 0
      %962 = vmatpush1.bf16.msra.mxu0 0
      %963 = vmatprep.subr.bf16.mxu0 0
      %964 = vmatpush1.bf16.msra.mxu0 0
      %965 = vmatprep.subr.bf16.mxu0 0
      %966 = vmatpush1.bf16.msra.mxu0 0
      %967 = vmatprep.subr.bf16.mxu0 0
      %968 = vmatpush1.bf16.msra.mxu0 0
      %969 = vmatprep.subr.bf16.mxu0 0
      %970 = vmatpush1.bf16.msra.mxu0 0
      %971 = vmatprep.subr.bf16.mxu0 0
      %972 = vmatpush1.bf16.msra.mxu0 0
      %973 = vmatprep.mubr.bf16.mxu0 0
      %974 = vmatmul.mubr.bf16.gmra.mrb[0].mxu0 %v936
      %v975 = vpop.f32.mrb[0].mxu0
      %v976 = vadd.f32 %v928, %v975
      %v977 = vpop.f32.mrb[0].mxu0
      %v978 = vpop.f32.mrb[0].mxu0
      %v979 = vpop.f32.mrb[0].mxu0
      %980 = vdwg.mxu0
      %v981 = vld [vmem:[%s814] sm:$0x3f]
      %v982 = vpack.c.bf16 %v981, %v981
      %983 = vrot.lane.b32.xlu0 %v881, 110
      %v984 = vpop.permute.xlu0 %983
      %v986 = vsel %vm718, %v982, 0
      %v989 = vsel %vm722, %v984, 0
      %991 = vmatprep.subr.bf16.mxu0 0
      %992 = vmatpush1.bf16.msra.mxu0 %v989
      %993 = vmatprep.subr.bf16.mxu0 0
      %994 = vmatpush1.bf16.msra.mxu0 0
      %995 = vmatprep.subr.bf16.mxu0 0
      %996 = vmatpush1.bf16.msra.mxu0 0
      %997 = vmatprep.subr.bf16.mxu0 0
      %998 = vmatpush1.bf16.msra.mxu0 0
      %999 = vmatprep.subr.bf16.mxu0 0
      %1000 = vmatpush1.bf16.msra.mxu0 0
      %1001 = vmatprep.subr.bf16.mxu0 0
      %1002 = vmatpush1.bf16.msra.mxu0 0
      %1003 = vmatprep.subr.bf16.mxu0 0
      %1004 = vmatpush1.bf16.msra.mxu0 0
      %1005 = vmatprep.subr.bf16.mxu0 0
      %1006 = vmatpush1.bf16.msra.mxu0 0
      %1007 = vmatprep.subr.bf16.mxu0 0
      %1008 = vmatpush1.bf16.msra.mxu0 0
      %1009 = vmatprep.subr.bf16.mxu0 0
      %1010 = vmatpush1.bf16.msra.mxu0 0
      %1011 = vmatprep.subr.bf16.mxu0 0
      %1012 = vmatpush1.bf16.msra.mxu0 0
      %1013 = vmatprep.subr.bf16.mxu0 0
      %1014 = vmatpush1.bf16.msra.mxu0 0
      %1015 = vmatprep.subr.bf16.mxu0 0
      %1016 = vmatpush1.bf16.msra.mxu0 0
      %1017 = vmatprep.subr.bf16.mxu0 0
      %1018 = vmatpush1.bf16.msra.mxu0 0
      %1019 = vmatprep.subr.bf16.mxu0 0
      %1020 = vmatpush1.bf16.msra.mxu0 0
      %1021 = vmatprep.subr.bf16.mxu0 0
      %1022 = vmatpush1.bf16.msra.mxu0 0
      %1023 = vmatprep.mubr.bf16.mxu0 0
      %1024 = vmatmul.mubr.bf16.gmra.mrb[0].mxu0 %v986
      %v1025 = vpop.f32.mrb[0].mxu0
      %v1026 = vadd.f32 0.0, %v1025
      %v1027 = vpop.f32.mrb[0].mxu0
      %v1028 = vpop.f32.mrb[0].mxu0
      %v1029 = vpop.f32.mrb[0].mxu0
      %1030 = vdwg.mxu0
      %v1031 = vadd.f32 %v976, %v1026
      %v1032 = vadd.f32 %v1031, %v869
      %v1033 = vmax.f32 %v1032, 0.0
      %v1034 = vadd.f32 %v872, %v1033
      %vm1035 = vcmask 128000
      %v1036 = vsel %vm1035, %v1034, 0.0
      %1037 = vadd.xlane.f32.xlu0 %v1036
      %v1038 = vpop.xlane.xlu0 %1037
      %v1039 = vrcp.pop 32.0
      %v1040 = vmul.f32 %v1038, %v1039
      %v1041 = vsub.f32 %v872, %v1040
      %v1042 = vmul.f32 %v1041, %v1041
      %v1043 = vsel %vm1035, %v1042, 0.0
      %1044 = vadd.xlane.f32.xlu0 %v1043
      %v1045 = vpop.xlane.xlu0 %1044
      %v1046 = vsub.f32 %v1033, %v1040
      %v1047 = vmul.f32 %v1046, %v1046
      %v1048 = vsel %vm1035, %v1047, 0.0
      %1049 = vadd.xlane.f32.xlu0 %v1048
      %v1050 = vpop.xlane.xlu0 %1049
      %v1051 = vadd.f32 %v1045, %v1050
      %v1052 = vmul.f32 %v1051, %v1039
      %v1053 = vadd.f32 %v1052, 1e-05
      %v1054 = vrsqrt.pop %v1053
      %v1055 = vld [vmem:[%s14] sm:$0x3f]
      %v1056 = vld [vmem:[%s15] sm:$0x3f]
      %v1057 = vmul.f32 %v1041, %v1054
      %1059 = vset.pattern.permute.xlu0 0
      %1060 = vperm.xlu0 %1059, %v1055
      %v1061 = vpop.permute.xlu0 %1060
      %v1063 = vmul.f32 %v1057, %v1061
      %1065 = vset.pattern.permute.xlu0 0
      %1066 = vperm.xlu0 %1065, %v1056
      %v1067 = vpop.permute.xlu0 %1066
      %v1069 = vadd.f32 %v1063, %v1067
      %v1070 = vmul.f32 %v1046, %v1054
      %v1071 = vmul.f32 %v1070, %v1061
      %v1072 = vadd.f32 %v1071, %v1067
      %v1073 = vld [vmem:[%s5] sm:$0x3f]
      %1075 = vrot.lane.b32.xlu0 %v1069, 16
      %v1076 = vpop.permute.xlu0 %1075
      %vm1078 = vcmask 259200
      %1079 = vst.msk [vmem:[#allocation2] sm:$0x3f] %vm1078, %v1076
      %v1080 = vld [vmem:[#allocation2] sm:$0x3f]
      %v1081 = vld [vmem:[%s4] sm:$0x3f]
      %v1082 = vpack.c.bf16 %v1081, %v1081
      %v1083 = vpack.c.bf16 %v1080, %v1080
      %s1084 = scalar_lea.vmem %s4, 8
      %v1085 = vld [vmem:[%s1084] sm:$0x3f]
      %v1086 = vpack.c.bf16 %v1085, %v1085
      %1088 = vrot.lane.b32.xlu0 %v1083, 112
      %v1089 = vpop.permute.xlu0 %1088
      %vm1090 = vcmask 48128
      %v1092 = vsel %vm1090, %v1086, 0
      %vm1094 = vcmask 1042432
      %v1096 = vsel %vm1094, %v1089, 0
      %1098 = vmatprep.subr.bf16.mxu0 0
      %1099 = vmatpush1.bf16.msra.mxu0 %v1096
      %1100 = vmatprep.subr.bf16.mxu0 0
      %1101 = vmatpush1.bf16.msra.mxu0 0
      %1102 = vmatprep.subr.bf16.mxu0 0
      %1103 = vmatpush1.bf16.msra.mxu0 0
      %1104 = vmatprep.subr.bf16.mxu0 0
      %1105 = vmatpush1.bf16.msra.mxu0 0
      %1106 = vmatprep.subr.bf16.mxu0 0
      %1107 = vmatpush1.bf16.msra.mxu0 0
      %1108 = vmatprep.subr.bf16.mxu0 0
      %1109 = vmatpush1.bf16.msra.mxu0 0
      %1110 = vmatprep.subr.bf16.mxu0 0
      %1111 = vmatpush1.bf16.msra.mxu0 0
      %1112 = vmatprep.subr.bf16.mxu0 0
      %1113 = vmatpush1.bf16.msra.mxu0 0
      %1114 = vmatprep.subr.bf16.mxu0 0
      %1115 = vmatpush1.bf16.msra.mxu0 0
      %1116 = vmatprep.subr.bf16.mxu0 0
      %1117 = vmatpush1.bf16.msra.mxu0 0
      %1118 = vmatprep.subr.bf16.mxu0 0
      %1119 = vmatpush1.bf16.msra.mxu0 0
      %1120 = vmatprep.subr.bf16.mxu0 0
      %1121 = vmatpush1.bf16.msra.mxu0 0
      %1122 = vmatprep.subr.bf16.mxu0 0
      %1123 = vmatpush1.bf16.msra.mxu0 0
      %1124 = vmatprep.subr.bf16.mxu0 0
      %1125 = vmatpush1.bf16.msra.mxu0 0
      %1126 = vmatprep.subr.bf16.mxu0 0
      %1127 = vmatpush1.bf16.msra.mxu0 0
      %1128 = vmatprep.subr.bf16.mxu0 0
      %1129 = vmatpush1.bf16.msra.mxu0 0
      %1130 = vmatprep.mubr.bf16.mxu0 0
      %1131 = vmatmul.mubr.bf16.gmra.mrb[0].mxu0 %v1092
      %v1132 = vpop.f32.mrb[0].mxu0
      %v1133 = vadd.f32 0.0, %v1132
      %v1134 = vpop.f32.mrb[0].mxu0
      %v1135 = vpop.f32.mrb[0].mxu0
      %v1136 = vpop.f32.mrb[0].mxu0
      %1137 = vdwg.mxu0
      %1138 = vrot.lane.b32.xlu0 %v1083, 116
      %v1139 = vpop.permute.xlu0 %1138
      %v1141 = vsel %vm1090, %v1082, 0
      %v1144 = vsel %vm1094, %v1139, 0
      %1146 = vmatprep.subr.bf16.mxu0 0
      %1147 = vmatpush1.bf16.msra.mxu0 %v1144
      %1148 = vmatprep.subr.bf16.mxu0 0
      %1149 = vmatpush1.bf16.msra.mxu0 0
      %1150 = vmatprep.subr.bf16.mxu0 0
      %1151 = vmatpush1.bf16.msra.mxu0 0
      %1152 = vmatprep.subr.bf16.mxu0 0
      %1153 = vmatpush1.bf16.msra.mxu0 0
      %1154 = vmatprep.subr.bf16.mxu0 0
      %1155 = vmatpush1.bf16.msra.mxu0 0
      %1156 = vmatprep.subr.bf16.mxu0 0
      %1157 = vmatpush1.bf16.msra.mxu0 0
      %1158 = vmatprep.subr.bf16.mxu0 0
      %1159 = vmatpush1.bf16.msra.mxu0 0
      %1160 = vmatprep.subr.bf16.mxu0 0
      %1161 = vmatpush1.bf16.msra.mxu0 0
      %1162 = vmatprep.subr.bf16.mxu0 0
      %1163 = vmatpush1.bf16.msra.mxu0 0
      %1164 = vmatprep.subr.bf16.mxu0 0
      %1165 = vmatpush1.bf16.msra.mxu0 0
      %1166 = vmatprep.subr.bf16.mxu0 0
      %1167 = vmatpush1.bf16.msra.mxu0 0
      %1168 = vmatprep.subr.bf16.mxu0 0
      %1169 = vmatpush1.bf16.msra.mxu0 0
      %1170 = vmatprep.subr.bf16.mxu0 0
      %1171 = vmatpush1.bf16.msra.mxu0 0
      %1172 = vmatprep.subr.bf16.mxu0 0
      %1173 = vmatpush1.bf16.msra.mxu0 0
      %1174 = vmatprep.subr.bf16.mxu0 0
      %1175 = vmatpush1.bf16.msra.mxu0 0
      %1176 = vmatprep.subr.bf16.mxu0 0
      %1177 = vmatpush1.bf16.msra.mxu0 0
      %1178 = vmatprep.mubr.bf16.mxu0 0
      %1179 = vmatmul.mubr.bf16.gmra.mrb[0].mxu0 %v1141
      %v1180 = vpop.f32.mrb[0].mxu0
      %v1181 = vadd.f32 %v1133, %v1180
      %v1182 = vpop.f32.mrb[0].mxu0
      %v1183 = vpop.f32.mrb[0].mxu0
      %v1184 = vpop.f32.mrb[0].mxu0
      %1185 = vdwg.mxu0
      %s1186 = scalar_lea.vmem %s4, 16
      %v1187 = vld [vmem:[%s1186] sm:$0x3f]
      %v1188 = vpack.c.bf16 %v1187, %v1187
      %1189 = vrot.lane.b32.xlu0 %v1083, 108
      %v1190 = vpop.permute.xlu0 %1189
      %v1192 = vsel %vm1090, %v1188, 0
      %v1195 = vsel %vm1094, %v1190, 0
      %1197 = vmatprep.subr.bf16.mxu0 0
      %1198 = vmatpush1.bf16.msra.mxu0 %v1195
      %1199 = vmatprep.subr.bf16.mxu0 0
      %1200 = vmatpush1.bf16.msra.mxu0 0
      %1201 = vmatprep.subr.bf16.mxu0 0
      %1202 = vmatpush1.bf16.msra.mxu0 0
      %1203 = vmatprep.subr.bf16.mxu0 0
      %1204 = vmatpush1.bf16.msra.mxu0 0
      %1205 = vmatprep.subr.bf16.mxu0 0
      %1206 = vmatpush1.bf16.msra.mxu0 0
      %1207 = vmatprep.subr.bf16.mxu0 0
      %1208 = vmatpush1.bf16.msra.mxu0 0
      %1209 = vmatprep.subr.bf16.mxu0 0
      %1210 = vmatpush1.bf16.msra.mxu0 0
      %1211 = vmatprep.subr.bf16.mxu0 0
      %1212 = vmatpush1.bf16.msra.mxu0 0
      %1213 = vmatprep.subr.bf16.mxu0 0
      %1214 = vmatpush1.bf16.msra.mxu0 0
      %1215 = vmatprep.subr.bf16.mxu0 0
      %1216 = vmatpush1.bf16.msra.mxu0 0
      %1217 = vmatprep.subr.bf16.mxu0 0
      %1218 = vmatpush1.bf16.msra.mxu0 0
      %1219 = vmatprep.subr.bf16.mxu0 0
      %1220 = vmatpush1.bf16.msra.mxu0 0
      %1221 = vmatprep.subr.bf16.mxu0 0
      %1222 = vmatpush1.bf16.msra.mxu0 0
      %1223 = vmatprep.subr.bf16.mxu0 0
      %1224 = vmatpush1.bf16.msra.mxu0 0
      %1225 = vmatprep.subr.bf16.mxu0 0
      %1226 = vmatpush1.bf16.msra.mxu0 0
      %1227 = vmatprep.subr.bf16.mxu0 0
      %1228 = vmatpush1.bf16.msra.mxu0 0
      %1229 = vmatprep.mubr.bf16.mxu0 0
      %1230 = vmatmul.mubr.bf16.gmra.mrb[0].mxu0 %v1192
      %v1231 = vpop.f32.mrb[0].mxu0
      %v1232 = vadd.f32 0.0, %v1231
      %v1233 = vpop.f32.mrb[0].mxu0
      %v1234 = vpop.f32.mrb[0].mxu0
      %v1235 = vpop.f32.mrb[0].mxu0
      %1236 = vdwg.mxu0
      %v1237 = vadd.f32 %v1181, %v1232
      %1239 = vset.pattern.permute.xlu0 0
      %1240 = vperm.xlu0 %1239, %v1073
      %v1241 = vpop.permute.xlu0 %1240
      %v1243 = vadd.f32 %v1237, %v1241
      %v1244 = vmax.f32 %v1243, 0.0
      %1246 = vrot.lane.b32.xlu0 %v1072, 16
      %v1247 = vpop.permute.xlu0 %1246
      %1249 = vst.msk [vmem:[#allocation2] sm:$0x3f] %vm1078, %v1247
      %v1250 = vld [vmem:[#allocation2] sm:$0x3f]
      %v1251 = vld [vmem:[%s4] sm:$0x3f]
      %v1252 = vpack.c.bf16 %v1251, %v1251
      %v1253 = vpack.c.bf16 %v1250, %v1250
      %v1254 = vld [vmem:[%s1084] sm:$0x3f]
      %v1255 = vpack.c.bf16 %v1254, %v1254
      %1257 = vrot.lane.b32.xlu0 %v1253, 112
      %v1258 = vpop.permute.xlu0 %1257
      %v1260 = vsel %vm1090, %v1255, 0
      %v1263 = vsel %vm1094, %v1258, 0
      %1265 = vmatprep.subr.bf16.mxu0 0
      %1266 = vmatpush1.bf16.msra.mxu0 %v1263
      %1267 = vmatprep.subr.bf16.mxu0 0
      %1268 = vmatpush1.bf16.msra.mxu0 0
      %1269 = vmatprep.subr.bf16.mxu0 0
      %1270 = vmatpush1.bf16.msra.mxu0 0
      %1271 = vmatprep.subr.bf16.mxu0 0
      %1272 = vmatpush1.bf16.msra.mxu0 0
      %1273 = vmatprep.subr.bf16.mxu0 0
      %1274 = vmatpush1.bf16.msra.mxu0 0
      %1275 = vmatprep.subr.bf16.mxu0 0
      %1276 = vmatpush1.bf16.msra.mxu0 0
      %1277 = vmatprep.subr.bf16.mxu0 0
      %1278 = vmatpush1.bf16.msra.mxu0 0
      %1279 = vmatprep.subr.bf16.mxu0 0
      %1280 = vmatpush1.bf16.msra.mxu0 0
      %1281 = vmatprep.subr.bf16.mxu0 0
      %1282 = vmatpush1.bf16.msra.mxu0 0
      %1283 = vmatprep.subr.bf16.mxu0 0
      %1284 = vmatpush1.bf16.msra.mxu0 0
      %1285 = vmatprep.subr.bf16.mxu0 0
      %1286 = vmatpush1.bf16.msra.mxu0 0
      %1287 = vmatprep.subr.bf16.mxu0 0
      %1288 = vmatpush1.bf16.msra.mxu0 0
      %1289 = vmatprep.subr.bf16.mxu0 0
      %1290 = vmatpush1.bf16.msra.mxu0 0
      %1291 = vmatprep.subr.bf16.mxu0 0
      %1292 = vmatpush1.bf16.msra.mxu0 0
      %1293 = vmatprep.subr.bf16.mxu0 0
      %1294 = vmatpush1.bf16.msra.mxu0 0
      %1295 = vmatprep.subr.bf16.mxu0 0
      %1296 = vmatpush1.bf16.msra.mxu0 0
      %1297 = vmatprep.mubr.bf16.mxu0 0
      %1298 = vmatmul.mubr.bf16.gmra.mrb[0].mxu0 %v1260
      %v1299 = vpop.f32.mrb[0].mxu0
      %v1300 = vadd.f32 0.0, %v1299
      %v1301 = vpop.f32.mrb[0].mxu0
      %v1302 = vpop.f32.mrb[0].mxu0
      %v1303 = vpop.f32.mrb[0].mxu0
      %1304 = vdwg.mxu0
      %1305 = vrot.lane.b32.xlu0 %v1253, 116
      %v1306 = vpop.permute.xlu0 %1305
      %v1308 = vsel %vm1090, %v1252, 0
      %v1311 = vsel %vm1094, %v1306, 0
      %1313 = vmatprep.subr.bf16.mxu0 0
      %1314 = vmatpush1.bf16.msra.mxu0 %v1311
      %1315 = vmatprep.subr.bf16.mxu0 0
      %1316 = vmatpush1.bf16.msra.mxu0 0
      %1317 = vmatprep.subr.bf16.mxu0 0
      %1318 = vmatpush1.bf16.msra.mxu0 0
      %1319 = vmatprep.subr.bf16.mxu0 0
      %1320 = vmatpush1.bf16.msra.mxu0 0
      %1321 = vmatprep.subr.bf16.mxu0 0
      %1322 = vmatpush1.bf16.msra.mxu0 0
      %1323 = vmatprep.subr.bf16.mxu0 0
      %1324 = vmatpush1.bf16.msra.mxu0 0
      %1325 = vmatprep.subr.bf16.mxu0 0
      %1326 = vmatpush1.bf16.msra.mxu0 0
      %1327 = vmatprep.subr.bf16.mxu0 0
      %1328 = vmatpush1.bf16.msra.mxu0 0
      %1329 = vmatprep.subr.bf16.mxu0 0
      %1330 = vmatpush1.bf16.msra.mxu0 0
      %1331 = vmatprep.subr.bf16.mxu0 0
      %1332 = vmatpush1.bf16.msra.mxu0 0
      %1333 = vmatprep.subr.bf16.mxu0 0
      %1334 = vmatpush1.bf16.msra.mxu0 0
      %1335 = vmatprep.subr.bf16.mxu0 0
      %1336 = vmatpush1.bf16.msra.mxu0 0
      %1337 = vmatprep.subr.bf16.mxu0 0
      %1338 = vmatpush1.bf16.msra.mxu0 0
      %1339 = vmatprep.subr.bf16.mxu0 0
      %1340 = vmatpush1.bf16.msra.mxu0 0
      %1341 = vmatprep.subr.bf16.mxu0 0
      %1342 = vmatpush1.bf16.msra.mxu0 0
      %1343 = vmatprep.subr.bf16.mxu0 0
      %1344 = vmatpush1.bf16.msra.mxu0 0
      %1345 = vmatprep.mubr.bf16.mxu0 0
      %1346 = vmatmul.mubr.bf16.gmra.mrb[0].mxu0 %v1308
      %v1347 = vpop.f32.mrb[0].mxu0
      %v1348 = vadd.f32 %v1300, %v1347
      %v1349 = vpop.f32.mrb[0].mxu0
      %v1350 = vpop.f32.mrb[0].mxu0
      %v1351 = vpop.f32.mrb[0].mxu0
      %1352 = vdwg.mxu0
      %v1353 = vld [vmem:[%s1186] sm:$0x3f]
      %v1354 = vpack.c.bf16 %v1353, %v1353
      %1355 = vrot.lane.b32.xlu0 %v1253, 108
      %v1356 = vpop.permute.xlu0 %1355
      %v1358 = vsel %vm1090, %v1354, 0
      %v1361 = vsel %vm1094, %v1356, 0
      %1363 = vmatprep.subr.bf16.mxu0 0
      %1364 = vmatpush1.bf16.msra.mxu0 %v1361
      %1365 = vmatprep.subr.bf16.mxu0 0
      %1366 = vmatpush1.bf16.msra.mxu0 0
      %1367 = vmatprep.subr.bf16.mxu0 0
      %1368 = vmatpush1.bf16.msra.mxu0 0
      %1369 = vmatprep.subr.bf16.mxu0 0
      %1370 = vmatpush1.bf16.msra.mxu0 0
      %1371 = vmatprep.subr.bf16.mxu0 0
      %1372 = vmatpush1.bf16.msra.mxu0 0
      %1373 = vmatprep.subr.bf16.mxu0 0
      %1374 = vmatpush1.bf16.msra.mxu0 0
      %1375 = vmatprep.subr.bf16.mxu0 0
      %1376 = vmatpush1.bf16.msra.mxu0 0
      %1377 = vmatprep.subr.bf16.mxu0 0
      %1378 = vmatpush1.bf16.msra.mxu0 0
      %1379 = vmatprep.subr.bf16.mxu0 0
      %1380 = vmatpush1.bf16.msra.mxu0 0
      %1381 = vmatprep.subr.bf16.mxu0 0
      %1382 = vmatpush1.bf16.msra.mxu0 0
      %1383 = vmatprep.subr.bf16.mxu0 0
      %1384 = vmatpush1.bf16.msra.mxu0 0
      %1385 = vmatprep.subr.bf16.mxu0 0
      %1386 = vmatpush1.bf16.msra.mxu0 0
      %1387 = vmatprep.subr.bf16.mxu0 0
      %1388 = vmatpush1.bf16.msra.mxu0 0
      %1389 = vmatprep.subr.bf16.mxu0 0
      %1390 = vmatpush1.bf16.msra.mxu0 0
      %1391 = vmatprep.subr.bf16.mxu0 0
      %1392 = vmatpush1.bf16.msra.mxu0 0
      %1393 = vmatprep.subr.bf16.mxu0 0
      %1394 = vmatpush1.bf16.msra.mxu0 0
      %1395 = vmatprep.mubr.bf16.mxu0 0
      %1396 = vmatmul.mubr.bf16.gmra.mrb[0].mxu0 %v1358
      %v1397 = vpop.f32.mrb[0].mxu0
      %v1398 = vadd.f32 0.0, %v1397
      %v1399 = vpop.f32.mrb[0].mxu0
      %v1400 = vpop.f32.mrb[0].mxu0
      %v1401 = vpop.f32.mrb[0].mxu0
      %1402 = vdwg.mxu0
      %v1403 = vadd.f32 %v1348, %v1398
      %v1404 = vadd.f32 %v1403, %v1241
      %v1405 = vmax.f32 %v1404, 0.0
      %v1406 = vadd.f32 %v1244, %v1405
      %v1407 = vsel %vm1035, %v1406, 0.0
      %1408 = vadd.xlane.f32.xlu0 %v1407
      %v1409 = vpop.xlane.xlu0 %1408
      %v1410 = vmul.f32 %v1409, %v1039
      %v1411 = vsub.f32 %v1244, %v1410
      %v1412 = vmul.f32 %v1411, %v1411
      %v1413 = vsel %vm1035, %v1412, 0.0
      %1414 = vadd.xlane.f32.xlu0 %v1413
      %v1415 = vpop.xlane.xlu0 %1414
      %v1416 = vsub.f32 %v1405, %v1410
      %v1417 = vmul.f32 %v1416, %v1416
      %v1418 = vsel %vm1035, %v1417, 0.0
      %1419 = vadd.xlane.f32.xlu0 %v1418
      %v1420 = vpop.xlane.xlu0 %1419
      %v1421 = vadd.f32 %v1415, %v1420
      %v1422 = vmul.f32 %v1421, %v1039
      %v1423 = vadd.f32 %v1422, 1e-05
      %v1424 = vrsqrt.pop %v1423
      %v1425 = vld [vmem:[%s16] sm:$0x3f]
      %v1426 = vld [vmem:[%s17] sm:$0x3f]
      %v1427 = vmul.f32 %v1411, %v1424
      %1429 = vset.pattern.permute.xlu0 0
      %1430 = vperm.xlu0 %1429, %v1425
      %v1431 = vpop.permute.xlu0 %1430
      %v1433 = vmul.f32 %v1427, %v1431
      %1435 = vset.pattern.permute.xlu0 0
      %1436 = vperm.xlu0 %1435, %v1426
      %v1437 = vpop.permute.xlu0 %1436
      %v1439 = vadd.f32 %v1433, %v1437
      %v1440 = vmul.f32 %v1416, %v1424
      %v1441 = vmul.f32 %v1440, %v1431
      %v1442 = vadd.f32 %v1441, %v1437
      %v1443 = vld [vmem:[%s11] sm:$0x3f]
      %v1444 = vld [vmem:[%s10] sm:$0x3f]
      %v1445 = vpack.c.bf16 %v1444, %v1444
      %v1446 = vpack.c.bf16 %v692, %v692
      %1448 = vset.pattern.permute.xlu0 0
      %1449 = vperm.xlu0 %1448, %v1443
      %v1450 = vpop.permute.xlu0 %1449
      %v1453 = vsel %vm718, %v1445, 0
      %v1456 = vsel %vm722, %v1446, 0
      %1458 = vmatprep.subr.bf16.mxu0 0
      %1459 = vmatpush1.bf16.msra.mxu0 %v1456
      %1460 = vmatprep.subr.bf16.mxu0 0
      %1461 = vmatpush1.bf16.msra.mxu0 0
      %1462 = vmatprep.subr.bf16.mxu0 0
      %1463 = vmatpush1.bf16.msra.mxu0 0
      %1464 = vmatprep.subr.bf16.mxu0 0
      %1465 = vmatpush1.bf16.msra.mxu0 0
      %1466 = vmatprep.subr.bf16.mxu0 0
      %1467 = vmatpush1.bf16.msra.mxu0 0
      %1468 = vmatprep.subr.bf16.mxu0 0
      %1469 = vmatpush1.bf16.msra.mxu0 0
      %1470 = vmatprep.subr.bf16.mxu0 0
      %1471 = vmatpush1.bf16.msra.mxu0 0
      %1472 = vmatprep.subr.bf16.mxu0 0
      %1473 = vmatpush1.bf16.msra.mxu0 0
      %1474 = vmatprep.subr.bf16.mxu0 0
      %1475 = vmatpush1.bf16.msra.mxu0 0
      %1476 = vmatprep.subr.bf16.mxu0 0
      %1477 = vmatpush1.bf16.msra.mxu0 0
      %1478 = vmatprep.subr.bf16.mxu0 0
      %1479 = vmatpush1.bf16.msra.mxu0 0
      %1480 = vmatprep.subr.bf16.mxu0 0
      %1481 = vmatpush1.bf16.msra.mxu0 0
      %1482 = vmatprep.subr.bf16.mxu0 0
      %1483 = vmatpush1.bf16.msra.mxu0 0
      %1484 = vmatprep.subr.bf16.mxu0 0
      %1485 = vmatpush1.bf16.msra.mxu0 0
      %1486 = vmatprep.subr.bf16.mxu0 0
      %1487 = vmatpush1.bf16.msra.mxu0 0
      %1488 = vmatprep.subr.bf16.mxu0 0
      %1489 = vmatpush1.bf16.msra.mxu0 0
      %1490 = vmatprep.mubr.bf16.mxu0 0
      %1491 = vmatmul.mubr.bf16.gmra.mrb[0].mxu0 %v1453
      %v1492 = vpop.f32.mrb[0].mxu0
      %v1493 = vadd.f32 %v1450, %v1492
      %v1494 = vpop.f32.mrb[0].mxu0
      %v1495 = vpop.f32.mrb[0].mxu0
      %v1496 = vpop.f32.mrb[0].mxu0
      %1497 = vdwg.mxu0
      %v1498 = vpack.c.bf16 %v700, %v700
      %v1500 = vsel %vm722, %v1498, 0
      %1502 = vmatprep.subr.bf16.mxu0 0
      %1503 = vmatpush1.bf16.msra.mxu0 %v1500
      %1504 = vmatprep.subr.bf16.mxu0 0
      %1505 = vmatpush1.bf16.msra.mxu0 0
      %1506 = vmatprep.subr.bf16.mxu0 0
      %1507 = vmatpush1.bf16.msra.mxu0 0
      %1508 = vmatprep.subr.bf16.mxu0 0
      %1509 = vmatpush1.bf16.msra.mxu0 0
      %1510 = vmatprep.subr.bf16.mxu0 0
      %1511 = vmatpush1.bf16.msra.mxu0 0
      %1512 = vmatprep.subr.bf16.mxu0 0
      %1513 = vmatpush1.bf16.msra.mxu0 0
      %1514 = vmatprep.subr.bf16.mxu0 0
      %1515 = vmatpush1.bf16.msra.mxu0 0
      %1516 = vmatprep.subr.bf16.mxu0 0
      %1517 = vmatpush1.bf16.msra.mxu0 0
      %1518 = vmatprep.subr.bf16.mxu0 0
      %1519 = vmatpush1.bf16.msra.mxu0 0
      %1520 = vmatprep.subr.bf16.mxu0 0
      %1521 = vmatpush1.bf16.msra.mxu0 0
      %1522 = vmatprep.subr.bf16.mxu0 0
      %1523 = vmatpush1.bf16.msra.mxu0 0
      %1524 = vmatprep.subr.bf16.mxu0 0
      %1525 = vmatpush1.bf16.msra.mxu0 0
      %1526 = vmatprep.subr.bf16.mxu0 0
      %1527 = vmatpush1.bf16.msra.mxu0 0
      %1528 = vmatprep.subr.bf16.mxu0 0
      %1529 = vmatpush1.bf16.msra.mxu0 0
      %1530 = vmatprep.subr.bf16.mxu0 0
      %1531 = vmatpush1.bf16.msra.mxu0 0
      %1532 = vmatprep.subr.bf16.mxu0 0
      %1533 = vmatpush1.bf16.msra.mxu0 0
      %1534 = vmatprep.mubr.bf16.mxu0 0
      %1535 = vmatmul.mubr.bf16.gmra.mrb[0].mxu0 %v1453
      %v1536 = vpop.f32.mrb[0].mxu0
      %v1537 = vadd.f32 %v1450, %v1536
      %v1538 = vpop.f32.mrb[0].mxu0
      %v1539 = vpop.f32.mrb[0].mxu0
      %v1540 = vpop.f32.mrb[0].mxu0
      %1541 = vdwg.mxu0
      %v1542 = vadd.f32 %v1439, %v1493
      %v1543 = vadd.f32 %v1442, %v1537
      %v1544 = vld [vmem:[%s7] sm:$0x3f]
      %1546 = vrot.lane.b32.xlu0 %v1542, 16
      %v1547 = vpop.permute.xlu0 %1546
      %1549 = vst.msk [vmem:[#allocation2] sm:$0x3f] %vm1078, %v1547
      %v1550 = vld [vmem:[#allocation2] sm:$0x3f]
      %v1551 = vld [vmem:[%s6] sm:$0x3f]
      %v1552 = vpack.c.bf16 %v1551, %v1551
      %v1553 = vpack.c.bf16 %v1550, %v1550
      %s1554 = scalar_lea.vmem %s6, 8
      %v1555 = vld [vmem:[%s1554] sm:$0x3f]
      %v1556 = vpack.c.bf16 %v1555, %v1555
      %1558 = vrot.lane.b32.xlu0 %v1553, 112
      %v1559 = vpop.permute.xlu0 %1558
      %v1561 = vsel %vm1090, %v1556, 0
      %v1564 = vsel %vm1094, %v1559, 0
      %1566 = vmatprep.subr.bf16.mxu0 0
      %1567 = vmatpush1.bf16.msra.mxu0 %v1564
      %1568 = vmatprep.subr.bf16.mxu0 0
      %1569 = vmatpush1.bf16.msra.mxu0 0
      %1570 = vmatprep.subr.bf16.mxu0 0
      %1571 = vmatpush1.bf16.msra.mxu0 0
      %1572 = vmatprep.subr.bf16.mxu0 0
      %1573 = vmatpush1.bf16.msra.mxu0 0
      %1574 = vmatprep.subr.bf16.mxu0 0
      %1575 = vmatpush1.bf16.msra.mxu0 0
      %1576 = vmatprep.subr.bf16.mxu0 0
      %1577 = vmatpush1.bf16.msra.mxu0 0
      %1578 = vmatprep.subr.bf16.mxu0 0
      %1579 = vmatpush1.bf16.msra.mxu0 0
      %1580 = vmatprep.subr.bf16.mxu0 0
      %1581 = vmatpush1.bf16.msra.mxu0 0
      %1582 = vmatprep.subr.bf16.mxu0 0
      %1583 = vmatpush1.bf16.msra.mxu0 0
      %1584 = vmatprep.subr.bf16.mxu0 0
      %1585 = vmatpush1.bf16.msra.mxu0 0
      %1586 = vmatprep.subr.bf16.mxu0 0
      %1587 = vmatpush1.bf16.msra.mxu0 0
      %1588 = vmatprep.subr.bf16.mxu0 0
      %1589 = vmatpush1.bf16.msra.mxu0 0
      %1590 = vmatprep.subr.bf16.mxu0 0
      %1591 = vmatpush1.bf16.msra.mxu0 0
      %1592 = vmatprep.subr.bf16.mxu0 0
      %1593 = vmatpush1.bf16.msra.mxu0 0
      %1594 = vmatprep.subr.bf16.mxu0 0
      %1595 = vmatpush1.bf16.msra.mxu0 0
      %1596 = vmatprep.subr.bf16.mxu0 0
      %1597 = vmatpush1.bf16.msra.mxu0 0
      %1598 = vmatprep.mubr.bf16.mxu0 0
      %1599 = vmatmul.mubr.bf16.gmra.mrb[0].mxu0 %v1561
      %v1600 = vpop.f32.mrb[0].mxu0
      %v1601 = vadd.f32 0.0, %v1600
      %v1602 = vpop.f32.mrb[0].mxu0
      %v1603 = vpop.f32.mrb[0].mxu0
      %v1604 = vpop.f32.mrb[0].mxu0
      %1605 = vdwg.mxu0
      %1606 = vrot.lane.b32.xlu0 %v1553, 120
      %v1607 = vpop.permute.xlu0 %1606
      %v1609 = vsel %vm1090, %v1552, 0
      %v1612 = vsel %vm1094, %v1607, 0
      %1614 = vmatprep.subr.bf16.mxu0 0
      %1615 = vmatpush1.bf16.msra.mxu0 %v1612
      %1616 = vmatprep.subr.bf16.mxu0 0
      %1617 = vmatpush1.bf16.msra.mxu0 0
      %1618 = vmatprep.subr.bf16.mxu0 0
      %1619 = vmatpush1.bf16.msra.mxu0 0
      %1620 = vmatprep.subr.bf16.mxu0 0
      %1621 = vmatpush1.bf16.msra.mxu0 0
      %1622 = vmatprep.subr.bf16.mxu0 0
      %1623 = vmatpush1.bf16.msra.mxu0 0
      %1624 = vmatprep.subr.bf16.mxu0 0
      %1625 = vmatpush1.bf16.msra.mxu0 0
      %1626 = vmatprep.subr.bf16.mxu0 0
      %1627 = vmatpush1.bf16.msra.mxu0 0
      %1628 = vmatprep.subr.bf16.mxu0 0
      %1629 = vmatpush1.bf16.msra.mxu0 0
      %1630 = vmatprep.subr.bf16.mxu0 0
      %1631 = vmatpush1.bf16.msra.mxu0 0
      %1632 = vmatprep.subr.bf16.mxu0 0
      %1633 = vmatpush1.bf16.msra.mxu0 0
      %1634 = vmatprep.subr.bf16.mxu0 0
      %1635 = vmatpush1.bf16.msra.mxu0 0
      %1636 = vmatprep.subr.bf16.mxu0 0
      %1637 = vmatpush1.bf16.msra.mxu0 0
      %1638 = vmatprep.subr.bf16.mxu0 0
      %1639 = vmatpush1.bf16.msra.mxu0 0
      %1640 = vmatprep.subr.bf16.mxu0 0
      %1641 = vmatpush1.bf16.msra.mxu0 0
      %1642 = vmatprep.subr.bf16.mxu0 0
      %1643 = vmatpush1.bf16.msra.mxu0 0
      %1644 = vmatprep.subr.bf16.mxu0 0
      %1645 = vmatpush1.bf16.msra.mxu0 0
      %1646 = vmatprep.mubr.bf16.mxu0 0
      %1647 = vmatmul.mubr.bf16.gmra.mrb[0].mxu0 %v1609
      %v1648 = vpop.f32.mrb[0].mxu0
      %v1649 = vadd.f32 %v1601, %v1648
      %v1650 = vpop.f32.mrb[0].mxu0
      %v1651 = vpop.f32.mrb[0].mxu0
      %v1652 = vpop.f32.mrb[0].mxu0
      %1653 = vdwg.mxu0
      %s1654 = scalar_lea.vmem %s6, 16
      %v1655 = vld [vmem:[%s1654] sm:$0x3f]
      %v1656 = vpack.c.bf16 %v1655, %v1655
      %1657 = vrot.lane.b32.xlu0 %v1553, 104
      %v1658 = vpop.permute.xlu0 %1657
      %v1660 = vsel %vm1090, %v1656, 0
      %v1663 = vsel %vm1094, %v1658, 0
      %1665 = vmatprep.subr.bf16.mxu0 0
      %1666 = vmatpush1.bf16.msra.mxu0 %v1663
      %1667 = vmatprep.subr.bf16.mxu0 0
      %1668 = vmatpush1.bf16.msra.mxu0 0
      %1669 = vmatprep.subr.bf16.mxu0 0
      %1670 = vmatpush1.bf16.msra.mxu0 0
      %1671 = vmatprep.subr.bf16.mxu0 0
      %1672 = vmatpush1.bf16.msra.mxu0 0
      %1673 = vmatprep.subr.bf16.mxu0 0
      %1674 = vmatpush1.bf16.msra.mxu0 0
      %1675 = vmatprep.subr.bf16.mxu0 0
      %1676 = vmatpush1.bf16.msra.mxu0 0
      %1677 = vmatprep.subr.bf16.mxu0 0
      %1678 = vmatpush1.bf16.msra.mxu0 0
      %1679 = vmatprep.subr.bf16.mxu0 0
      %1680 = vmatpush1.bf16.msra.mxu0 0
      %1681 = vmatprep.subr.bf16.mxu0 0
      %1682 = vmatpush1.bf16.msra.mxu0 0
      %1683 = vmatprep.subr.bf16.mxu0 0
      %1684 = vmatpush1.bf16.msra.mxu0 0
      %1685 = vmatprep.subr.bf16.mxu0 0
      %1686 = vmatpush1.bf16.msra.mxu0 0
      %1687 = vmatprep.subr.bf16.mxu0 0
      %1688 = vmatpush1.bf16.msra.mxu0 0
      %1689 = vmatprep.subr.bf16.mxu0 0
      %1690 = vmatpush1.bf16.msra.mxu0 0
      %1691 = vmatprep.subr.bf16.mxu0 0
      %1692 = vmatpush1.bf16.msra.mxu0 0
      %1693 = vmatprep.subr.bf16.mxu0 0
      %1694 = vmatpush1.bf16.msra.mxu0 0
      %1695 = vmatprep.subr.bf16.mxu0 0
      %1696 = vmatpush1.bf16.msra.mxu0 0
      %1697 = vmatprep.mubr.bf16.mxu0 0
      %1698 = vmatmul.mubr.bf16.gmra.mrb[0].mxu0 %v1660
      %v1699 = vpop.f32.mrb[0].mxu0
      %v1700 = vadd.f32 0.0, %v1699
      %v1701 = vpop.f32.mrb[0].mxu0
      %v1702 = vpop.f32.mrb[0].mxu0
      %v1703 = vpop.f32.mrb[0].mxu0
      %1704 = vdwg.mxu0
      %v1705 = vadd.f32 %v1649, %v1700
      %1707 = vset.pattern.permute.xlu0 0
      %1708 = vperm.xlu0 %1707, %v1544
      %v1709 = vpop.permute.xlu0 %1708
      %v1711 = vadd.f32 %v1705, %v1709
      %v1712 = vmax.f32 %v1711, 0.0
      %1714 = vrot.lane.b32.xlu0 %v1543, 16
      %v1715 = vpop.permute.xlu0 %1714
      %1717 = vst.msk [vmem:[#allocation2] sm:$0x3f] %vm1078, %v1715
      %v1718 = vld [vmem:[#allocation2] sm:$0x3f]
      %v1719 = vld [vmem:[%s6] sm:$0x3f]
      %v1720 = vpack.c.bf16 %v1719, %v1719
      %v1721 = vpack.c.bf16 %v1718, %v1718
      %v1722 = vld [vmem:[%s1554] sm:$0x3f]
      %v1723 = vpack.c.bf16 %v1722, %v1722
      %1725 = vrot.lane.b32.xlu0 %v1721, 112
      %v1726 = vpop.permute.xlu0 %1725
      %v1728 = vsel %vm1090, %v1723, 0
      %v1731 = vsel %vm1094, %v1726, 0
      %1733 = vmatprep.subr.bf16.mxu0 0
      %1734 = vmatpush1.bf16.msra.mxu0 %v1731
      %1735 = vmatprep.subr.bf16.mxu0 0
      %1736 = vmatpush1.bf16.msra.mxu0 0
      %1737 = vmatprep.subr.bf16.mxu0 0
      %1738 = vmatpush1.bf16.msra.mxu0 0
      %1739 = vmatprep.subr.bf16.mxu0 0
      %1740 = vmatpush1.bf16.msra.mxu0 0
      %1741 = vmatprep.subr.bf16.mxu0 0
      %1742 = vmatpush1.bf16.msra.mxu0 0
      %1743 = vmatprep.subr.bf16.mxu0 0
      %1744 = vmatpush1.bf16.msra.mxu0 0
      %1745 = vmatprep.subr.bf16.mxu0 0
      %1746 = vmatpush1.bf16.msra.mxu0 0
      %1747 = vmatprep.subr.bf16.mxu0 0
      %1748 = vmatpush1.bf16.msra.mxu0 0
      %1749 = vmatprep.subr.bf16.mxu0 0
      %1750 = vmatpush1.bf16.msra.mxu0 0
      %1751 = vmatprep.subr.bf16.mxu0 0
      %1752 = vmatpush1.bf16.msra.mxu0 0
      %1753 = vmatprep.subr.bf16.mxu0 0
      %1754 = vmatpush1.bf16.msra.mxu0 0
      %1755 = vmatprep.subr.bf16.mxu0 0
      %1756 = vmatpush1.bf16.msra.mxu0 0
      %1757 = vmatprep.subr.bf16.mxu0 0
      %1758 = vmatpush1.bf16.msra.mxu0 0
      %1759 = vmatprep.subr.bf16.mxu0 0
      %1760 = vmatpush1.bf16.msra.mxu0 0
      %1761 = vmatprep.subr.bf16.mxu0 0
      %1762 = vmatpush1.bf16.msra.mxu0 0
      %1763 = vmatprep.subr.bf16.mxu0 0
      %1764 = vmatpush1.bf16.msra.mxu0 0
      %1765 = vmatprep.mubr.bf16.mxu0 0
      %1766 = vmatmul.mubr.bf16.gmra.mrb[0].mxu0 %v1728
      %v1767 = vpop.f32.mrb[0].mxu0
      %v1768 = vadd.f32 0.0, %v1767
      %v1769 = vpop.f32.mrb[0].mxu0
      %v1770 = vpop.f32.mrb[0].mxu0
      %v1771 = vpop.f32.mrb[0].mxu0
      %1772 = vdwg.mxu0
      %1773 = vrot.lane.b32.xlu0 %v1721, 120
      %v1774 = vpop.permute.xlu0 %1773
      %v1776 = vsel %vm1090, %v1720, 0
      %v1779 = vsel %vm1094, %v1774, 0
      %1781 = vmatprep.subr.bf16.mxu0 0
      %1782 = vmatpush1.bf16.msra.mxu0 %v1779
      %1783 = vmatprep.subr.bf16.mxu0 0
      %1784 = vmatpush1.bf16.msra.mxu0 0
      %1785 = vmatprep.subr.bf16.mxu0 0
      %1786 = vmatpush1.bf16.msra.mxu0 0
      %1787 = vmatprep.subr.bf16.mxu0 0
      %1788 = vmatpush1.bf16.msra.mxu0 0
      %1789 = vmatprep.subr.bf16.mxu0 0
      %1790 = vmatpush1.bf16.msra.mxu0 0
      %1791 = vmatprep.subr.bf16.mxu0 0
      %1792 = vmatpush1.bf16.msra.mxu0 0
      %1793 = vmatprep.subr.bf16.mxu0 0
      %1794 = vmatpush1.bf16.msra.mxu0 0
      %1795 = vmatprep.subr.bf16.mxu0 0
      %1796 = vmatpush1.bf16.msra.mxu0 0
      %1797 = vmatprep.subr.bf16.mxu0 0
      %1798 = vmatpush1.bf16.msra.mxu0 0
      %1799 = vmatprep.subr.bf16.mxu0 0
      %1800 = vmatpush1.bf16.msra.mxu0 0
      %1801 = vmatprep.subr.bf16.mxu0 0
      %1802 = vmatpush1.bf16.msra.mxu0 0
      %1803 = vmatprep.subr.bf16.mxu0 0
      %1804 = vmatpush1.bf16.msra.mxu0 0
      %1805 = vmatprep.subr.bf16.mxu0 0
      %1806 = vmatpush1.bf16.msra.mxu0 0
      %1807 = vmatprep.subr.bf16.mxu0 0
      %1808 = vmatpush1.bf16.msra.mxu0 0
      %1809 = vmatprep.subr.bf16.mxu0 0
      %1810 = vmatpush1.bf16.msra.mxu0 0
      %1811 = vmatprep.subr.bf16.mxu0 0
      %1812 = vmatpush1.bf16.msra.mxu0 0
      %1813 = vmatprep.mubr.bf16.mxu0 0
      %1814 = vmatmul.mubr.bf16.gmra.mrb[0].mxu0 %v1776
      %v1815 = vpop.f32.mrb[0].mxu0
      %v1816 = vadd.f32 %v1768, %v1815
      %v1817 = vpop.f32.mrb[0].mxu0
      %v1818 = vpop.f32.mrb[0].mxu0
      %v1819 = vpop.f32.mrb[0].mxu0
      %1820 = vdwg.mxu0
      %v1821 = vld [vmem:[%s1654] sm:$0x3f]
      %v1822 = vpack.c.bf16 %v1821, %v1821
      %1823 = vrot.lane.b32.xlu0 %v1721, 104
      %v1824 = vpop.permute.xlu0 %1823
      %v1826 = vsel %vm1090, %v1822, 0
      %v1829 = vsel %vm1094, %v1824, 0
      %1831 = vmatprep.subr.bf16.mxu0 0
      %1832 = vmatpush1.bf16.msra.mxu0 %v1829
      %1833 = vmatprep.subr.bf16.mxu0 0
      %1834 = vmatpush1.bf16.msra.mxu0 0
      %1835 = vmatprep.subr.bf16.mxu0 0
      %1836 = vmatpush1.bf16.msra.mxu0 0
      %1837 = vmatprep.subr.bf16.mxu0 0
      %1838 = vmatpush1.bf16.msra.mxu0 0
      %1839 = vmatprep.subr.bf16.mxu0 0
      %1840 = vmatpush1.bf16.msra.mxu0 0
      %1841 = vmatprep.subr.bf16.mxu0 0
      %1842 = vmatpush1.bf16.msra.mxu0 0
      %1843 = vmatprep.subr.bf16.mxu0 0
      %1844 = vmatpush1.bf16.msra.mxu0 0
      %1845 = vmatprep.subr.bf16.mxu0 0
      %1846 = vmatpush1.bf16.msra.mxu0 0
      %1847 = vmatprep.subr.bf16.mxu0 0
      %1848 = vmatpush1.bf16.msra.mxu0 0
      %1849 = vmatprep.subr.bf16.mxu0 0
      %1850 = vmatpush1.bf16.msra.mxu0 0
      %1851 = vmatprep.subr.bf16.mxu0 0
      %1852 = vmatpush1.bf16.msra.mxu0 0
      %1853 = vmatprep.subr.bf16.mxu0 0
      %1854 = vmatpush1.bf16.msra.mxu0 0
      %1855 = vmatprep.subr.bf16.mxu0 0
      %1856 = vmatpush1.bf16.msra.mxu0 0
      %1857 = vmatprep.subr.bf16.mxu0 0
      %1858 = vmatpush1.bf16.msra.mxu0 0
      %1859 = vmatprep.subr.bf16.mxu0 0
      %1860 = vmatpush1.bf16.msra.mxu0 0
      %1861 = vmatprep.subr.bf16.mxu0 0
      %1862 = vmatpush1.bf16.msra.mxu0 0
      %1863 = vmatprep.mubr.bf16.mxu0 0
      %1864 = vmatmul.mubr.bf16.gmra.mrb[0].mxu0 %v1826
      %v1865 = vpop.f32.mrb[0].mxu0
      %v1866 = vadd.f32 0.0, %v1865
      %v1867 = vpop.f32.mrb[0].mxu0
      %v1868 = vpop.f32.mrb[0].mxu0
      %v1869 = vpop.f32.mrb[0].mxu0
      %1870 = vdwg.mxu0
      %v1871 = vadd.f32 %v1816, %v1866
      %v1872 = vadd.f32 %v1871, %v1709
      %v1873 = vmax.f32 %v1872, 0.0
      %v1874 = vadd.f32 %v1712, %v1873
      %v1875 = vsel %vm1035, %v1874, 0.0
      %1876 = vadd.xlane.f32.xlu0 %v1875
      %v1877 = vpop.xlane.xlu0 %1876
      %v1878 = vmul.f32 %v1877, %v1039
      %v1879 = vsub.f32 %v1712, %v1878
      %v1880 = vmul.f32 %v1879, %v1879
      %v1881 = vsel %vm1035, %v1880, 0.0
      %1882 = vadd.xlane.f32.xlu0 %v1881
      %v1883 = vpop.xlane.xlu0 %1882
      %v1884 = vsub.f32 %v1873, %v1878
      %v1885 = vmul.f32 %v1884, %v1884
      %v1886 = vsel %vm1035, %v1885, 0.0
      %1887 = vadd.xlane.f32.xlu0 %v1886
      %v1888 = vpop.xlane.xlu0 %1887
      %v1889 = vadd.f32 %v1883, %v1888
      %v1890 = vmul.f32 %v1889, %v1039
      %v1891 = vadd.f32 %v1890, 1e-05
      %v1892 = vrsqrt.pop %v1891
      %v1893 = vld [vmem:[%s18] sm:$0x3f]
      %v1894 = vld [vmem:[%s19] sm:$0x3f]
      %v1895 = vmul.f32 %v1879, %v1892
      %1897 = vset.pattern.permute.xlu0 0
      %1898 = vperm.xlu0 %1897, %v1893
      %v1899 = vpop.permute.xlu0 %1898
      %v1901 = vmul.f32 %v1895, %v1899
      %1903 = vset.pattern.permute.xlu0 0
      %1904 = vperm.xlu0 %1903, %v1894
      %v1905 = vpop.permute.xlu0 %1904
      %v1907 = vadd.f32 %v1901, %v1905
      %v1908 = vmul.f32 %v1884, %v1892
      %v1909 = vmul.f32 %v1908, %v1899
      %v1910 = vadd.f32 %v1909, %v1905
      %v1911 = vld [vmem:[%s9] sm:$0xf]
      %1913 = vrot.lane.b32.xlu0 %v1907, 16
      %v1914 = vpop.permute.xlu0 %1913
      %1916 = vst.msk [vmem:[#allocation2] sm:$0x3f] %vm1078, %v1914
      %v1917 = vld [vmem:[#allocation2] sm:$0x3f]
      %v1918 = vld [vmem:[%s8] sm:$0xf]
      %v1919 = vpack.c.bf16 %v1918, %v1918
      %v1920 = vpack.c.bf16 %v1917, %v1917
      %s1921 = scalar_lea.vmem %s8, 4
      %v1922 = vld [vmem:[%s1921] sm:$0xf]
      %v1923 = vpack.c.bf16 %v1922, %v1922
      %1925 = vrot.lane.b32.xlu0 %v1920, 112
      %v1926 = vpop.permute.xlu0 %1925
      %v1928 = vsel %vm1090, %v1923, 0
      %v1931 = vsel %vm1094, %v1926, 0
      %1933 = vmatprep.subr.bf16.mxu0 0
      %1934 = vmatpush1.bf16.msra.mxu0 %v1931
      %1935 = vmatprep.subr.bf16.mxu0 0
      %1936 = vmatpush1.bf16.msra.mxu0 0
      %1937 = vmatprep.subr.bf16.mxu0 0
      %1938 = vmatpush1.bf16.msra.mxu0 0
      %1939 = vmatprep.subr.bf16.mxu0 0
      %1940 = vmatpush1.bf16.msra.mxu0 0
      %1941 = vmatprep.subr.bf16.mxu0 0
      %1942 = vmatpush1.bf16.msra.mxu0 0
      %1943 = vmatprep.subr.bf16.mxu0 0
      %1944 = vmatpush1.bf16.msra.mxu0 0
      %1945 = vmatprep.subr.bf16.mxu0 0
      %1946 = vmatpush1.bf16.msra.mxu0 0
      %1947 = vmatprep.subr.bf16.mxu0 0
      %1948 = vmatpush1.bf16.msra.mxu0 0
      %1949 = vmatprep.subr.bf16.mxu0 0
      %1950 = vmatpush1.bf16.msra.mxu0 0
      %1951 = vmatprep.subr.bf16.mxu0 0
      %1952 = vmatpush1.bf16.msra.mxu0 0
      %1953 = vmatprep.subr.bf16.mxu0 0
      %1954 = vmatpush1.bf16.msra.mxu0 0
      %1955 = vmatprep.subr.bf16.mxu0 0
      %1956 = vmatpush1.bf16.msra.mxu0 0
      %1957 = vmatprep.subr.bf16.mxu0 0
      %1958 = vmatpush1.bf16.msra.mxu0 0
      %1959 = vmatprep.subr.bf16.mxu0 0
      %1960 = vmatpush1.bf16.msra.mxu0 0
      %1961 = vmatprep.subr.bf16.mxu0 0
      %1962 = vmatpush1.bf16.msra.mxu0 0
      %1963 = vmatprep.subr.bf16.mxu0 0
      %1964 = vmatpush1.bf16.msra.mxu0 0
      %1965 = vmatprep.mubr.bf16.mxu0 0
      %1966 = vmatmul.mubr.bf16.gmra.mrb[0].mxu0 %v1928
      %v1967 = vpop.f32.mrb[0].mxu0
      %v1968 = vadd.f32 0.0, %v1967
      %v1969 = vpop.f32.mrb[0].mxu0
      %v1970 = vpop.f32.mrb[0].mxu0
      %v1971 = vpop.f32.mrb[0].mxu0
      %1972 = vdwg.mxu0
      %v1974 = vsel %vm1090, %v1919, 0
      %v1977 = vsel %vm1094, %v1920, 0
      %1979 = vmatprep.subr.bf16.mxu0 0
      %1980 = vmatpush1.bf16.msra.mxu0 %v1977
      %1981 = vmatprep.subr.bf16.mxu0 0
      %1982 = vmatpush1.bf16.msra.mxu0 0
      %1983 = vmatprep.subr.bf16.mxu0 0
      %1984 = vmatpush1.bf16.msra.mxu0 0
      %1985 = vmatprep.subr.bf16.mxu0 0
      %1986 = vmatpush1.bf16.msra.mxu0 0
      %1987 = vmatprep.subr.bf16.mxu0 0
      %1988 = vmatpush1.bf16.msra.mxu0 0
      %1989 = vmatprep.subr.bf16.mxu0 0
      %1990 = vmatpush1.bf16.msra.mxu0 0
      %1991 = vmatprep.subr.bf16.mxu0 0
      %1992 = vmatpush1.bf16.msra.mxu0 0
      %1993 = vmatprep.subr.bf16.mxu0 0
      %1994 = vmatpush1.bf16.msra.mxu0 0
      %1995 = vmatprep.subr.bf16.mxu0 0
      %1996 = vmatpush1.bf16.msra.mxu0 0
      %1997 = vmatprep.subr.bf16.mxu0 0
      %1998 = vmatpush1.bf16.msra.mxu0 0
      %1999 = vmatprep.subr.bf16.mxu0 0
      %2000 = vmatpush1.bf16.msra.mxu0 0
      %2001 = vmatprep.subr.bf16.mxu0 0
      %2002 = vmatpush1.bf16.msra.mxu0 0
      %2003 = vmatprep.subr.bf16.mxu0 0
      %2004 = vmatpush1.bf16.msra.mxu0 0
      %2005 = vmatprep.subr.bf16.mxu0 0
      %2006 = vmatpush1.bf16.msra.mxu0 0
      %2007 = vmatprep.subr.bf16.mxu0 0
      %2008 = vmatpush1.bf16.msra.mxu0 0
      %2009 = vmatprep.subr.bf16.mxu0 0
      %2010 = vmatpush1.bf16.msra.mxu0 0
      %2011 = vmatprep.mubr.bf16.mxu0 0
      %2012 = vmatmul.mubr.bf16.gmra.mrb[0].mxu0 %v1974
      %v2013 = vpop.f32.mrb[0].mxu0
      %v2014 = vadd.f32 %v1968, %v2013
      %v2015 = vpop.f32.mrb[0].mxu0
      %v2016 = vpop.f32.mrb[0].mxu0
      %v2017 = vpop.f32.mrb[0].mxu0
      %2018 = vdwg.mxu0
      %s2019 = scalar_lea.vmem %s8, 8
      %v2020 = vld [vmem:[%s2019] sm:$0xf]
      %v2021 = vpack.c.bf16 %v2020, %v2020
      %2022 = vrot.lane.b32.xlu0 %v1920, 96
      %v2023 = vpop.permute.xlu0 %2022
      %v2025 = vsel %vm1090, %v2021, 0
      %v2028 = vsel %vm1094, %v2023, 0
      %2030 = vmatprep.subr.bf16.mxu0 0
      %2031 = vmatpush1.bf16.msra.mxu0 %v2028
      %2032 = vmatprep.subr.bf16.mxu0 0
      %2033 = vmatpush1.bf16.msra.mxu0 0
      %2034 = vmatprep.subr.bf16.mxu0 0
      %2035 = vmatpush1.bf16.msra.mxu0 0
      %2036 = vmatprep.subr.bf16.mxu0 0
      %2037 = vmatpush1.bf16.msra.mxu0 0
      %2038 = vmatprep.subr.bf16.mxu0 0
      %2039 = vmatpush1.bf16.msra.mxu0 0
      %2040 = vmatprep.subr.bf16.mxu0 0
      %2041 = vmatpush1.bf16.msra.mxu0 0
      %2042 = vmatprep.subr.bf16.mxu0 0
      %2043 = vmatpush1.bf16.msra.mxu0 0
      %2044 = vmatprep.subr.bf16.mxu0 0
      %2045 = vmatpush1.bf16.msra.mxu0 0
      %2046 = vmatprep.subr.bf16.mxu0 0
      %2047 = vmatpush1.bf16.msra.mxu0 0
      %2048 = vmatprep.subr.bf16.mxu0 0
      %2049 = vmatpush1.bf16.msra.mxu0 0
      %2050 = vmatprep.subr.bf16.mxu0 0
      %2051 = vmatpush1.bf16.msra.mxu0 0
      %2052 = vmatprep.subr.bf16.mxu0 0
      %2053 = vmatpush1.bf16.msra.mxu0 0
      %2054 = vmatprep.subr.bf16.mxu0 0
      %2055 = vmatpush1.bf16.msra.mxu0 0
      %2056 = vmatprep.subr.bf16.mxu0 0
      %2057 = vmatpush1.bf16.msra.mxu0 0
      %2058 = vmatprep.subr.bf16.mxu0 0
      %2059 = vmatpush1.bf16.msra.mxu0 0
      %2060 = vmatprep.subr.bf16.mxu0 0
      %2061 = vmatpush1.bf16.msra.mxu0 0
      %2062 = vmatprep.mubr.bf16.mxu0 0
      %2063 = vmatmul.mubr.bf16.gmra.mrb[0].mxu0 %v2025
      %v2064 = vpop.f32.mrb[0].mxu0
      %v2065 = vadd.f32 0.0, %v2064
      %v2066 = vpop.f32.mrb[0].mxu0
      %v2067 = vpop.f32.mrb[0].mxu0
      %v2068 = vpop.f32.mrb[0].mxu0
      %2069 = vdwg.mxu0
      %v2070 = vadd.f32 %v2014, %v2065
      %2072 = vset.pattern.permute.xlu0 0
      %2073 = vperm.xlu0 %2072, %v1911
      %v2074 = vpop.permute.xlu0 %2073
      %v2076 = vadd.f32 %v2070, %v2074
      %v2077 = vmax.f32 %v2076, 0.0
      %2079 = vrot.lane.b32.xlu0 %v1910, 16
      %v2080 = vpop.permute.xlu0 %2079
      %2082 = vst.msk [vmem:[#allocation2] sm:$0x3f] %vm1078, %v2080
      %v2083 = vld [vmem:[#allocation2] sm:$0x3f]
      %v2084 = vld [vmem:[%s8] sm:$0xf]
      %v2085 = vpack.c.bf16 %v2084, %v2084
      %v2086 = vpack.c.bf16 %v2083, %v2083
      %v2087 = vld [vmem:[%s1921] sm:$0xf]
      %v2088 = vpack.c.bf16 %v2087, %v2087
      %2090 = vrot.lane.b32.xlu0 %v2086, 112
      %v2091 = vpop.permute.xlu0 %2090
      %v2093 = vsel %vm1090, %v2088, 0
      %v2096 = vsel %vm1094, %v2091, 0
      %2098 = vmatprep.subr.bf16.mxu0 0
      %2099 = vmatpush1.bf16.msra.mxu0 %v2096
      %2100 = vmatprep.subr.bf16.mxu0 0
      %2101 = vmatpush1.bf16.msra.mxu0 0
      %2102 = vmatprep.subr.bf16.mxu0 0
      %2103 = vmatpush1.bf16.msra.mxu0 0
      %2104 = vmatprep.subr.bf16.mxu0 0
      %2105 = vmatpush1.bf16.msra.mxu0 0
      %2106 = vmatprep.subr.bf16.mxu0 0
      %2107 = vmatpush1.bf16.msra.mxu0 0
      %2108 = vmatprep.subr.bf16.mxu0 0
      %2109 = vmatpush1.bf16.msra.mxu0 0
      %2110 = vmatprep.subr.bf16.mxu0 0
      %2111 = vmatpush1.bf16.msra.mxu0 0
      %2112 = vmatprep.subr.bf16.mxu0 0
      %2113 = vmatpush1.bf16.msra.mxu0 0
      %2114 = vmatprep.subr.bf16.mxu0 0
      %2115 = vmatpush1.bf16.msra.mxu0 0
      %2116 = vmatprep.subr.bf16.mxu0 0
      %2117 = vmatpush1.bf16.msra.mxu0 0
      %2118 = vmatprep.subr.bf16.mxu0 0
      %2119 = vmatpush1.bf16.msra.mxu0 0
      %2120 = vmatprep.subr.bf16.mxu0 0
      %2121 = vmatpush1.bf16.msra.mxu0 0
      %2122 = vmatprep.subr.bf16.mxu0 0
      %2123 = vmatpush1.bf16.msra.mxu0 0
      %2124 = vmatprep.subr.bf16.mxu0 0
      %2125 = vmatpush1.bf16.msra.mxu0 0
      %2126 = vmatprep.subr.bf16.mxu0 0
      %2127 = vmatpush1.bf16.msra.mxu0 0
      %2128 = vmatprep.subr.bf16.mxu0 0
      %2129 = vmatpush1.bf16.msra.mxu0 0
      %2130 = vmatprep.mubr.bf16.mxu0 0
      %2131 = vmatmul.mubr.bf16.gmra.mrb[0].mxu0 %v2093
      %v2132 = vpop.f32.mrb[0].mxu0
      %v2133 = vadd.f32 0.0, %v2132
      %v2134 = vpop.f32.mrb[0].mxu0
      %v2135 = vpop.f32.mrb[0].mxu0
      %v2136 = vpop.f32.mrb[0].mxu0
      %2137 = vdwg.mxu0
      %v2139 = vsel %vm1090, %v2085, 0
      %v2142 = vsel %vm1094, %v2086, 0
      %2144 = vmatprep.subr.bf16.mxu0 0
      %2145 = vmatpush1.bf16.msra.mxu0 %v2142
      %2146 = vmatprep.subr.bf16.mxu0 0
      %2147 = vmatpush1.bf16.msra.mxu0 0
      %2148 = vmatprep.subr.bf16.mxu0 0
      %2149 = vmatpush1.bf16.msra.mxu0 0
      %2150 = vmatprep.subr.bf16.mxu0 0
      %2151 = vmatpush1.bf16.msra.mxu0 0
      %2152 = vmatprep.subr.bf16.mxu0 0
      %2153 = vmatpush1.bf16.msra.mxu0 0
      %2154 = vmatprep.subr.bf16.mxu0 0
      %2155 = vmatpush1.bf16.msra.mxu0 0
      %2156 = vmatprep.subr.bf16.mxu0 0
      %2157 = vmatpush1.bf16.msra.mxu0 0
      %2158 = vmatprep.subr.bf16.mxu0 0
      %2159 = vmatpush1.bf16.msra.mxu0 0
      %2160 = vmatprep.subr.bf16.mxu0 0
      %2161 = vmatpush1.bf16.msra.mxu0 0
      %2162 = vmatprep.subr.bf16.mxu0 0
      %2163 = vmatpush1.bf16.msra.mxu0 0
      %2164 = vmatprep.subr.bf16.mxu0 0
      %2165 = vmatpush1.bf16.msra.mxu0 0
      %2166 = vmatprep.subr.bf16.mxu0 0
      %2167 = vmatpush1.bf16.msra.mxu0 0
      %2168 = vmatprep.subr.bf16.mxu0 0
      %2169 = vmatpush1.bf16.msra.mxu0 0
      %2170 = vmatprep.subr.bf16.mxu0 0
      %2171 = vmatpush1.bf16.msra.mxu0 0
      %2172 = vmatprep.subr.bf16.mxu0 0
      %2173 = vmatpush1.bf16.msra.mxu0 0
      %2174 = vmatprep.subr.bf16.mxu0 0
      %2175 = vmatpush1.bf16.msra.mxu0 0
      %2176 = vmatprep.mubr.bf16.mxu0 0
      %2177 = vmatmul.mubr.bf16.gmra.mrb[0].mxu0 %v2139
      %v2178 = vpop.f32.mrb[0].mxu0
      %v2179 = vadd.f32 %v2133, %v2178
      %v2180 = vpop.f32.mrb[0].mxu0
      %v2181 = vpop.f32.mrb[0].mxu0
      %v2182 = vpop.f32.mrb[0].mxu0
      %2183 = vdwg.mxu0
      %v2184 = vld [vmem:[%s2019] sm:$0xf]
      %v2185 = vpack.c.bf16 %v2184, %v2184
      %2186 = vrot.lane.b32.xlu0 %v2086, 96
      %v2187 = vpop.permute.xlu0 %2186
      %v2189 = vsel %vm1090, %v2185, 0
      %v2192 = vsel %vm1094, %v2187, 0
      %2194 = vmatprep.subr.bf16.mxu0 0
      %2195 = vmatpush1.bf16.msra.mxu0 %v2192
      %2196 = vmatprep.subr.bf16.mxu0 0
      %2197 = vmatpush1.bf16.msra.mxu0 0
      %2198 = vmatprep.subr.bf16.mxu0 0
      %2199 = vmatpush1.bf16.msra.mxu0 0
      %2200 = vmatprep.subr.bf16.mxu0 0
      %2201 = vmatpush1.bf16.msra.mxu0 0
      %2202 = vmatprep.subr.bf16.mxu0 0
      %2203 = vmatpush1.bf16.msra.mxu0 0
      %2204 = vmatprep.subr.bf16.mxu0 0
      %2205 = vmatpush1.bf16.msra.mxu0 0
      %2206 = vmatprep.subr.bf16.mxu0 0
      %2207 = vmatpush1.bf16.msra.mxu0 0
      %2208 = vmatprep.subr.bf16.mxu0 0
      %2209 = vmatpush1.bf16.msra.mxu0 0
      %2210 = vmatprep.subr.bf16.mxu0 0
      %2211 = vmatpush1.bf16.msra.mxu0 0
      %2212 = vmatprep.subr.bf16.mxu0 0
      %2213 = vmatpush1.bf16.msra.mxu0 0
      %2214 = vmatprep.subr.bf16.mxu0 0
      %2215 = vmatpush1.bf16.msra.mxu0 0
      %2216 = vmatprep.subr.bf16.mxu0 0
      %2217 = vmatpush1.bf16.msra.mxu0 0
      %2218 = vmatprep.subr.bf16.mxu0 0
      %2219 = vmatpush1.bf16.msra.mxu0 0
      %2220 = vmatprep.subr.bf16.mxu0 0
      %2221 = vmatpush1.bf16.msra.mxu0 0
      %2222 = vmatprep.subr.bf16.mxu0 0
      %2223 = vmatpush1.bf16.msra.mxu0 0
      %2224 = vmatprep.subr.bf16.mxu0 0
      %2225 = vmatpush1.bf16.msra.mxu0 0
      %2226 = vmatprep.mubr.bf16.mxu0 0
      %2227 = vmatmul.mubr.bf16.gmra.mrb[0].mxu0 %v2189
      %v2228 = vpop.f32.mrb[0].mxu0
      %v2229 = vadd.f32 0.0, %v2228
      %v2230 = vpop.f32.mrb[0].mxu0
      %v2231 = vpop.f32.mrb[0].mxu0
      %v2232 = vpop.f32.mrb[0].mxu0
      %2233 = vdwg.mxu0
      %v2234 = vadd.f32 %v2179, %v2229
      %v2235 = vadd.f32 %v2234, %v2074
      %v2236 = vmax.f32 %v2235, 0.0
      %v2237 = vadd.f32 %v2077, %v2236
      %vm2238 = vcmask 125952
      %v2239 = vsel %vm2238, %v2237, 0.0
      %2240 = vadd.xlane.f32.xlu0 %v2239
      %v2241 = vpop.xlane.xlu0 %2240
      %v2242 = vmul.f32 %v2241, %v1039
      %v2243 = vsub.f32 %v2077, %v2242
      %v2244 = vmul.f32 %v2243, %v2243
      %v2245 = vsel %vm2238, %v2244, 0.0
      %2246 = vadd.xlane.f32.xlu0 %v2245
      %v2247 = vpop.xlane.xlu0 %2246
      %v2248 = vsub.f32 %v2236, %v2242
      %v2249 = vmul.f32 %v2248, %v2248
      %v2250 = vsel %vm2238, %v2249, 0.0
      %2251 = vadd.xlane.f32.xlu0 %v2250
      %v2252 = vpop.xlane.xlu0 %2251
      %v2253 = vadd.f32 %v2247, %v2252
      %v2254 = vmul.f32 %v2253, %v1039
      %v2255 = vadd.f32 %v2254, 1e-05
      %v2256 = vrsqrt.pop %v2255
      %v2257 = vld [vmem:[%s20] sm:$0xf]
      %v2258 = vld [vmem:[%s21] sm:$0xf]
      %v2259 = vmul.f32 %v2243, %v2256
      %2261 = vset.pattern.permute.xlu0 0
      %2262 = vperm.xlu0 %2261, %v2257
      %v2263 = vpop.permute.xlu0 %2262
      %v2265 = vmul.f32 %v2259, %v2263
      %2267 = vset.pattern.permute.xlu0 0
      %2268 = vperm.xlu0 %2267, %v2258
      %v2269 = vpop.permute.xlu0 %2268
      %v2271 = vadd.f32 %v2265, %v2269
      %v2272 = vmul.f32 %v2248, %v2256
      %v2273 = vmul.f32 %v2272, %v2263
      %v2274 = vadd.f32 %v2273, %v2269
      %v2275 = vld [vmem:[%s13] sm:$0xf]
      %v2276 = vld [vmem:[%s12] sm:$0xf]
      %v2277 = vpack.c.bf16 %v2276, %v2276
      %v2278 = vpack.c.bf16 %v1542, %v1542
      %2280 = vset.pattern.permute.xlu0 0
      %2281 = vperm.xlu0 %2280, %v2275
      %v2282 = vpop.permute.xlu0 %2281
      %v2285 = vsel %vm1090, %v2277, 0
      %v2288 = vsel %vm1094, %v2278, 0
      %2290 = vmatprep.subr.bf16.mxu0 0
      %2291 = vmatpush1.bf16.msra.mxu0 %v2288
      %2292 = vmatprep.subr.bf16.mxu0 0
      %2293 = vmatpush1.bf16.msra.mxu0 0
      %2294 = vmatprep.subr.bf16.mxu0 0
      %2295 = vmatpush1.bf16.msra.mxu0 0
      %2296 = vmatprep.subr.bf16.mxu0 0
      %2297 = vmatpush1.bf16.msra.mxu0 0
      %2298 = vmatprep.subr.bf16.mxu0 0
      %2299 = vmatpush1.bf16.msra.mxu0 0
      %2300 = vmatprep.subr.bf16.mxu0 0
      %2301 = vmatpush1.bf16.msra.mxu0 0
      %2302 = vmatprep.subr.bf16.mxu0 0
      %2303 = vmatpush1.bf16.msra.mxu0 0
      %2304 = vmatprep.subr.bf16.mxu0 0
      %2305 = vmatpush1.bf16.msra.mxu0 0
      %2306 = vmatprep.subr.bf16.mxu0 0
      %2307 = vmatpush1.bf16.msra.mxu0 0
      %2308 = vmatprep.subr.bf16.mxu0 0
      %2309 = vmatpush1.bf16.msra.mxu0 0
      %2310 = vmatprep.subr.bf16.mxu0 0
      %2311 = vmatpush1.bf16.msra.mxu0 0
      %2312 = vmatprep.subr.bf16.mxu0 0
      %2313 = vmatpush1.bf16.msra.mxu0 0
      %2314 = vmatprep.subr.bf16.mxu0 0
      %2315 = vmatpush1.bf16.msra.mxu0 0
      %2316 = vmatprep.subr.bf16.mxu0 0
      %2317 = vmatpush1.bf16.msra.mxu0 0
      %2318 = vmatprep.subr.bf16.mxu0 0
      %2319 = vmatpush1.bf16.msra.mxu0 0
      %2320 = vmatprep.subr.bf16.mxu0 0
      %2321 = vmatpush1.bf16.msra.mxu0 0
      %2322 = vmatprep.mubr.bf16.mxu0 0
      %2323 = vmatmul.mubr.bf16.gmra.mrb[0].mxu0 %v2285
      %v2324 = vpop.f32.mrb[0].mxu0
      %v2325 = vadd.f32 %v2282, %v2324
      %v2326 = vpop.f32.mrb[0].mxu0
      %v2327 = vpop.f32.mrb[0].mxu0
      %v2328 = vpop.f32.mrb[0].mxu0
      %2329 = vdwg.mxu0
      %v2330 = vpack.c.bf16 %v1543, %v1543
      %v2332 = vsel %vm1094, %v2330, 0
      %2334 = vmatprep.subr.bf16.mxu0 0
      %2335 = vmatpush1.bf16.msra.mxu0 %v2332
      %2336 = vmatprep.subr.bf16.mxu0 0
      %2337 = vmatpush1.bf16.msra.mxu0 0
      %2338 = vmatprep.subr.bf16.mxu0 0
      %2339 = vmatpush1.bf16.msra.mxu0 0
      %2340 = vmatprep.subr.bf16.mxu0 0
      %2341 = vmatpush1.bf16.msra.mxu0 0
      %2342 = vmatprep.subr.bf16.mxu0 0
      %2343 = vmatpush1.bf16.msra.mxu0 0
      %2344 = vmatprep.subr.bf16.mxu0 0
      %2345 = vmatpush1.bf16.msra.mxu0 0
      %2346 = vmatprep.subr.bf16.mxu0 0
      %2347 = vmatpush1.bf16.msra.mxu0 0
      %2348 = vmatprep.subr.bf16.mxu0 0
      %2349 = vmatpush1.bf16.msra.mxu0 0
      %2350 = vmatprep.subr.bf16.mxu0 0
      %2351 = vmatpush1.bf16.msra.mxu0 0
      %2352 = vmatprep.subr.bf16.mxu0 0
      %2353 = vmatpush1.bf16.msra.mxu0 0
      %2354 = vmatprep.subr.bf16.mxu0 0
      %2355 = vmatpush1.bf16.msra.mxu0 0
      %2356 = vmatprep.subr.bf16.mxu0 0
      %2357 = vmatpush1.bf16.msra.mxu0 0
      %2358 = vmatprep.subr.bf16.mxu0 0
      %2359 = vmatpush1.bf16.msra.mxu0 0
      %2360 = vmatprep.subr.bf16.mxu0 0
      %2361 = vmatpush1.bf16.msra.mxu0 0
      %2362 = vmatprep.subr.bf16.mxu0 0
      %2363 = vmatpush1.bf16.msra.mxu0 0
      %2364 = vmatprep.subr.bf16.mxu0 0
      %2365 = vmatpush1.bf16.msra.mxu0 0
      %2366 = vmatprep.mubr.bf16.mxu0 0
      %2367 = vmatmul.mubr.bf16.gmra.mrb[0].mxu0 %v2285
      %v2368 = vpop.f32.mrb[0].mxu0
      %v2369 = vadd.f32 %v2282, %v2368
      %v2370 = vpop.f32.mrb[0].mxu0
      %v2371 = vpop.f32.mrb[0].mxu0
      %v2372 = vpop.f32.mrb[0].mxu0
      %2373 = vdwg.mxu0
      %v2374 = vadd.f32 %v2271, %v2325
      %v2375 = vsel %vm687, %v2374, 0.0
      %v2376 = vsel %vm2238, %v2375, 0.0
      %v2377 = vrot.slane %v2376, 4
      %v2378 = vadd.f32 %v2376, %v2377
      %v2379 = vrot.slane %v2378, 2
      %v2380 = vadd.f32 %v2378, %v2379
      %v2381 = vrot.slane %v2380, 1
      %v2382 = vadd.f32 %v2380, %v2381
      %vm2383 = vcmask 122880
      %2384 = vst.msk [vmem:[%s678] sm:$0x1] %vm2383, %v2382
      %v2385 = vadd.f32 %v2274, %v2369
      %v2386 = vsel %vm687, %v2385, 0.0
      %v2387 = vsel %vm2238, %v2386, 0.0
      %v2388 = vrot.slane %v2387, 4
      %v2389 = vadd.f32 %v2387, %v2388
      %v2390 = vrot.slane %v2389, 2
      %v2391 = vadd.f32 %v2389, %v2390
      %v2392 = vrot.slane %v2391, 1
      %v2393 = vadd.f32 %v2391, %v2392
      %2394 = vst.msk [vmem:[%s678 + $0x1] sm:$0x1] %vm2383, %v2393
      %p2395 = scmp.lt.s32.totalorder %s33, 3
      %s2396 = scalar_select %p2395, %s33, 3
      %s2397 = smul.addr %s2396, 2
      %s2398 = scalar_lea.vmem %s22, %s2397
      // Predicated region
      $region109: #{fmce_forward.1} parent=107 // pred_check
        %p2399 = pneg %p518
      $region110: #{fmce_forward.1} parent=107 // pred_check_branch
        %2401 = sbr.rel (%p2399) target = $region112
      $region111: #{fmce_forward.1} parent=107 // pred_region
        _
      $region112: #{fmce_forward.1} parent=107 // pred_fallthru
        _
    $region108: #{fmce_forward.1} parent=5 // pred_fallthru
      _
    %p2402 = scmp.le.s32.totalorder 2, %s28
    // Predicated region
    $region113: #{fmce_forward.1} parent=5 // pred_check
      %p2403 = pneg %p2402
    $region114: #{fmce_forward.1} parent=5 // pred_check_branch
      %2405 = sbr.rel (%p2403) target = $region116
    $region115: #{fmce_forward.1} parent=5 // pred_region
      %s2406 = ssub.s32 %s28, 2
      // Predicated region
      $region117: #{fmce_forward.1} parent=115 // pred_check
        %p2407 = pneg %p524
      $region118: #{fmce_forward.1} parent=115 // pred_check_branch
        %2409 = sbr.rel (%p2407) target = $region120
      $region119: #{fmce_forward.1} parent=115 // pred_region
        %p2410 = scmp.lt.s32.totalorder %s34, 3
        %s2411 = scalar_select %p2410, %s34, 3
        %s2412 = smul.addr %s2411, 2
        %s2413 = scalar_lea.vmem %s22, %s2412
      $region120: #{fmce_forward.1} parent=115 // pred_fallthru
        _
    $region116: #{fmce_forward.1} parent=5 // pred_fallthru
      _
  $region6: #{fmce_forward.1} parent=0 // loop_footer
    %s32 = sadd.s32 1, %s28
  $region7: #{fmce_forward.1} parent=0 // loop_footer_branch
    %27 = sbr.rel target = $region3
  $region8: #{fmce_forward.1} parent=0 // loop_exit
    _

</llo_original>
